<compile_context>
chip_gen: v7x
topology: tpu7x:2x2x1
jax: 0.10.0
libtpu: 0.0.40
codegen_flags: <defaults>
</compile_context>

<pallas_src>
import functools

import jax
import jax.numpy as jnp
from jax import lax
from jax.experimental import pallas as pl
from jax.experimental.pallas import tpu as pltpu


def _rpn_head_kernel(xp_ref, wconv_ref, bconv_ref, whead_ref, bhead_ref, out_ref):
    """One batch element per grid step.

    xp_ref:    (1, H+2, W+2, C)  bf16  zero-padded NHWC input tile
    wconv_ref: (9, C, C)         bf16  3x3 conv weights, tap-major (dy*3+dx, Cin, Cout)
    bconv_ref: (1, C)            f32
    whead_ref: (C, P)            bf16  fused [cls | offset | zero-pad] 1x1 weights, P = 128*k
    bhead_ref: (1, P)            f32
    out_ref:   (1, H, W, P)      f32   lane-dense fused head output
    """
    H = out_ref.shape[1]
    W = out_ref.shape[2]
    C = wconv_ref.shape[1]

    xp = xp_ref[...][0]                                   # (H+2, W+2, C)

    # 3x3 "same" conv as 9 accumulated MXU matmuls.  dx (sublane) shifts are
    # hoisted: only 3 slab slices instead of 9 relayouts; the dy slices and the
    # (H, W, C) -> (H*W, C) reshape are layout-preserving since W % 8 == 0.
    acc = None
    for dx in range(3):
        slab = xp[:, dx:dx + W, :]                        # (H+2, W, C)
        for dy in range(3):
            patch = slab[dy:dy + H].reshape(H * W, C)     # major-dim slice: free
            d = jnp.dot(patch, wconv_ref[dy * 3 + dx],
                        preferred_element_type=jnp.float32)
            acc = d if acc is None else acc + d

    h = jnp.maximum(acc + bconv_ref[...], 0.0)            # ReLU, f32 (H*W, C)

    # Fused cls + offset 1x1 heads: one MXU pass over h, one lane-dense store.
    head = jnp.dot(h.astype(whead_ref.dtype), whead_ref[...],
                   preferred_element_type=jnp.float32) + bhead_ref[...]
    out_ref[...] = head.reshape(1, H, W, out_ref.shape[3])


@functools.partial(jax.jit, static_argnames=("num_anchors",))
def rpn_head_forward(x_nchw, params, *, num_anchors):
    """Pallas RPNHead forward. x_nchw: (N, C, H, W) float32."""
    w_conv, b_conv, w_cls, b_cls, w_off, b_off = params
    N, C, H, W = x_nchw.shape
    A2 = num_anchors * 2
    A4 = num_anchors * 4
    P = max(128, ((A2 + A4 + 127) // 128) * 128)          # lane-dense fused head width

    # TODO(synk): if the surrounding model can run NHWC end-to-end, drop these
    # wrapper transposes/pad (each streams the whole feature map through HBM).
    x_nhwc = jnp.transpose(x_nchw, (0, 2, 3, 1))
    x_pad = jnp.pad(x_nhwc, ((0, 0), (1, 1), (1, 1), (0, 0))).astype(jnp.bfloat16)

    # PyTorch conv weight (Cout, Cin, 3, 3) -> tap-major (dy*3+dx, Cin, Cout), bf16.
    w_conv_t = jnp.transpose(w_conv, (2, 3, 1, 0)).reshape(9, C, C).astype(jnp.bfloat16)
    b_conv_t = b_conv.reshape(1, C).astype(jnp.float32)

    # Fuse the two 1x1 heads and pad the output-channel dim to a lane-dense width.
    w_head = jnp.concatenate([w_cls[:, :, 0, 0].T, w_off[:, :, 0, 0].T], axis=1)
    w_head = jnp.pad(w_head, ((0, 0), (0, P - (A2 + A4)))).astype(jnp.bfloat16)
    b_head = jnp.concatenate([b_cls, b_off])
    b_head = jnp.pad(b_head, (0, P - (A2 + A4))).reshape(1, P).astype(jnp.float32)

    out_nhwc = pl.pallas_call(
        _rpn_head_kernel,
        out_shape=jax.ShapeDtypeStruct((N, H, W, P), jnp.float32),
        grid=(N,),
        in_specs=[
            pl.BlockSpec((1, H + 2, W + 2, C), lambda b: (b, 0, 0, 0)),
            pl.BlockSpec((9, C, C), lambda b: (0, 0, 0)),
            pl.BlockSpec((1, C), lambda b: (0, 0)),
            pl.BlockSpec((C, P), lambda b: (0, 0)),
            pl.BlockSpec((1, P), lambda b: (0, 0)),
        ],
        out_specs=pl.BlockSpec((1, H, W, P), lambda b: (b, 0, 0, 0)),
        # TODO(synk): for real FPN-sized feature maps, strip-mine H (overlapping
        # row strips, per-generation strip size, raised vmem_limit_bytes); the
        # whole-image-per-step blocking here is sized for the small test shape.
        compiler_params=pltpu.CompilerParams(
            dimension_semantics=("parallel",)),
    )(x_pad, w_conv_t, b_conv_t, w_head, b_head)

    # Split fused head, drop lane padding, NHWC -> NCHW to match PyTorch.
    cls_pred = jnp.transpose(out_nhwc[..., :A2], (0, 3, 1, 2))
    offset_pred = jnp.transpose(out_nhwc[..., A2:A2 + A4], (0, 3, 1, 2))
    return cls_pred, offset_pred


def init_rpn_head_params(key, in_channels, num_anchors):
    """Deterministic synthetic parameters matching nn.Conv2d shapes."""
    k = jax.random.split(key, 6)
    w_conv = 0.1 * jax.random.normal(k[0], (in_channels, in_channels, 3, 3), jnp.float32)
    b_conv = 0.1 * jax.random.normal(k[1], (in_channels,), jnp.float32)
    w_cls = 0.1 * jax.random.normal(k[2], (num_anchors * 2, in_channels, 1, 1), jnp.float32)
    b_cls = 0.1 * jax.random.normal(k[3], (num_anchors * 2,), jnp.float32)
    w_off = 0.1 * jax.random.normal(k[4], (num_anchors * 4, in_channels, 1, 1), jnp.float32)
    b_off = 0.1 * jax.random.normal(k[5], (num_anchors * 4,), jnp.float32)
    return (w_conv, b_conv, w_cls, b_cls, w_off, b_off)


def _reference_forward(x_nchw, params):
    """Plain-JAX f32 NCHW reference (mirrors the PyTorch module) for verification."""
    w_conv, b_conv, w_cls, b_cls, w_off, b_off = params
    dn = ("NCHW", "OIHW", "NCHW")
    h = lax.conv_general_dilated(x_nchw, w_conv, (1, 1), ((1, 1), (1, 1)),
                                 dimension_numbers=dn)
    h = jnp.maximum(h + b_conv[None, :, None, None], 0.0)
    cls = lax.conv_general_dilated(h, w_cls, (1, 1), "VALID",
                                   dimension_numbers=dn) + b_cls[None, :, None, None]
    off = lax.conv_general_dilated(h, w_off, (1, 1), "VALID",
                                   dimension_numbers=dn) + b_off[None, :, None, None]
    return cls, off


if __name__ == "__main__":
    import numpy as np

    N, C, H, W = 2, 4, 16, 16
    num_anchors = 3

    key = jax.random.PRNGKey(0)
    kx, kp = jax.random.split(key)
    x = jax.random.normal(kx, (N, C, H, W), jnp.float32)
    params = init_rpn_head_params(kp, C, num_anchors)

    cls_pred, offset_pred = rpn_head_forward(x, params, num_anchors=num_anchors)
    jax.block_until_ready((cls_pred, offset_pred))

    assert cls_pred.shape == (N, num_anchors * 2, H, W)
    assert offset_pred.shape == (N, num_anchors * 4, H, W)

    # Loose tolerances: kernel uses bf16 inputs/weights with f32 accumulation.
    cls_ref, off_ref = _reference_forward(x, params)
    np.testing.assert_allclose(np.asarray(cls_pred), np.asarray(cls_ref),
                               rtol=5e-2, atol=5e-2)
    np.testing.assert_allclose(np.asarray(offset_pred), np.asarray(off_ref),
                               rtol=5e-2, atol=5e-2)

    print("KERNEL_OK")
</pallas_src>

<mosaic_0001>
module attributes {stable_mosaic.version = 11 : i64} {
  func.func @_rpn_head_kernel(%arg0: i32, %arg1: memref<1x18x18x4xbf16, #tpu.memory_space<vmem>>, %arg2: memref<9x4x4xbf16, #tpu.memory_space<vmem>>, %arg3: memref<1x4xf32, #tpu.memory_space<vmem>>, %arg4: memref<4x128xbf16, #tpu.memory_space<vmem>>, %arg5: memref<1x128xf32, #tpu.memory_space<vmem>>, %arg6: memref<1x16x16x128xf32, #tpu.memory_space<vmem>>) attributes {dimension_semantics = [#tpu.dimension_semantics<parallel>], iteration_bounds = array<i64: 2>, scalar_prefetch = 0 : i64, scratch_operands = 0 : i64, tpu.core_type = #tpu.core_type<tc>, window_params = [{transform_indices = @transform_0, window_bounds = array<i64: 1, 18, 18, 4>}, {pipeline_mode = #tpu.pipeline_mode<synchronous>, transform_indices = @transform_1, window_bounds = array<i64: 9, 4, 4>}, {pipeline_mode = #tpu.pipeline_mode<synchronous>, transform_indices = @transform_2, window_bounds = array<i64: 1, 4>}, {pipeline_mode = #tpu.pipeline_mode<synchronous>, transform_indices = @transform_3, window_bounds = array<i64: 4, 128>}, {pipeline_mode = #tpu.pipeline_mode<synchronous>, transform_indices = @transform_4, window_bounds = array<i64: 1, 128>}, {transform_indices = @transform_5, window_bounds = array<i64: 1, 16, 16, 128>}]} {
    %c0 = arith.constant 0 : index
    %c0_0 = arith.constant 0 : index
    %c0_1 = arith.constant 0 : index
    %c0_2 = arith.constant 0 : index
    %0 = vector.load %arg1[%c0, %c0_0, %c0_1, %c0_2] : memref<1x18x18x4xbf16, #tpu.memory_space<vmem>>, vector<1x18x18x4xbf16>
    %1 = vector.shape_cast %0 : vector<1x18x18x4xbf16> to vector<18x18x4xbf16>
    %2 = vector.extract_strided_slice %1 {offsets = [0, 0, 0], sizes = [18, 16, 4], strides = [1, 1, 1]} : vector<18x18x4xbf16> to vector<18x16x4xbf16>
    %3 = vector.extract_strided_slice %2 {offsets = [0, 0, 0], sizes = [16, 16, 4], strides = [1, 1, 1]} : vector<18x16x4xbf16> to vector<16x16x4xbf16>
    %4 = vector.shape_cast %3 : vector<16x16x4xbf16> to vector<256x4xbf16>
    %c0_3 = arith.constant 0 : index
    %c0_4 = arith.constant 0 : index
    %c0_5 = arith.constant 0 : index
    %5 = vector.load %arg2[%c0_3, %c0_4, %c0_5] : memref<9x4x4xbf16, #tpu.memory_space<vmem>>, vector<1x4x4xbf16>
    %6 = vector.shape_cast %5 : vector<1x4x4xbf16> to vector<4x4xbf16>
    %cst = arith.constant dense<0.000000e+00> : vector<256x4xf32>
    %7 = tpu.matmul %4, %6, %cst {dimension_numbers = #tpu.dot_dimension_numbers<[1], [0], [0], [1], [0, 0, 1, 1], [], []>} : vector<256x4xbf16>, vector<4x4xbf16>, vector<256x4xf32> -> vector<256x4xf32>
    %8 = vector.extract_strided_slice %2 {offsets = [1, 0, 0], sizes = [16, 16, 4], strides = [1, 1, 1]} : vector<18x16x4xbf16> to vector<16x16x4xbf16>
    %9 = vector.shape_cast %8 : vector<16x16x4xbf16> to vector<256x4xbf16>
    %c3 = arith.constant 3 : index
    %c0_6 = arith.constant 0 : index
    %c0_7 = arith.constant 0 : index
    %10 = vector.load %arg2[%c3, %c0_6, %c0_7] : memref<9x4x4xbf16, #tpu.memory_space<vmem>>, vector<1x4x4xbf16>
    %11 = vector.shape_cast %10 : vector<1x4x4xbf16> to vector<4x4xbf16>
    %cst_8 = arith.constant dense<0.000000e+00> : vector<256x4xf32>
    %12 = tpu.matmul %9, %11, %cst_8 {dimension_numbers = #tpu.dot_dimension_numbers<[1], [0], [0], [1], [0, 0, 1, 1], [], []>} : vector<256x4xbf16>, vector<4x4xbf16>, vector<256x4xf32> -> vector<256x4xf32>
    %13 = arith.addf %7, %12 : vector<256x4xf32>
    %14 = vector.extract_strided_slice %2 {offsets = [2, 0, 0], sizes = [16, 16, 4], strides = [1, 1, 1]} : vector<18x16x4xbf16> to vector<16x16x4xbf16>
    %15 = vector.shape_cast %14 : vector<16x16x4xbf16> to vector<256x4xbf16>
    %c6 = arith.constant 6 : index
    %c0_9 = arith.constant 0 : index
    %c0_10 = arith.constant 0 : index
    %16 = vector.load %arg2[%c6, %c0_9, %c0_10] : memref<9x4x4xbf16, #tpu.memory_space<vmem>>, vector<1x4x4xbf16>
    %17 = vector.shape_cast %16 : vector<1x4x4xbf16> to vector<4x4xbf16>
    %cst_11 = arith.constant dense<0.000000e+00> : vector<256x4xf32>
    %18 = tpu.matmul %15, %17, %cst_11 {dimension_numbers = #tpu.dot_dimension_numbers<[1], [0], [0], [1], [0, 0, 1, 1], [], []>} : vector<256x4xbf16>, vector<4x4xbf16>, vector<256x4xf32> -> vector<256x4xf32>
    %19 = arith.addf %13, %18 : vector<256x4xf32>
    %20 = vector.extract_strided_slice %1 {offsets = [0, 1, 0], sizes = [18, 16, 4], strides = [1, 1, 1]} : vector<18x18x4xbf16> to vector<18x16x4xbf16>
    %21 = vector.extract_strided_slice %20 {offsets = [0, 0, 0], sizes = [16, 16, 4], strides = [1, 1, 1]} : vector<18x16x4xbf16> to vector<16x16x4xbf16>
    %22 = vector.shape_cast %21 : vector<16x16x4xbf16> to vector<256x4xbf16>
    %c1 = arith.constant 1 : index
    %c0_12 = arith.constant 0 : index
    %c0_13 = arith.constant 0 : index
    %23 = vector.load %arg2[%c1, %c0_12, %c0_13] : memref<9x4x4xbf16, #tpu.memory_space<vmem>>, vector<1x4x4xbf16>
    %24 = vector.shape_cast %23 : vector<1x4x4xbf16> to vector<4x4xbf16>
    %cst_14 = arith.constant dense<0.000000e+00> : vector<256x4xf32>
    %25 = tpu.matmul %22, %24, %cst_14 {dimension_numbers = #tpu.dot_dimension_numbers<[1], [0], [0], [1], [0, 0, 1, 1], [], []>} : vector<256x4xbf16>, vector<4x4xbf16>, vector<256x4xf32> -> vector<256x4xf32>
    %26 = arith.addf %19, %25 : vector<256x4xf32>
    %27 = vector.extract_strided_slice %20 {offsets = [1, 0, 0], sizes = [16, 16, 4], strides = [1, 1, 1]} : vector<18x16x4xbf16> to vector<16x16x4xbf16>
    %28 = vector.shape_cast %27 : vector<16x16x4xbf16> to vector<256x4xbf16>
    %c4 = arith.constant 4 : index
    %c0_15 = arith.constant 0 : index
    %c0_16 = arith.constant 0 : index
    %29 = vector.load %arg2[%c4, %c0_15, %c0_16] : memref<9x4x4xbf16, #tpu.memory_space<vmem>>, vector<1x4x4xbf16>
    %30 = vector.shape_cast %29 : vector<1x4x4xbf16> to vector<4x4xbf16>
    %cst_17 = arith.constant dense<0.000000e+00> : vector<256x4xf32>
    %31 = tpu.matmul %28, %30, %cst_17 {dimension_numbers = #tpu.dot_dimension_numbers<[1], [0], [0], [1], [0, 0, 1, 1], [], []>} : vector<256x4xbf16>, vector<4x4xbf16>, vector<256x4xf32> -> vector<256x4xf32>
    %32 = arith.addf %26, %31 : vector<256x4xf32>
    %33 = vector.extract_strided_slice %20 {offsets = [2, 0, 0], sizes = [16, 16, 4], strides = [1, 1, 1]} : vector<18x16x4xbf16> to vector<16x16x4xbf16>
    %34 = vector.shape_cast %33 : vector<16x16x4xbf16> to vector<256x4xbf16>
    %c7 = arith.constant 7 : index
    %c0_18 = arith.constant 0 : index
    %c0_19 = arith.constant 0 : index
    %35 = vector.load %arg2[%c7, %c0_18, %c0_19] : memref<9x4x4xbf16, #tpu.memory_space<vmem>>, vector<1x4x4xbf16>
    %36 = vector.shape_cast %35 : vector<1x4x4xbf16> to vector<4x4xbf16>
    %cst_20 = arith.constant dense<0.000000e+00> : vector<256x4xf32>
    %37 = tpu.matmul %34, %36, %cst_20 {dimension_numbers = #tpu.dot_dimension_numbers<[1], [0], [0], [1], [0, 0, 1, 1], [], []>} : vector<256x4xbf16>, vector<4x4xbf16>, vector<256x4xf32> -> vector<256x4xf32>
    %38 = arith.addf %32, %37 : vector<256x4xf32>
    %39 = vector.extract_strided_slice %1 {offsets = [0, 2, 0], sizes = [18, 16, 4], strides = [1, 1, 1]} : vector<18x18x4xbf16> to vector<18x16x4xbf16>
    %40 = vector.extract_strided_slice %39 {offsets = [0, 0, 0], sizes = [16, 16, 4], strides = [1, 1, 1]} : vector<18x16x4xbf16> to vector<16x16x4xbf16>
    %41 = vector.shape_cast %40 : vector<16x16x4xbf16> to vector<256x4xbf16>
    %c2 = arith.constant 2 : index
    %c0_21 = arith.constant 0 : index
    %c0_22 = arith.constant 0 : index
    %42 = vector.load %arg2[%c2, %c0_21, %c0_22] : memref<9x4x4xbf16, #tpu.memory_space<vmem>>, vector<1x4x4xbf16>
    %43 = vector.shape_cast %42 : vector<1x4x4xbf16> to vector<4x4xbf16>
    %cst_23 = arith.constant dense<0.000000e+00> : vector<256x4xf32>
    %44 = tpu.matmul %41, %43, %cst_23 {dimension_numbers = #tpu.dot_dimension_numbers<[1], [0], [0], [1], [0, 0, 1, 1], [], []>} : vector<256x4xbf16>, vector<4x4xbf16>, vector<256x4xf32> -> vector<256x4xf32>
    %45 = arith.addf %38, %44 : vector<256x4xf32>
    %46 = vector.extract_strided_slice %39 {offsets = [1, 0, 0], sizes = [16, 16, 4], strides = [1, 1, 1]} : vector<18x16x4xbf16> to vector<16x16x4xbf16>
    %47 = vector.shape_cast %46 : vector<16x16x4xbf16> to vector<256x4xbf16>
    %c5 = arith.constant 5 : index
    %c0_24 = arith.constant 0 : index
    %c0_25 = arith.constant 0 : index
    %48 = vector.load %arg2[%c5, %c0_24, %c0_25] : memref<9x4x4xbf16, #tpu.memory_space<vmem>>, vector<1x4x4xbf16>
    %49 = vector.shape_cast %48 : vector<1x4x4xbf16> to vector<4x4xbf16>
    %cst_26 = arith.constant dense<0.000000e+00> : vector<256x4xf32>
    %50 = tpu.matmul %47, %49, %cst_26 {dimension_numbers = #tpu.dot_dimension_numbers<[1], [0], [0], [1], [0, 0, 1, 1], [], []>} : vector<256x4xbf16>, vector<4x4xbf16>, vector<256x4xf32> -> vector<256x4xf32>
    %51 = arith.addf %45, %50 : vector<256x4xf32>
    %52 = vector.extract_strided_slice %39 {offsets = [2, 0, 0], sizes = [16, 16, 4], strides = [1, 1, 1]} : vector<18x16x4xbf16> to vector<16x16x4xbf16>
    %53 = vector.shape_cast %52 : vector<16x16x4xbf16> to vector<256x4xbf16>
    %c8 = arith.constant 8 : index
    %c0_27 = arith.constant 0 : index
    %c0_28 = arith.constant 0 : index
    %54 = vector.load %arg2[%c8, %c0_27, %c0_28] : memref<9x4x4xbf16, #tpu.memory_space<vmem>>, vector<1x4x4xbf16>
    %55 = vector.shape_cast %54 : vector<1x4x4xbf16> to vector<4x4xbf16>
    %cst_29 = arith.constant dense<0.000000e+00> : vector<256x4xf32>
    %56 = tpu.matmul %53, %55, %cst_29 {dimension_numbers = #tpu.dot_dimension_numbers<[1], [0], [0], [1], [0, 0, 1, 1], [], []>} : vector<256x4xbf16>, vector<4x4xbf16>, vector<256x4xf32> -> vector<256x4xf32>
    %57 = arith.addf %51, %56 : vector<256x4xf32>
    %c0_30 = arith.constant 0 : index
    %c0_31 = arith.constant 0 : index
    %58 = vector.load %arg3[%c0_30, %c0_31] : memref<1x4xf32, #tpu.memory_space<vmem>>, vector<1x4xf32>
    %59 = vector.broadcast %58 : vector<1x4xf32> to vector<256x4xf32>
    %60 = arith.addf %57, %59 : vector<256x4xf32>
    %cst_32 = arith.constant 0.000000e+00 : f32
    %61 = vector.broadcast %cst_32 : f32 to vector<256x4xf32>
    %62 = arith.maximumf %60, %61 : vector<256x4xf32>
    %63 = arith.truncf %62 : vector<256x4xf32> to vector<256x4xbf16>
    %c0_33 = arith.constant 0 : index
    %c0_34 = arith.constant 0 : index
    %64 = vector.load %arg4[%c0_33, %c0_34] : memref<4x128xbf16, #tpu.memory_space<vmem>>, vector<4x128xbf16>
    %cst_35 = arith.constant dense<0.000000e+00> : vector<256x128xf32>
    %65 = tpu.matmul %63, %64, %cst_35 {dimension_numbers = #tpu.dot_dimension_numbers<[1], [0], [0], [1], [0, 0, 1, 1], [], []>} : vector<256x4xbf16>, vector<4x128xbf16>, vector<256x128xf32> -> vector<256x128xf32>
    %c0_36 = arith.constant 0 : index
    %c0_37 = arith.constant 0 : index
    %66 = vector.load %arg5[%c0_36, %c0_37] : memref<1x128xf32, #tpu.memory_space<vmem>>, vector<1x128xf32>
    %67 = vector.broadcast %66 : vector<1x128xf32> to vector<256x128xf32>
    %68 = arith.addf %65, %67 : vector<256x128xf32>
    %69 = vector.shape_cast %68 : vector<256x128xf32> to vector<1x16x16x128xf32>
    %c0_38 = arith.constant 0 : index
    %c0_39 = arith.constant 0 : index
    %c0_40 = arith.constant 0 : index
    %c0_41 = arith.constant 0 : index
    %70 = vector.load %arg6[%c0_38, %c0_39, %c0_40, %c0_41] : memref<1x16x16x128xf32, #tpu.memory_space<vmem>>, vector<1x16x16x128xf32>
    tpu.vector_store %arg6[%c0_38, %c0_39, %c0_40, %c0_41], %69 {strides = array<i32>} : memref<1x16x16x128xf32, #tpu.memory_space<vmem>>, vector<1x16x16x128xf32>,
    return
  }
  func.func @transform_0(%arg0: i32) -> (i32, i32, i32, i32) {
    %c0_i32 = arith.constant 0 : i32
    %c0_i32_0 = arith.constant 0 : i32
    %c0_i32_1 = arith.constant 0 : i32
    %c0_i32_2 = arith.constant 0 : i32
    return %arg0, %c0_i32, %c0_i32_0, %c0_i32_1 : i32, i32, i32, i32
  }
  func.func @transform_1(%arg0: i32) -> (i32, i32, i32) {
    %c0_i32 = arith.constant 0 : i32
    %c0_i32_0 = arith.constant 0 : i32
    %c0_i32_1 = arith.constant 0 : i32
    %c0_i32_2 = arith.constant 0 : i32
    return %c0_i32, %c0_i32_0, %c0_i32_1 : i32, i32, i32
  }
  func.func @transform_2(%arg0: i32) -> (i32, i32) {
    %c0_i32 = arith.constant 0 : i32
    %c0_i32_0 = arith.constant 0 : i32
    %c0_i32_1 = arith.constant 0 : i32
    return %c0_i32, %c0_i32_0 : i32, i32
  }
  func.func @transform_3(%arg0: i32) -> (i32, i32) {
    %c0_i32 = arith.constant 0 : i32
    %c0_i32_0 = arith.constant 0 : i32
    %c0_i32_1 = arith.constant 0 : i32
    return %c0_i32, %c0_i32_0 : i32, i32
  }
  func.func @transform_4(%arg0: i32) -> (i32, i32) {
    %c0_i32 = arith.constant 0 : i32
    %c0_i32_0 = arith.constant 0 : i32
    %c0_i32_1 = arith.constant 0 : i32
    return %c0_i32, %c0_i32_0 : i32, i32
  }
  func.func @transform_5(%arg0: i32) -> (i32, i32, i32, i32) {
    %c0_i32 = arith.constant 0 : i32
    %c0_i32_0 = arith.constant 0 : i32
    %c0_i32_1 = arith.constant 0 : i32
    %c0_i32_2 = arith.constant 0 : i32
    return %arg0, %c0_i32, %c0_i32_0, %c0_i32_1 : i32, i32, i32, i32
  }
}

</mosaic_0001>

<llo_original>
// kernel: rpn_head_forward.1
$region0: #{rpn_head_forward.1}
  #allocation0 [shape = 'u32[]', space=smem, size = 0x4, offset = 0x4, fixed_abs, tag = 'smem constant byte address 0x4 - core index']
  #allocation1 [shape = 'u32[144,128]{1,0:T(1,128)}', space=vmem, size = 0x12000, scoped, tag = 'internal scratch']
  %s0 = inlined_call_operand.vmem [shape: bf16[2,18,18,4], index: 0, kind: input, shape index: {}]
  %s1 = inlined_call_operand.vmem [shape: bf16[9,4,4], index: 1, kind: input, shape index: {}]
  %s2 = inlined_call_operand.vmem [shape: f32[1,4], index: 2, kind: input, shape index: {}]
  %s3 = inlined_call_operand.vmem [shape: bf16[4,128], index: 3, kind: input, shape index: {}]
  %s4 = inlined_call_operand.vmem [shape: f32[1,128], index: 4, kind: input, shape index: {}]
  %s5 = inlined_call_operand.vmem [shape: f32[2,16,16,128], index: 5, kind: output, shape index: {}]
  %s6 = sld [smem:[#allocation0]]
  $region53: #{rpn_head_forward.1} parent=0
    _
  %s8 = ssub.s32 1, %s6
  %s9 = scalar_select 0, %s8, %s6
  loop: start=0, step=1, limit=4
  $region2: #{rpn_head_forward.1} parent=0 // loop_pre_header
    _
  $region3: #{rpn_head_forward.1} parent=0 // loop_header
    %s11 = sphi 0, %s15
    %p12 = scmp.ge.s32.totalorder %s11, 4
    %s21 = sphi 0, %s23
    %s24 = sphi 0, %s21
    %s25 = sphi 0, %s24
    %s41 = sphi 0, %s25
    %s45 = sphi 0, %s45
    %s47 = sphi 0, %s45
    %s48 = sphi 0, %s47
    %s62 = sphi 0, %s48
    %s66 = sphi 0, %s66
    %s68 = sphi 0, %s66
    %s69 = sphi 0, %s68
    %s83 = sphi 0, %s69
    %s87 = sphi 0, %s87
    %s89 = sphi 0, %s87
    %s90 = sphi 0, %s89
    %s104 = sphi 0, %s90
    %s108 = sphi 0, %s108
    %s110 = sphi 0, %s108
    %s111 = sphi 0, %s110
    %s125 = sphi 0, %s111
    %s131 = sphi 0, %s133
    %s134 = sphi 0, %s131
    %s135 = sphi 0, %s134
    %s151 = sphi 0, %s135
  $region4: #{rpn_head_forward.1} parent=0 // loop_header_branch
    %14 = sbr.rel (%p12) target = $region8
  $region5: #{rpn_head_forward.1} parent=0 // loop_body
    %s16 = ssub.s32 %s11, 1
    %s17 = ssub.s32 %s11, 2
    %s18 = sadd.s32 %s11, 1
    %s19 = ssub.s32 %s11, %s18
    %p20 = scmp.eq.s32.totalorder %s19, 0
    %s22 = sadd.s32 %s21, 1
    %s23 = scalar_select %p20, %s21, %s22
    %p26 = pneg %p20
    %p27 = scmp.eq.s32.totalorder %s11, 1
    %p28 = por %p26, %p27
    %p29 = scmp.ne.s32.totalorder %s21, %s24
    %p30 = scmp.eq.s32.totalorder %s11, 0
    %p31 = por %p29, %p30
    %p32 = scmp.ne.s32.totalorder %s21, %s24
    %p33 = scmp.eq.s32.totalorder %s16, 1
    %p34 = por %p32, %p33
    %p35 = scmp.ne.s32.totalorder %s24, %s25
    %p36 = scmp.eq.s32.totalorder %s16, 0
    %p37 = por %p35, %p36
    %p38 = scmp.ne.s32.totalorder %s24, %s25
    %p39 = scmp.eq.s32.totalorder %s17, 1
    %p40 = por %p38, %p39
    %p42 = scmp.ne.s32.totalorder %s25, %s41
    %p43 = scmp.eq.s32.totalorder %s17, 0
    %p44 = por %p42, %p43
    %s46 = sadd.s32 %s45, 1
    %p49 = scmp.eq.s32.totalorder %s11, 1
    %p50 = scmp.ne.s32.totalorder %s45, %s47
    %p51 = scmp.eq.s32.totalorder %s11, 0
    %p52 = por %p50, %p51
    %p53 = scmp.ne.s32.totalorder %s45, %s47
    %p54 = scmp.eq.s32.totalorder %s16, 1
    %p55 = por %p53, %p54
    %p56 = scmp.ne.s32.totalorder %s47, %s48
    %p57 = scmp.eq.s32.totalorder %s16, 0
    %p58 = por %p56, %p57
    %p59 = scmp.ne.s32.totalorder %s47, %s48
    %p60 = scmp.eq.s32.totalorder %s17, 1
    %p61 = por %p59, %p60
    %p63 = scmp.ne.s32.totalorder %s48, %s62
    %p64 = scmp.eq.s32.totalorder %s17, 0
    %p65 = por %p63, %p64
    %s67 = sadd.s32 %s66, 1
    %p70 = scmp.eq.s32.totalorder %s11, 1
    %p71 = scmp.ne.s32.totalorder %s66, %s68
    %p72 = scmp.eq.s32.totalorder %s11, 0
    %p73 = por %p71, %p72
    %p74 = scmp.ne.s32.totalorder %s66, %s68
    %p75 = scmp.eq.s32.totalorder %s16, 1
    %p76 = por %p74, %p75
    %p77 = scmp.ne.s32.totalorder %s68, %s69
    %p78 = scmp.eq.s32.totalorder %s16, 0
    %p79 = por %p77, %p78
    %p80 = scmp.ne.s32.totalorder %s68, %s69
    %p81 = scmp.eq.s32.totalorder %s17, 1
    %p82 = por %p80, %p81
    %p84 = scmp.ne.s32.totalorder %s69, %s83
    %p85 = scmp.eq.s32.totalorder %s17, 0
    %p86 = por %p84, %p85
    %s88 = sadd.s32 %s87, 1
    %p91 = scmp.eq.s32.totalorder %s11, 1
    %p92 = scmp.ne.s32.totalorder %s87, %s89
    %p93 = scmp.eq.s32.totalorder %s11, 0
    %p94 = por %p92, %p93
    %p95 = scmp.ne.s32.totalorder %s87, %s89
    %p96 = scmp.eq.s32.totalorder %s16, 1
    %p97 = por %p95, %p96
    %p98 = scmp.ne.s32.totalorder %s89, %s90
    %p99 = scmp.eq.s32.totalorder %s16, 0
    %p100 = por %p98, %p99
    %p101 = scmp.ne.s32.totalorder %s89, %s90
    %p102 = scmp.eq.s32.totalorder %s17, 1
    %p103 = por %p101, %p102
    %p105 = scmp.ne.s32.totalorder %s90, %s104
    %p106 = scmp.eq.s32.totalorder %s17, 0
    %p107 = por %p105, %p106
    %s109 = sadd.s32 %s108, 1
    %p112 = scmp.eq.s32.totalorder %s11, 1
    %p113 = scmp.ne.s32.totalorder %s108, %s110
    %p114 = scmp.eq.s32.totalorder %s11, 0
    %p115 = por %p113, %p114
    %p116 = scmp.ne.s32.totalorder %s108, %s110
    %p117 = scmp.eq.s32.totalorder %s16, 1
    %p118 = por %p116, %p117
    %p119 = scmp.ne.s32.totalorder %s110, %s111
    %p120 = scmp.eq.s32.totalorder %s16, 0
    %p121 = por %p119, %p120
    %p122 = scmp.ne.s32.totalorder %s110, %s111
    %p123 = scmp.eq.s32.totalorder %s17, 1
    %p124 = por %p122, %p123
    %p126 = scmp.ne.s32.totalorder %s111, %s125
    %p127 = scmp.eq.s32.totalorder %s17, 0
    %p128 = por %p126, %p127
    %s129 = ssub.s32 %s11, %s18
    %p130 = scmp.eq.s32.totalorder %s129, 0
    %s132 = sadd.s32 %s131, 1
    %s133 = scalar_select %p130, %s131, %s132
    %p136 = pneg %p130
    %p137 = scmp.eq.s32.totalorder %s11, 1
    %p138 = por %p136, %p137
    %p139 = scmp.ne.s32.totalorder %s131, %s134
    %p140 = scmp.eq.s32.totalorder %s11, 0
    %p141 = por %p139, %p140
    %p142 = scmp.ne.s32.totalorder %s131, %s134
    %p143 = scmp.eq.s32.totalorder %s16, 1
    %p144 = por %p142, %p143
    %p145 = scmp.ne.s32.totalorder %s134, %s135
    %p146 = scmp.eq.s32.totalorder %s16, 0
    %p147 = por %p145, %p146
    %p148 = scmp.ne.s32.totalorder %s134, %s135
    %p149 = scmp.eq.s32.totalorder %s17, 1
    %p150 = por %p148, %p149
    %p152 = scmp.ne.s32.totalorder %s135, %s151
    %p153 = scmp.eq.s32.totalorder %s17, 0
    %p154 = por %p152, %p153
    %p155 = scmp.le.s32.totalorder 1, %s11
    %p156 = scmp.lt.s32.totalorder %s11, 3
    %p157 = pnand %p155, %p156
    %p158 = pneg %p157
    // Predicated region
    $region9: #{rpn_head_forward.1} parent=5 // pred_check
      _
    $region10: #{rpn_head_forward.1} parent=5 // pred_check_branch
      %160 = sbr.rel (%p157) target = $region12
    $region11: #{rpn_head_forward.1} parent=5 // pred_region
      %s161 = ssub.s32 %s11, 1
      // Predicated region
      $region13: #{rpn_head_forward.1} parent=11 // pred_check
        %p162 = pneg %p58
      $region14: #{rpn_head_forward.1} parent=11 // pred_check_branch
        %164 = sbr.rel (%p162) target = $region16
      $region15: #{rpn_head_forward.1} parent=11 // pred_region
        _
      $region16: #{rpn_head_forward.1} parent=11 // pred_fallthru
        _
      // Predicated region
      $region17: #{rpn_head_forward.1} parent=11 // pred_check
        %p165 = pneg %p79
      $region18: #{rpn_head_forward.1} parent=11 // pred_check_branch
        %167 = sbr.rel (%p165) target = $region20
      $region19: #{rpn_head_forward.1} parent=11 // pred_region
        _
      $region20: #{rpn_head_forward.1} parent=11 // pred_fallthru
        _
      // Predicated region
      $region21: #{rpn_head_forward.1} parent=11 // pred_check
        %p168 = pneg %p100
      $region22: #{rpn_head_forward.1} parent=11 // pred_check_branch
        %170 = sbr.rel (%p168) target = $region24
      $region23: #{rpn_head_forward.1} parent=11 // pred_region
        _
      $region24: #{rpn_head_forward.1} parent=11 // pred_fallthru
        _
      // Predicated region
      $region25: #{rpn_head_forward.1} parent=11 // pred_check
        %p171 = pneg %p121
      $region26: #{rpn_head_forward.1} parent=11 // pred_check_branch
        %173 = sbr.rel (%p171) target = $region28
      $region27: #{rpn_head_forward.1} parent=11 // pred_region
        _
      $region28: #{rpn_head_forward.1} parent=11 // pred_fallthru
        _
    $region12: #{rpn_head_forward.1} parent=5 // pred_fallthru
      _
    %p174 = scmp.lt.s32.totalorder %s11, 2
    // Predicated region
    $region29: #{rpn_head_forward.1} parent=5 // pred_check
      %p175 = pneg %p174
    $region30: #{rpn_head_forward.1} parent=5 // pred_check_branch
      %177 = sbr.rel (%p175) target = $region32
    $region31: #{rpn_head_forward.1} parent=5 // pred_region
      // Predicated region
      $region33: #{rpn_head_forward.1} parent=31 // pred_check
        %p178 = pneg %p31
      $region34: #{rpn_head_forward.1} parent=31 // pred_check_branch
        %180 = sbr.rel (%p178) target = $region36
      $region35: #{rpn_head_forward.1} parent=31 // pred_region
        %p181 = scmp.lt.s32.totalorder %s11, 1
        %s182 = scalar_select %p181, %s11, 1
        %s183 = smul.addr %s182, 54
        %s184 = smul.addr %s183, 4
        %s185 = scalar_lea.vmem %s0, %s184
      $region36: #{rpn_head_forward.1} parent=31 // pred_fallthru
        _
    $region32: #{rpn_head_forward.1} parent=5 // pred_fallthru
      _
    %p186 = scmp.le.s32.totalorder 1, %s11
    %p187 = scmp.lt.s32.totalorder %s11, 3
    %p188 = pnand %p186, %p187
    %p189 = pneg %p188
    // Predicated region
    $region37: #{rpn_head_forward.1} parent=5 // pred_check
      _
    $region38: #{rpn_head_forward.1} parent=5 // pred_check_branch
      %191 = sbr.rel (%p188) target = $region40
    $region39: #{rpn_head_forward.1} parent=5 // pred_region
      %s192 = ssub.s32 %s11, 1
      %p193 = scmp.lt.s32.totalorder %s16, 1
      %s194 = scalar_select %p193, %s16, 1
      %s195 = smul.addr %s194, 54
      %s196 = smul.addr %s195, 4
      %s197 = scalar_lea.vmem %s0, %s196
      %p198 = pneg %p37
      %p199 = pneg %p34
      %p200 = pneg %p58
      %p201 = pneg %p55
      %p202 = pneg %p79
      %p203 = pneg %p76
      %p204 = pneg %p100
      %p205 = pneg %p97
      %p206 = pneg %p121
      %p207 = pneg %p118
      %p208 = pneg %p147
      %p209 = pneg %p144
      %p210 = scmp.lt.s32.totalorder %s16, 1
      %s211 = scalar_select %p210, %s16, 1
      %s212 = smul.addr %s211, 32
      %s213 = smul.addr %s212, 8
      %s214 = scalar_lea.vmem %s5, %s213
      %p215 = scmp.lt.s32.totalorder %s16, 1
      %s216 = scalar_select %p215, %s16, 1
      %s217 = smul.addr %s216, 54
      %s218 = smul.addr %s217, 4
      %s219 = scalar_lea.vmem %s0, %s218
      %p220 = scmp.lt.s32.totalorder %s16, 1
      %s221 = scalar_select %p220, %s16, 1
      %s222 = smul.addr %s221, 32
      %s223 = smul.addr %s222, 8
      %s224 = scalar_lea.vmem %s5, %s223
      %v226 = vld [vmem:[%s219] sm:$0xf]
      %v227 = vld [vmem:[%s219 + $0x4] sm:$0xf]
      %v228 = vld [vmem:[%s219 + $0x8] sm:$0x1]
      %v229 = vld [vmem:[%s219 + $0xc] sm:$0xf]
      %v230 = vld [vmem:[%s219 + $0x10] sm:$0xf]
      %v231 = vld [vmem:[%s219 + $0x14] sm:$0x1]
      %v232 = vld [vmem:[%s219 + $0x18] sm:$0xf]
      %v233 = vld [vmem:[%s219 + $0x1c] sm:$0xf]
      %v234 = vld [vmem:[%s219 + $0x20] sm:$0x1]
      %v235 = vld [vmem:[%s219 + $0x24] sm:$0xf]
      %v236 = vld [vmem:[%s219 + $0x28] sm:$0xf]
      %v237 = vld [vmem:[%s219 + $0x2c] sm:$0x1]
      %v238 = vld [vmem:[%s219 + $0x30] sm:$0xf]
      %v239 = vld [vmem:[%s219 + $0x34] sm:$0xf]
      %v240 = vld [vmem:[%s219 + $0x38] sm:$0x1]
      %v241 = vld [vmem:[%s219 + $0x3c] sm:$0xf]
      %v242 = vld [vmem:[%s219 + $0x40] sm:$0xf]
      %v243 = vld [vmem:[%s219 + $0x44] sm:$0x1]
      %v244 = vld [vmem:[%s219 + $0x48] sm:$0xf]
      %v245 = vld [vmem:[%s219 + $0x4c] sm:$0xf]
      %v246 = vld [vmem:[%s219 + $0x50] sm:$0x1]
      %v247 = vld [vmem:[%s219 + $0x54] sm:$0xf]
      %v248 = vld [vmem:[%s219 + $0x58] sm:$0xf]
      %v249 = vld [vmem:[%s219 + $0x5c] sm:$0x1]
      %v250 = vld [vmem:[%s219 + $0x60] sm:$0xf]
      %v251 = vld [vmem:[%s219 + $0x64] sm:$0xf]
      %v252 = vld [vmem:[%s219 + $0x68] sm:$0x1]
      %v253 = vld [vmem:[%s219 + $0x6c] sm:$0xf]
      %v254 = vld [vmem:[%s219 + $0x70] sm:$0xf]
      %v255 = vld [vmem:[%s219 + $0x74] sm:$0x1]
      %v256 = vld [vmem:[%s219 + $0x78] sm:$0xf]
      %v257 = vld [vmem:[%s219 + $0x7c] sm:$0xf]
      %v258 = vld [vmem:[%s219 + $0x80] sm:$0x1]
      %v259 = vld [vmem:[%s219 + $0x84] sm:$0xf]
      %v260 = vld [vmem:[%s219 + $0x88] sm:$0xf]
      %v261 = vld [vmem:[%s219 + $0x8c] sm:$0x1]
      %v262 = vld [vmem:[%s219 + $0x90] sm:$0xf]
      %v263 = vld [vmem:[%s219 + $0x94] sm:$0xf]
      %v264 = vld [vmem:[%s219 + $0x98] sm:$0x1]
      %v265 = vld [vmem:[%s219 + $0x9c] sm:$0xf]
      %v266 = vld [vmem:[%s219 + $0xa0] sm:$0xf]
      %v267 = vld [vmem:[%s219 + $0xa4] sm:$0x1]
      %v268 = vld [vmem:[%s219 + $0xa8] sm:$0xf]
      %v269 = vld [vmem:[%s219 + $0xac] sm:$0xf]
      %v270 = vld [vmem:[%s219 + $0xb0] sm:$0x1]
      %v271 = vld [vmem:[%s219 + $0xb4] sm:$0xf]
      %v272 = vld [vmem:[%s219 + $0xb8] sm:$0xf]
      %v273 = vld [vmem:[%s219 + $0xbc] sm:$0x1]
      %v274 = vld [vmem:[%s219 + $0xc0] sm:$0xf]
      %v275 = vld [vmem:[%s219 + $0xc4] sm:$0xf]
      %v276 = vld [vmem:[%s219 + $0xc8] sm:$0x1]
      %v277 = vld [vmem:[%s219 + $0xcc] sm:$0xf]
      %v278 = vld [vmem:[%s219 + $0xd0] sm:$0xf]
      %v279 = vld [vmem:[%s219 + $0xd4] sm:$0x1]
      %v280 = vld [vmem:[%s1] sm:$0x3]
      %s281 = scalar_lea.vmem %s1, 6
      %v282 = vld [vmem:[%s281] sm:$0x3]
      %v315 = vunpack.c.l.b16 %v229
      %v316 = vunpack.c.l.b16 %v230
      %v317 = vunpack.c.l.b16 %v232
      %v318 = vunpack.c.l.b16 %v233
      %v319 = vunpack.c.l.b16 %v235
      %v320 = vunpack.c.l.b16 %v236
      %v321 = vunpack.c.l.b16 %v238
      %v322 = vunpack.c.l.b16 %v239
      %v323 = vunpack.c.l.b16 %v241
      %v324 = vunpack.c.l.b16 %v242
      %v325 = vunpack.c.l.b16 %v244
      %v326 = vunpack.c.l.b16 %v245
      %v327 = vunpack.c.l.b16 %v247
      %v328 = vunpack.c.l.b16 %v248
      %v329 = vunpack.c.l.b16 %v250
      %v330 = vunpack.c.l.b16 %v251
      %v331 = vunpack.c.l.b16 %v253
      %v332 = vunpack.c.l.b16 %v254
      %v333 = vunpack.c.l.b16 %v256
      %v334 = vunpack.c.l.b16 %v257
      %v335 = vunpack.c.l.b16 %v259
      %v336 = vunpack.c.l.b16 %v260
      %v337 = vunpack.c.l.b16 %v262
      %v338 = vunpack.c.l.b16 %v263
      %v339 = vunpack.c.l.b16 %v265
      %v340 = vunpack.c.l.b16 %v266
      %v341 = vunpack.c.l.b16 %v268
      %v342 = vunpack.c.l.b16 %v269
      %v343 = vunpack.c.l.b16 %v271
      %v344 = vunpack.c.l.b16 %v272
      %v345 = vunpack.c.l.b16 %v274
      %v346 = vunpack.c.l.b16 %v275
      %v347 = vpack.c.b16 %v316, %v315
      %v348 = vpack.c.b16 %v318, %v317
      %v349 = vpack.c.b16 %v320, %v319
      %v350 = vpack.c.b16 %v322, %v321
      %v351 = vpack.c.b16 %v324, %v323
      %v352 = vpack.c.b16 %v326, %v325
      %v353 = vpack.c.b16 %v328, %v327
      %v354 = vpack.c.b16 %v330, %v329
      %v355 = vpack.c.b16 %v332, %v331
      %v356 = vpack.c.b16 %v334, %v333
      %v357 = vpack.c.b16 %v336, %v335
      %v358 = vpack.c.b16 %v338, %v337
      %v359 = vpack.c.b16 %v340, %v339
      %v360 = vpack.c.b16 %v342, %v341
      %v361 = vpack.c.b16 %v344, %v343
      %v362 = vpack.c.b16 %v346, %v345
      %vm363 = vcmask 31744
      %v365 = vsel %vm363, %v347, 0
      %v368 = vsel %vm363, %v348, 0
      %v371 = vsel %vm363, %v349, 0
      %v374 = vsel %vm363, %v350, 0
      %v377 = vsel %vm363, %v351, 0
      %v380 = vsel %vm363, %v352, 0
      %v383 = vsel %vm363, %v353, 0
      %v386 = vsel %vm363, %v354, 0
      %v389 = vsel %vm363, %v355, 0
      %v392 = vsel %vm363, %v356, 0
      %v395 = vsel %vm363, %v357, 0
      %v398 = vsel %vm363, %v358, 0
      %v401 = vsel %vm363, %v359, 0
      %v404 = vsel %vm363, %v360, 0
      %v407 = vsel %vm363, %v361, 0
      %v410 = vsel %vm363, %v362, 0
      %vm412 = vcmask 1041408
      %v414 = vsel %vm412, %v282, 0
      %416 = vmatprep.subr.bf16.mxu0 0
      %417 = vmatpush1.bf16.msra.mxu0 %v414
      %418 = vmatprep.subr.bf16.mxu0 0
      %419 = vmatpush1.bf16.msra.mxu0 0
      %420 = vmatprep.subr.bf16.mxu0 0
      %421 = vmatpush1.bf16.msra.mxu0 0
      %422 = vmatprep.subr.bf16.mxu0 0
      %423 = vmatpush1.bf16.msra.mxu0 0
      %424 = vmatprep.subr.bf16.mxu0 0
      %425 = vmatpush1.bf16.msra.mxu0 0
      %426 = vmatprep.subr.bf16.mxu0 0
      %427 = vmatpush1.bf16.msra.mxu0 0
      %428 = vmatprep.subr.bf16.mxu0 0
      %429 = vmatpush1.bf16.msra.mxu0 0
      %430 = vmatprep.subr.bf16.mxu0 0
      %431 = vmatpush1.bf16.msra.mxu0 0
      %432 = vmatprep.subr.bf16.mxu0 0
      %433 = vmatpush1.bf16.msra.mxu0 0
      %434 = vmatprep.subr.bf16.mxu0 0
      %435 = vmatpush1.bf16.msra.mxu0 0
      %436 = vmatprep.subr.bf16.mxu0 0
      %437 = vmatpush1.bf16.msra.mxu0 0
      %438 = vmatprep.subr.bf16.mxu0 0
      %439 = vmatpush1.bf16.msra.mxu0 0
      %440 = vmatprep.subr.bf16.mxu0 0
      %441 = vmatpush1.bf16.msra.mxu0 0
      %442 = vmatprep.subr.bf16.mxu0 0
      %443 = vmatpush1.bf16.msra.mxu0 0
      %444 = vmatprep.subr.bf16.mxu0 0
      %445 = vmatpush1.bf16.msra.mxu0 0
      %446 = vmatprep.subr.bf16.mxu0 0
      %447 = vmatpush1.bf16.msra.mxu0 0
      %448 = vmatprep.mubr.bf16.mxu0 0
      %449 = vmatmul.mubr.bf16.gmra.mrb[0].mxu0 %v365
      %v450 = vpop.f32.mrb[0].mxu0
      %v451 = vadd.f32 0.0, %v450
      %v452 = vpop.f32.mrb[0].mxu0
      %v453 = vpop.f32.mrb[0].mxu0
      %v454 = vadd.f32 0.0, %v453
      %v455 = vpop.f32.mrb[0].mxu0
      %456 = vmatprep.mubr.bf16.mxu0 0
      %457 = vmatmul.mubr.bf16.gmra.mrb[0].mxu0 %v368
      %v458 = vpop.f32.mrb[0].mxu0
      %v459 = vadd.f32 0.0, %v458
      %v460 = vpop.f32.mrb[0].mxu0
      %v461 = vpop.f32.mrb[0].mxu0
      %v462 = vadd.f32 0.0, %v461
      %v463 = vpop.f32.mrb[0].mxu0
      %464 = vmatprep.mubr.bf16.mxu0 0
      %465 = vmatmul.mubr.bf16.gmra.mrb[0].mxu0 %v371
      %v466 = vpop.f32.mrb[0].mxu0
      %v467 = vadd.f32 0.0, %v466
      %v468 = vpop.f32.mrb[0].mxu0
      %v469 = vpop.f32.mrb[0].mxu0
      %v470 = vadd.f32 0.0, %v469
      %v471 = vpop.f32.mrb[0].mxu0
      %472 = vmatprep.mubr.bf16.mxu0 0
      %473 = vmatmul.mubr.bf16.gmra.mrb[0].mxu0 %v374
      %v474 = vpop.f32.mrb[0].mxu0
      %v475 = vadd.f32 0.0, %v474
      %v476 = vpop.f32.mrb[0].mxu0
      %v477 = vpop.f32.mrb[0].mxu0
      %v478 = vadd.f32 0.0, %v477
      %v479 = vpop.f32.mrb[0].mxu0
      %480 = vmatprep.mubr.bf16.mxu0 0
      %481 = vmatmul.mubr.bf16.gmra.mrb[0].mxu0 %v377
      %v482 = vpop.f32.mrb[0].mxu0
      %v483 = vadd.f32 0.0, %v482
      %v484 = vpop.f32.mrb[0].mxu0
      %v485 = vpop.f32.mrb[0].mxu0
      %v486 = vadd.f32 0.0, %v485
      %v487 = vpop.f32.mrb[0].mxu0
      %488 = vmatprep.mubr.bf16.mxu0 0
      %489 = vmatmul.mubr.bf16.gmra.mrb[0].mxu0 %v380
      %v490 = vpop.f32.mrb[0].mxu0
      %v491 = vadd.f32 0.0, %v490
      %v492 = vpop.f32.mrb[0].mxu0
      %v493 = vpop.f32.mrb[0].mxu0
      %v494 = vadd.f32 0.0, %v493
      %v495 = vpop.f32.mrb[0].mxu0
      %496 = vmatprep.mubr.bf16.mxu0 0
      %497 = vmatmul.mubr.bf16.gmra.mrb[0].mxu0 %v383
      %v498 = vpop.f32.mrb[0].mxu0
      %v499 = vadd.f32 0.0, %v498
      %v500 = vpop.f32.mrb[0].mxu0
      %v501 = vpop.f32.mrb[0].mxu0
      %v502 = vadd.f32 0.0, %v501
      %v503 = vpop.f32.mrb[0].mxu0
      %504 = vmatprep.mubr.bf16.mxu0 0
      %505 = vmatmul.mubr.bf16.gmra.mrb[0].mxu0 %v386
      %v506 = vpop.f32.mrb[0].mxu0
      %v507 = vadd.f32 0.0, %v506
      %v508 = vpop.f32.mrb[0].mxu0
      %v509 = vpop.f32.mrb[0].mxu0
      %v510 = vadd.f32 0.0, %v509
      %v511 = vpop.f32.mrb[0].mxu0
      %512 = vmatprep.mubr.bf16.mxu0 0
      %513 = vmatmul.mubr.bf16.gmra.mrb[0].mxu0 %v389
      %v514 = vpop.f32.mrb[0].mxu0
      %v515 = vadd.f32 0.0, %v514
      %v516 = vpop.f32.mrb[0].mxu0
      %v517 = vpop.f32.mrb[0].mxu0
      %v518 = vadd.f32 0.0, %v517
      %v519 = vpop.f32.mrb[0].mxu0
      %520 = vmatprep.mubr.bf16.mxu0 0
      %521 = vmatmul.mubr.bf16.gmra.mrb[0].mxu0 %v392
      %v522 = vpop.f32.mrb[0].mxu0
      %v523 = vadd.f32 0.0, %v522
      %v524 = vpop.f32.mrb[0].mxu0
      %v525 = vpop.f32.mrb[0].mxu0
      %v526 = vadd.f32 0.0, %v525
      %v527 = vpop.f32.mrb[0].mxu0
      %528 = vmatprep.mubr.bf16.mxu0 0
      %529 = vmatmul.mubr.bf16.gmra.mrb[0].mxu0 %v395
      %v530 = vpop.f32.mrb[0].mxu0
      %v531 = vadd.f32 0.0, %v530
      %v532 = vpop.f32.mrb[0].mxu0
      %v533 = vpop.f32.mrb[0].mxu0
      %v534 = vadd.f32 0.0, %v533
      %v535 = vpop.f32.mrb[0].mxu0
      %536 = vmatprep.mubr.bf16.mxu0 0
      %537 = vmatmul.mubr.bf16.gmra.mrb[0].mxu0 %v398
      %v538 = vpop.f32.mrb[0].mxu0
      %v539 = vadd.f32 0.0, %v538
      %v540 = vpop.f32.mrb[0].mxu0
      %v541 = vpop.f32.mrb[0].mxu0
      %v542 = vadd.f32 0.0, %v541
      %v543 = vpop.f32.mrb[0].mxu0
      %544 = vmatprep.mubr.bf16.mxu0 0
      %545 = vmatmul.mubr.bf16.gmra.mrb[0].mxu0 %v401
      %v546 = vpop.f32.mrb[0].mxu0
      %v547 = vadd.f32 0.0, %v546
      %v548 = vpop.f32.mrb[0].mxu0
      %v549 = vpop.f32.mrb[0].mxu0
      %v550 = vadd.f32 0.0, %v549
      %v551 = vpop.f32.mrb[0].mxu0
      %552 = vmatprep.mubr.bf16.mxu0 0
      %553 = vmatmul.mubr.bf16.gmra.mrb[0].mxu0 %v404
      %v554 = vpop.f32.mrb[0].mxu0
      %v555 = vadd.f32 0.0, %v554
      %v556 = vpop.f32.mrb[0].mxu0
      %v557 = vpop.f32.mrb[0].mxu0
      %v558 = vadd.f32 0.0, %v557
      %v559 = vpop.f32.mrb[0].mxu0
      %560 = vmatprep.mubr.bf16.mxu0 0
      %561 = vmatmul.mubr.bf16.gmra.mrb[0].mxu0 %v407
      %v562 = vpop.f32.mrb[0].mxu0
      %v563 = vadd.f32 0.0, %v562
      %v564 = vpop.f32.mrb[0].mxu0
      %v565 = vpop.f32.mrb[0].mxu0
      %v566 = vadd.f32 0.0, %v565
      %v567 = vpop.f32.mrb[0].mxu0
      %568 = vmatprep.mubr.bf16.mxu0 0
      %569 = vmatmul.mubr.bf16.gmra.mrb[0].mxu0 %v410
      %v570 = vpop.f32.mrb[0].mxu0
      %v571 = vadd.f32 0.0, %v570
      %v572 = vpop.f32.mrb[0].mxu0
      %v573 = vpop.f32.mrb[0].mxu0
      %v574 = vadd.f32 0.0, %v573
      %v575 = vpop.f32.mrb[0].mxu0
      %576 = vdwg.mxu0
      %v579 = vunpack.c.l.b16 %v226
      %v580 = vunpack.c.l.b16 %v227
      %v581 = vpack.c.b16 %v580, %v579
      %v583 = vsel %vm363, %v581, 0
      %v586 = vsel %vm412, %v280, 0
      %588 = vmatprep.subr.bf16.mxu0 0
      %589 = vmatpush1.bf16.msra.mxu0 %v586
      %590 = vmatprep.subr.bf16.mxu0 0
      %591 = vmatpush1.bf16.msra.mxu0 0
      %592 = vmatprep.subr.bf16.mxu0 0
      %593 = vmatpush1.bf16.msra.mxu0 0
      %594 = vmatprep.subr.bf16.mxu0 0
      %595 = vmatpush1.bf16.msra.mxu0 0
      %596 = vmatprep.subr.bf16.mxu0 0
      %597 = vmatpush1.bf16.msra.mxu0 0
      %598 = vmatprep.subr.bf16.mxu0 0
      %599 = vmatpush1.bf16.msra.mxu0 0
      %600 = vmatprep.subr.bf16.mxu0 0
      %601 = vmatpush1.bf16.msra.mxu0 0
      %602 = vmatprep.subr.bf16.mxu0 0
      %603 = vmatpush1.bf16.msra.mxu0 0
      %604 = vmatprep.subr.bf16.mxu0 0
      %605 = vmatpush1.bf16.msra.mxu0 0
      %606 = vmatprep.subr.bf16.mxu0 0
      %607 = vmatpush1.bf16.msra.mxu0 0
      %608 = vmatprep.subr.bf16.mxu0 0
      %609 = vmatpush1.bf16.msra.mxu0 0
      %610 = vmatprep.subr.bf16.mxu0 0
      %611 = vmatpush1.bf16.msra.mxu0 0
      %612 = vmatprep.subr.bf16.mxu0 0
      %613 = vmatpush1.bf16.msra.mxu0 0
      %614 = vmatprep.subr.bf16.mxu0 0
      %615 = vmatpush1.bf16.msra.mxu0 0
      %616 = vmatprep.subr.bf16.mxu0 0
      %617 = vmatpush1.bf16.msra.mxu0 0
      %618 = vmatprep.subr.bf16.mxu0 0
      %619 = vmatpush1.bf16.msra.mxu0 0
      %620 = vmatprep.mubr.bf16.mxu0 0
      %621 = vmatmul.mubr.bf16.gmra.mrb[0].mxu0 %v583
      %v622 = vpop.f32.mrb[0].mxu0
      %v623 = vadd.f32 %v451, %v622
      %v624 = vpop.f32.mrb[0].mxu0
      %v625 = vpop.f32.mrb[0].mxu0
      %v626 = vadd.f32 %v454, %v625
      %v627 = vpop.f32.mrb[0].mxu0
      %628 = vmatprep.mubr.bf16.mxu0 0
      %629 = vmatmul.mubr.bf16.gmra.mrb[0].mxu0 %v365
      %v630 = vpop.f32.mrb[0].mxu0
      %v631 = vadd.f32 %v459, %v630
      %v632 = vpop.f32.mrb[0].mxu0
      %v633 = vpop.f32.mrb[0].mxu0
      %v634 = vadd.f32 %v462, %v633
      %v635 = vpop.f32.mrb[0].mxu0
      %636 = vmatprep.mubr.bf16.mxu0 0
      %637 = vmatmul.mubr.bf16.gmra.mrb[0].mxu0 %v368
      %v638 = vpop.f32.mrb[0].mxu0
      %v639 = vadd.f32 %v467, %v638
      %v640 = vpop.f32.mrb[0].mxu0
      %v641 = vpop.f32.mrb[0].mxu0
      %v642 = vadd.f32 %v470, %v641
      %v643 = vpop.f32.mrb[0].mxu0
      %644 = vmatprep.mubr.bf16.mxu0 0
      %645 = vmatmul.mubr.bf16.gmra.mrb[0].mxu0 %v371
      %v646 = vpop.f32.mrb[0].mxu0
      %v647 = vadd.f32 %v475, %v646
      %v648 = vpop.f32.mrb[0].mxu0
      %v649 = vpop.f32.mrb[0].mxu0
      %v650 = vadd.f32 %v478, %v649
      %v651 = vpop.f32.mrb[0].mxu0
      %652 = vmatprep.mubr.bf16.mxu0 0
      %653 = vmatmul.mubr.bf16.gmra.mrb[0].mxu0 %v374
      %v654 = vpop.f32.mrb[0].mxu0
      %v655 = vadd.f32 %v483, %v654
      %v656 = vpop.f32.mrb[0].mxu0
      %v657 = vpop.f32.mrb[0].mxu0
      %v658 = vadd.f32 %v486, %v657
      %v659 = vpop.f32.mrb[0].mxu0
      %660 = vmatprep.mubr.bf16.mxu0 0
      %661 = vmatmul.mubr.bf16.gmra.mrb[0].mxu0 %v377
      %v662 = vpop.f32.mrb[0].mxu0
      %v663 = vadd.f32 %v491, %v662
      %v664 = vpop.f32.mrb[0].mxu0
      %v665 = vpop.f32.mrb[0].mxu0
      %v666 = vadd.f32 %v494, %v665
      %v667 = vpop.f32.mrb[0].mxu0
      %668 = vmatprep.mubr.bf16.mxu0 0
      %669 = vmatmul.mubr.bf16.gmra.mrb[0].mxu0 %v380
      %v670 = vpop.f32.mrb[0].mxu0
      %v671 = vadd.f32 %v499, %v670
      %v672 = vpop.f32.mrb[0].mxu0
      %v673 = vpop.f32.mrb[0].mxu0
      %v674 = vadd.f32 %v502, %v673
      %v675 = vpop.f32.mrb[0].mxu0
      %676 = vmatprep.mubr.bf16.mxu0 0
      %677 = vmatmul.mubr.bf16.gmra.mrb[0].mxu0 %v383
      %v678 = vpop.f32.mrb[0].mxu0
      %v679 = vadd.f32 %v507, %v678
      %v680 = vpop.f32.mrb[0].mxu0
      %v681 = vpop.f32.mrb[0].mxu0
      %v682 = vadd.f32 %v510, %v681
      %v683 = vpop.f32.mrb[0].mxu0
      %684 = vmatprep.mubr.bf16.mxu0 0
      %685 = vmatmul.mubr.bf16.gmra.mrb[0].mxu0 %v386
      %v686 = vpop.f32.mrb[0].mxu0
      %v687 = vadd.f32 %v515, %v686
      %v688 = vpop.f32.mrb[0].mxu0
      %v689 = vpop.f32.mrb[0].mxu0
      %v690 = vadd.f32 %v518, %v689
      %v691 = vpop.f32.mrb[0].mxu0
      %692 = vmatprep.mubr.bf16.mxu0 0
      %693 = vmatmul.mubr.bf16.gmra.mrb[0].mxu0 %v389
      %v694 = vpop.f32.mrb[0].mxu0
      %v695 = vadd.f32 %v523, %v694
      %v696 = vpop.f32.mrb[0].mxu0
      %v697 = vpop.f32.mrb[0].mxu0
      %v698 = vadd.f32 %v526, %v697
      %v699 = vpop.f32.mrb[0].mxu0
      %700 = vmatprep.mubr.bf16.mxu0 0
      %701 = vmatmul.mubr.bf16.gmra.mrb[0].mxu0 %v392
      %v702 = vpop.f32.mrb[0].mxu0
      %v703 = vadd.f32 %v531, %v702
      %v704 = vpop.f32.mrb[0].mxu0
      %v705 = vpop.f32.mrb[0].mxu0
      %v706 = vadd.f32 %v534, %v705
      %v707 = vpop.f32.mrb[0].mxu0
      %708 = vmatprep.mubr.bf16.mxu0 0
      %709 = vmatmul.mubr.bf16.gmra.mrb[0].mxu0 %v395
      %v710 = vpop.f32.mrb[0].mxu0
      %v711 = vadd.f32 %v539, %v710
      %v712 = vpop.f32.mrb[0].mxu0
      %v713 = vpop.f32.mrb[0].mxu0
      %v714 = vadd.f32 %v542, %v713
      %v715 = vpop.f32.mrb[0].mxu0
      %716 = vmatprep.mubr.bf16.mxu0 0
      %717 = vmatmul.mubr.bf16.gmra.mrb[0].mxu0 %v398
      %v718 = vpop.f32.mrb[0].mxu0
      %v719 = vadd.f32 %v547, %v718
      %v720 = vpop.f32.mrb[0].mxu0
      %v721 = vpop.f32.mrb[0].mxu0
      %v722 = vadd.f32 %v550, %v721
      %v723 = vpop.f32.mrb[0].mxu0
      %724 = vmatprep.mubr.bf16.mxu0 0
      %725 = vmatmul.mubr.bf16.gmra.mrb[0].mxu0 %v401
      %v726 = vpop.f32.mrb[0].mxu0
      %v727 = vadd.f32 %v555, %v726
      %v728 = vpop.f32.mrb[0].mxu0
      %v729 = vpop.f32.mrb[0].mxu0
      %v730 = vadd.f32 %v558, %v729
      %v731 = vpop.f32.mrb[0].mxu0
      %732 = vmatprep.mubr.bf16.mxu0 0
      %733 = vmatmul.mubr.bf16.gmra.mrb[0].mxu0 %v404
      %v734 = vpop.f32.mrb[0].mxu0
      %v735 = vadd.f32 %v563, %v734
      %v736 = vpop.f32.mrb[0].mxu0
      %v737 = vpop.f32.mrb[0].mxu0
      %v738 = vadd.f32 %v566, %v737
      %v739 = vpop.f32.mrb[0].mxu0
      %740 = vmatprep.mubr.bf16.mxu0 0
      %741 = vmatmul.mubr.bf16.gmra.mrb[0].mxu0 %v407
      %v742 = vpop.f32.mrb[0].mxu0
      %v743 = vadd.f32 %v571, %v742
      %v744 = vpop.f32.mrb[0].mxu0
      %v745 = vpop.f32.mrb[0].mxu0
      %v746 = vadd.f32 %v574, %v745
      %v747 = vpop.f32.mrb[0].mxu0
      %748 = vdwg.mxu0
      %s749 = scalar_lea.vmem %s1, 12
      %v750 = vld [vmem:[%s749] sm:$0x3]
      %v753 = vunpack.c.l.b16 %v277
      %v754 = vunpack.c.l.b16 %v278
      %v755 = vpack.c.b16 %v754, %v753
      %v757 = vsel %vm363, %v755, 0
      %v760 = vsel %vm412, %v750, 0
      %762 = vmatprep.subr.bf16.mxu0 0
      %763 = vmatpush1.bf16.msra.mxu0 %v760
      %764 = vmatprep.subr.bf16.mxu0 0
      %765 = vmatpush1.bf16.msra.mxu0 0
      %766 = vmatprep.subr.bf16.mxu0 0
      %767 = vmatpush1.bf16.msra.mxu0 0
      %768 = vmatprep.subr.bf16.mxu0 0
      %769 = vmatpush1.bf16.msra.mxu0 0
      %770 = vmatprep.subr.bf16.mxu0 0
      %771 = vmatpush1.bf16.msra.mxu0 0
      %772 = vmatprep.subr.bf16.mxu0 0
      %773 = vmatpush1.bf16.msra.mxu0 0
      %774 = vmatprep.subr.bf16.mxu0 0
      %775 = vmatpush1.bf16.msra.mxu0 0
      %776 = vmatprep.subr.bf16.mxu0 0
      %777 = vmatpush1.bf16.msra.mxu0 0
      %778 = vmatprep.subr.bf16.mxu0 0
      %779 = vmatpush1.bf16.msra.mxu0 0
      %780 = vmatprep.subr.bf16.mxu0 0
      %781 = vmatpush1.bf16.msra.mxu0 0
      %782 = vmatprep.subr.bf16.mxu0 0
      %783 = vmatpush1.bf16.msra.mxu0 0
      %784 = vmatprep.subr.bf16.mxu0 0
      %785 = vmatpush1.bf16.msra.mxu0 0
      %786 = vmatprep.subr.bf16.mxu0 0
      %787 = vmatpush1.bf16.msra.mxu0 0
      %788 = vmatprep.subr.bf16.mxu0 0
      %789 = vmatpush1.bf16.msra.mxu0 0
      %790 = vmatprep.subr.bf16.mxu0 0
      %791 = vmatpush1.bf16.msra.mxu0 0
      %792 = vmatprep.subr.bf16.mxu0 0
      %793 = vmatpush1.bf16.msra.mxu0 0
      %794 = vmatprep.mubr.bf16.mxu0 0
      %795 = vmatmul.mubr.bf16.gmra.mrb[0].mxu0 %v368
      %v796 = vpop.f32.mrb[0].mxu0
      %v797 = vadd.f32 0.0, %v796
      %v798 = vpop.f32.mrb[0].mxu0
      %v799 = vpop.f32.mrb[0].mxu0
      %v800 = vadd.f32 0.0, %v799
      %v801 = vpop.f32.mrb[0].mxu0
      %802 = vmatprep.mubr.bf16.mxu0 0
      %803 = vmatmul.mubr.bf16.gmra.mrb[0].mxu0 %v371
      %v804 = vpop.f32.mrb[0].mxu0
      %v805 = vadd.f32 0.0, %v804
      %v806 = vpop.f32.mrb[0].mxu0
      %v807 = vpop.f32.mrb[0].mxu0
      %v808 = vadd.f32 0.0, %v807
      %v809 = vpop.f32.mrb[0].mxu0
      %810 = vmatprep.mubr.bf16.mxu0 0
      %811 = vmatmul.mubr.bf16.gmra.mrb[0].mxu0 %v374
      %v812 = vpop.f32.mrb[0].mxu0
      %v813 = vadd.f32 0.0, %v812
      %v814 = vpop.f32.mrb[0].mxu0
      %v815 = vpop.f32.mrb[0].mxu0
      %v816 = vadd.f32 0.0, %v815
      %v817 = vpop.f32.mrb[0].mxu0
      %818 = vmatprep.mubr.bf16.mxu0 0
      %819 = vmatmul.mubr.bf16.gmra.mrb[0].mxu0 %v377
      %v820 = vpop.f32.mrb[0].mxu0
      %v821 = vadd.f32 0.0, %v820
      %v822 = vpop.f32.mrb[0].mxu0
      %v823 = vpop.f32.mrb[0].mxu0
      %v824 = vadd.f32 0.0, %v823
      %v825 = vpop.f32.mrb[0].mxu0
      %826 = vmatprep.mubr.bf16.mxu0 0
      %827 = vmatmul.mubr.bf16.gmra.mrb[0].mxu0 %v380
      %v828 = vpop.f32.mrb[0].mxu0
      %v829 = vadd.f32 0.0, %v828
      %v830 = vpop.f32.mrb[0].mxu0
      %v831 = vpop.f32.mrb[0].mxu0
      %v832 = vadd.f32 0.0, %v831
      %v833 = vpop.f32.mrb[0].mxu0
      %834 = vmatprep.mubr.bf16.mxu0 0
      %835 = vmatmul.mubr.bf16.gmra.mrb[0].mxu0 %v383
      %v836 = vpop.f32.mrb[0].mxu0
      %v837 = vadd.f32 0.0, %v836
      %v838 = vpop.f32.mrb[0].mxu0
      %v839 = vpop.f32.mrb[0].mxu0
      %v840 = vadd.f32 0.0, %v839
      %v841 = vpop.f32.mrb[0].mxu0
      %842 = vmatprep.mubr.bf16.mxu0 0
      %843 = vmatmul.mubr.bf16.gmra.mrb[0].mxu0 %v386
      %v844 = vpop.f32.mrb[0].mxu0
      %v845 = vadd.f32 0.0, %v844
      %v846 = vpop.f32.mrb[0].mxu0
      %v847 = vpop.f32.mrb[0].mxu0
      %v848 = vadd.f32 0.0, %v847
      %v849 = vpop.f32.mrb[0].mxu0
      %850 = vmatprep.mubr.bf16.mxu0 0
      %851 = vmatmul.mubr.bf16.gmra.mrb[0].mxu0 %v389
      %v852 = vpop.f32.mrb[0].mxu0
      %v853 = vadd.f32 0.0, %v852
      %v854 = vpop.f32.mrb[0].mxu0
      %v855 = vpop.f32.mrb[0].mxu0
      %v856 = vadd.f32 0.0, %v855
      %v857 = vpop.f32.mrb[0].mxu0
      %858 = vmatprep.mubr.bf16.mxu0 0
      %859 = vmatmul.mubr.bf16.gmra.mrb[0].mxu0 %v392
      %v860 = vpop.f32.mrb[0].mxu0
      %v861 = vadd.f32 0.0, %v860
      %v862 = vpop.f32.mrb[0].mxu0
      %v863 = vpop.f32.mrb[0].mxu0
      %v864 = vadd.f32 0.0, %v863
      %v865 = vpop.f32.mrb[0].mxu0
      %866 = vmatprep.mubr.bf16.mxu0 0
      %867 = vmatmul.mubr.bf16.gmra.mrb[0].mxu0 %v395
      %v868 = vpop.f32.mrb[0].mxu0
      %v869 = vadd.f32 0.0, %v868
      %v870 = vpop.f32.mrb[0].mxu0
      %v871 = vpop.f32.mrb[0].mxu0
      %v872 = vadd.f32 0.0, %v871
      %v873 = vpop.f32.mrb[0].mxu0
      %874 = vmatprep.mubr.bf16.mxu0 0
      %875 = vmatmul.mubr.bf16.gmra.mrb[0].mxu0 %v398
      %v876 = vpop.f32.mrb[0].mxu0
      %v877 = vadd.f32 0.0, %v876
      %v878 = vpop.f32.mrb[0].mxu0
      %v879 = vpop.f32.mrb[0].mxu0
      %v880 = vadd.f32 0.0, %v879
      %v881 = vpop.f32.mrb[0].mxu0
      %882 = vmatprep.mubr.bf16.mxu0 0
      %883 = vmatmul.mubr.bf16.gmra.mrb[0].mxu0 %v401
      %v884 = vpop.f32.mrb[0].mxu0
      %v885 = vadd.f32 0.0, %v884
      %v886 = vpop.f32.mrb[0].mxu0
      %v887 = vpop.f32.mrb[0].mxu0
      %v888 = vadd.f32 0.0, %v887
      %v889 = vpop.f32.mrb[0].mxu0
      %890 = vmatprep.mubr.bf16.mxu0 0
      %891 = vmatmul.mubr.bf16.gmra.mrb[0].mxu0 %v404
      %v892 = vpop.f32.mrb[0].mxu0
      %v893 = vadd.f32 0.0, %v892
      %v894 = vpop.f32.mrb[0].mxu0
      %v895 = vpop.f32.mrb[0].mxu0
      %v896 = vadd.f32 0.0, %v895
      %v897 = vpop.f32.mrb[0].mxu0
      %898 = vmatprep.mubr.bf16.mxu0 0
      %899 = vmatmul.mubr.bf16.gmra.mrb[0].mxu0 %v407
      %v900 = vpop.f32.mrb[0].mxu0
      %v901 = vadd.f32 0.0, %v900
      %v902 = vpop.f32.mrb[0].mxu0
      %v903 = vpop.f32.mrb[0].mxu0
      %v904 = vadd.f32 0.0, %v903
      %v905 = vpop.f32.mrb[0].mxu0
      %906 = vmatprep.mubr.bf16.mxu0 0
      %907 = vmatmul.mubr.bf16.gmra.mrb[0].mxu0 %v410
      %v908 = vpop.f32.mrb[0].mxu0
      %v909 = vadd.f32 0.0, %v908
      %v910 = vpop.f32.mrb[0].mxu0
      %v911 = vpop.f32.mrb[0].mxu0
      %v912 = vadd.f32 0.0, %v911
      %v913 = vpop.f32.mrb[0].mxu0
      %914 = vmatprep.mubr.bf16.mxu0 0
      %915 = vmatmul.mubr.bf16.gmra.mrb[0].mxu0 %v757
      %v916 = vpop.f32.mrb[0].mxu0
      %v917 = vadd.f32 0.0, %v916
      %v918 = vpop.f32.mrb[0].mxu0
      %v919 = vpop.f32.mrb[0].mxu0
      %v920 = vadd.f32 0.0, %v919
      %v921 = vpop.f32.mrb[0].mxu0
      %922 = vdwg.mxu0
      %v923 = vadd.f32 %v623, %v797
      %v924 = vadd.f32 %v626, %v800
      %v925 = vadd.f32 %v631, %v805
      %v926 = vadd.f32 %v634, %v808
      %v927 = vadd.f32 %v639, %v813
      %v928 = vadd.f32 %v642, %v816
      %v929 = vadd.f32 %v647, %v821
      %v930 = vadd.f32 %v650, %v824
      %v931 = vadd.f32 %v655, %v829
      %v932 = vadd.f32 %v658, %v832
      %v933 = vadd.f32 %v663, %v837
      %v934 = vadd.f32 %v666, %v840
      %v935 = vadd.f32 %v671, %v845
      %v936 = vadd.f32 %v674, %v848
      %v937 = vadd.f32 %v679, %v853
      %v938 = vadd.f32 %v682, %v856
      %v939 = vadd.f32 %v687, %v861
      %v940 = vadd.f32 %v690, %v864
      %v941 = vadd.f32 %v695, %v869
      %v942 = vadd.f32 %v698, %v872
      %v943 = vadd.f32 %v703, %v877
      %v944 = vadd.f32 %v706, %v880
      %v945 = vadd.f32 %v711, %v885
      %v946 = vadd.f32 %v714, %v888
      %v947 = vadd.f32 %v719, %v893
      %v948 = vadd.f32 %v722, %v896
      %v949 = vadd.f32 %v727, %v901
      %v950 = vadd.f32 %v730, %v904
      %v951 = vadd.f32 %v735, %v909
      %v952 = vadd.f32 %v738, %v912
      %v953 = vadd.f32 %v743, %v917
      %v954 = vadd.f32 %v746, %v920
      %vm955 = vsmask.f32 3328
      %vm956 = vsmask.f32 7440
      %vm957 = vmor %vm955, %vm956
      %v959 = vshrl.u32 %v226, 16
      %v961 = vrot.slane %v959, 4
      %v962 = vshll.u32 %v226, 16
      %v964 = vrot.slane %v962, 5
      %v965 = vor.u32 %v961, %v964
      %v966 = vrot.slane %v965, 4
      %v968 = vshll.u32 %v227, 16
      %v970 = vrot.slane %v968, 5
      %v971 = vsel %vm957, %v966, %v970
      %v972 = vshrl.u32 %v227, 16
      %v974 = vrot.slane %v972, 4
      %v975 = vor.u32 %v974, %v970
      %v976 = vrot.slane %v975, 4
      %v978 = vshll.u32 %v228, 16
      %v980 = vrot.slane %v978, 5
      %v981 = vsel %vm957, %v976, %v980
      %v983 = vshrl.u32 %v229, 16
      %v985 = vrot.slane %v983, 4
      %v986 = vshll.u32 %v229, 16
      %v988 = vrot.slane %v986, 5
      %v989 = vor.u32 %v985, %v988
      %v990 = vrot.slane %v989, 4
      %v992 = vshll.u32 %v230, 16
      %v994 = vrot.slane %v992, 5
      %v995 = vsel %vm957, %v990, %v994
      %v996 = vshrl.u32 %v230, 16
      %v998 = vrot.slane %v996, 4
      %v999 = vor.u32 %v998, %v994
      %v1000 = vrot.slane %v999, 4
      %v1002 = vshll.u32 %v231, 16
      %v1004 = vrot.slane %v1002, 5
      %v1005 = vsel %vm957, %v1000, %v1004
      %v1007 = vshrl.u32 %v232, 16
      %v1009 = vrot.slane %v1007, 4
      %v1010 = vshll.u32 %v232, 16
      %v1012 = vrot.slane %v1010, 5
      %v1013 = vor.u32 %v1009, %v1012
      %v1014 = vrot.slane %v1013, 4
      %v1016 = vshll.u32 %v233, 16
      %v1018 = vrot.slane %v1016, 5
      %v1019 = vsel %vm957, %v1014, %v1018
      %v1020 = vshrl.u32 %v233, 16
      %v1022 = vrot.slane %v1020, 4
      %v1023 = vor.u32 %v1022, %v1018
      %v1024 = vrot.slane %v1023, 4
      %v1026 = vshll.u32 %v234, 16
      %v1028 = vrot.slane %v1026, 5
      %v1029 = vsel %vm957, %v1024, %v1028
      %v1031 = vshrl.u32 %v235, 16
      %v1033 = vrot.slane %v1031, 4
      %v1034 = vshll.u32 %v235, 16
      %v1036 = vrot.slane %v1034, 5
      %v1037 = vor.u32 %v1033, %v1036
      %v1038 = vrot.slane %v1037, 4
      %v1040 = vshll.u32 %v236, 16
      %v1042 = vrot.slane %v1040, 5
      %v1043 = vsel %vm957, %v1038, %v1042
      %v1044 = vshrl.u32 %v236, 16
      %v1046 = vrot.slane %v1044, 4
      %v1047 = vor.u32 %v1046, %v1042
      %v1048 = vrot.slane %v1047, 4
      %v1050 = vshll.u32 %v237, 16
      %v1052 = vrot.slane %v1050, 5
      %v1053 = vsel %vm957, %v1048, %v1052
      %v1055 = vshrl.u32 %v238, 16
      %v1057 = vrot.slane %v1055, 4
      %v1058 = vshll.u32 %v238, 16
      %v1060 = vrot.slane %v1058, 5
      %v1061 = vor.u32 %v1057, %v1060
      %v1062 = vrot.slane %v1061, 4
      %v1064 = vshll.u32 %v239, 16
      %v1066 = vrot.slane %v1064, 5
      %v1067 = vsel %vm957, %v1062, %v1066
      %v1068 = vshrl.u32 %v239, 16
      %v1070 = vrot.slane %v1068, 4
      %v1071 = vor.u32 %v1070, %v1066
      %v1072 = vrot.slane %v1071, 4
      %v1074 = vshll.u32 %v240, 16
      %v1076 = vrot.slane %v1074, 5
      %v1077 = vsel %vm957, %v1072, %v1076
      %v1079 = vshrl.u32 %v241, 16
      %v1081 = vrot.slane %v1079, 4
      %v1082 = vshll.u32 %v241, 16
      %v1084 = vrot.slane %v1082, 5
      %v1085 = vor.u32 %v1081, %v1084
      %v1086 = vrot.slane %v1085, 4
      %v1088 = vshll.u32 %v242, 16
      %v1090 = vrot.slane %v1088, 5
      %v1091 = vsel %vm957, %v1086, %v1090
      %v1092 = vshrl.u32 %v242, 16
      %v1094 = vrot.slane %v1092, 4
      %v1095 = vor.u32 %v1094, %v1090
      %v1096 = vrot.slane %v1095, 4
      %v1098 = vshll.u32 %v243, 16
      %v1100 = vrot.slane %v1098, 5
      %v1101 = vsel %vm957, %v1096, %v1100
      %v1103 = vshrl.u32 %v244, 16
      %v1105 = vrot.slane %v1103, 4
      %v1106 = vshll.u32 %v244, 16
      %v1108 = vrot.slane %v1106, 5
      %v1109 = vor.u32 %v1105, %v1108
      %v1110 = vrot.slane %v1109, 4
      %v1112 = vshll.u32 %v245, 16
      %v1114 = vrot.slane %v1112, 5
      %v1115 = vsel %vm957, %v1110, %v1114
      %v1116 = vshrl.u32 %v245, 16
      %v1118 = vrot.slane %v1116, 4
      %v1119 = vor.u32 %v1118, %v1114
      %v1120 = vrot.slane %v1119, 4
      %v1122 = vshll.u32 %v246, 16
      %v1124 = vrot.slane %v1122, 5
      %v1125 = vsel %vm957, %v1120, %v1124
      %v1127 = vshrl.u32 %v247, 16
      %v1129 = vrot.slane %v1127, 4
      %v1130 = vshll.u32 %v247, 16
      %v1132 = vrot.slane %v1130, 5
      %v1133 = vor.u32 %v1129, %v1132
      %v1134 = vrot.slane %v1133, 4
      %v1136 = vshll.u32 %v248, 16
      %v1138 = vrot.slane %v1136, 5
      %v1139 = vsel %vm957, %v1134, %v1138
      %v1140 = vshrl.u32 %v248, 16
      %v1142 = vrot.slane %v1140, 4
      %v1143 = vor.u32 %v1142, %v1138
      %v1144 = vrot.slane %v1143, 4
      %v1146 = vshll.u32 %v249, 16
      %v1148 = vrot.slane %v1146, 5
      %v1149 = vsel %vm957, %v1144, %v1148
      %v1151 = vshrl.u32 %v250, 16
      %v1153 = vrot.slane %v1151, 4
      %v1154 = vshll.u32 %v250, 16
      %v1156 = vrot.slane %v1154, 5
      %v1157 = vor.u32 %v1153, %v1156
      %v1158 = vrot.slane %v1157, 4
      %v1160 = vshll.u32 %v251, 16
      %v1162 = vrot.slane %v1160, 5
      %v1163 = vsel %vm957, %v1158, %v1162
      %v1164 = vshrl.u32 %v251, 16
      %v1166 = vrot.slane %v1164, 4
      %v1167 = vor.u32 %v1166, %v1162
      %v1168 = vrot.slane %v1167, 4
      %v1170 = vshll.u32 %v252, 16
      %v1172 = vrot.slane %v1170, 5
      %v1173 = vsel %vm957, %v1168, %v1172
      %v1175 = vshrl.u32 %v253, 16
      %v1177 = vrot.slane %v1175, 4
      %v1178 = vshll.u32 %v253, 16
      %v1180 = vrot.slane %v1178, 5
      %v1181 = vor.u32 %v1177, %v1180
      %v1182 = vrot.slane %v1181, 4
      %v1184 = vshll.u32 %v254, 16
      %v1186 = vrot.slane %v1184, 5
      %v1187 = vsel %vm957, %v1182, %v1186
      %v1188 = vshrl.u32 %v254, 16
      %v1190 = vrot.slane %v1188, 4
      %v1191 = vor.u32 %v1190, %v1186
      %v1192 = vrot.slane %v1191, 4
      %v1194 = vshll.u32 %v255, 16
      %v1196 = vrot.slane %v1194, 5
      %v1197 = vsel %vm957, %v1192, %v1196
      %v1199 = vshrl.u32 %v256, 16
      %v1201 = vrot.slane %v1199, 4
      %v1202 = vshll.u32 %v256, 16
      %v1204 = vrot.slane %v1202, 5
      %v1205 = vor.u32 %v1201, %v1204
      %v1206 = vrot.slane %v1205, 4
      %v1208 = vshll.u32 %v257, 16
      %v1210 = vrot.slane %v1208, 5
      %v1211 = vsel %vm957, %v1206, %v1210
      %v1212 = vshrl.u32 %v257, 16
      %v1214 = vrot.slane %v1212, 4
      %v1215 = vor.u32 %v1214, %v1210
      %v1216 = vrot.slane %v1215, 4
      %v1218 = vshll.u32 %v258, 16
      %v1220 = vrot.slane %v1218, 5
      %v1221 = vsel %vm957, %v1216, %v1220
      %v1223 = vshrl.u32 %v259, 16
      %v1225 = vrot.slane %v1223, 4
      %v1226 = vshll.u32 %v259, 16
      %v1228 = vrot.slane %v1226, 5
      %v1229 = vor.u32 %v1225, %v1228
      %v1230 = vrot.slane %v1229, 4
      %v1232 = vshll.u32 %v260, 16
      %v1234 = vrot.slane %v1232, 5
      %v1235 = vsel %vm957, %v1230, %v1234
      %v1236 = vshrl.u32 %v260, 16
      %v1238 = vrot.slane %v1236, 4
      %v1239 = vor.u32 %v1238, %v1234
      %v1240 = vrot.slane %v1239, 4
      %v1242 = vshll.u32 %v261, 16
      %v1244 = vrot.slane %v1242, 5
      %v1245 = vsel %vm957, %v1240, %v1244
      %v1247 = vshrl.u32 %v262, 16
      %v1249 = vrot.slane %v1247, 4
      %v1250 = vshll.u32 %v262, 16
      %v1252 = vrot.slane %v1250, 5
      %v1253 = vor.u32 %v1249, %v1252
      %v1254 = vrot.slane %v1253, 4
      %v1256 = vshll.u32 %v263, 16
      %v1258 = vrot.slane %v1256, 5
      %v1259 = vsel %vm957, %v1254, %v1258
      %v1260 = vshrl.u32 %v263, 16
      %v1262 = vrot.slane %v1260, 4
      %v1263 = vor.u32 %v1262, %v1258
      %v1264 = vrot.slane %v1263, 4
      %v1266 = vshll.u32 %v264, 16
      %v1268 = vrot.slane %v1266, 5
      %v1269 = vsel %vm957, %v1264, %v1268
      %v1271 = vshrl.u32 %v265, 16
      %v1273 = vrot.slane %v1271, 4
      %v1274 = vshll.u32 %v265, 16
      %v1276 = vrot.slane %v1274, 5
      %v1277 = vor.u32 %v1273, %v1276
      %v1278 = vrot.slane %v1277, 4
      %v1280 = vshll.u32 %v266, 16
      %v1282 = vrot.slane %v1280, 5
      %v1283 = vsel %vm957, %v1278, %v1282
      %v1284 = vshrl.u32 %v266, 16
      %v1286 = vrot.slane %v1284, 4
      %v1287 = vor.u32 %v1286, %v1282
      %v1288 = vrot.slane %v1287, 4
      %v1290 = vshll.u32 %v267, 16
      %v1292 = vrot.slane %v1290, 5
      %v1293 = vsel %vm957, %v1288, %v1292
      %v1295 = vshrl.u32 %v268, 16
      %v1297 = vrot.slane %v1295, 4
      %v1298 = vshll.u32 %v268, 16
      %v1300 = vrot.slane %v1298, 5
      %v1301 = vor.u32 %v1297, %v1300
      %v1302 = vrot.slane %v1301, 4
      %v1304 = vshll.u32 %v269, 16
      %v1306 = vrot.slane %v1304, 5
      %v1307 = vsel %vm957, %v1302, %v1306
      %v1308 = vshrl.u32 %v269, 16
      %v1310 = vrot.slane %v1308, 4
      %v1311 = vor.u32 %v1310, %v1306
      %v1312 = vrot.slane %v1311, 4
      %v1314 = vshll.u32 %v270, 16
      %v1316 = vrot.slane %v1314, 5
      %v1317 = vsel %vm957, %v1312, %v1316
      %v1319 = vshrl.u32 %v271, 16
      %v1321 = vrot.slane %v1319, 4
      %v1322 = vshll.u32 %v271, 16
      %v1324 = vrot.slane %v1322, 5
      %v1325 = vor.u32 %v1321, %v1324
      %v1326 = vrot.slane %v1325, 4
      %v1328 = vshll.u32 %v272, 16
      %v1330 = vrot.slane %v1328, 5
      %v1331 = vsel %vm957, %v1326, %v1330
      %v1332 = vshrl.u32 %v272, 16
      %v1334 = vrot.slane %v1332, 4
      %v1335 = vor.u32 %v1334, %v1330
      %v1336 = vrot.slane %v1335, 4
      %v1338 = vshll.u32 %v273, 16
      %v1340 = vrot.slane %v1338, 5
      %v1341 = vsel %vm957, %v1336, %v1340
      %s1342 = scalar_lea.vmem %s1, 2
      %v1343 = vld [vmem:[%s1342] sm:$0x3]
      %v1344 = vunpack.c.l.b16 %v971
      %v1345 = vunpack.c.l.b16 %v981
      %v1346 = vunpack.c.l.b16 %v995
      %v1347 = vunpack.c.l.b16 %v1005
      %v1348 = vunpack.c.l.b16 %v1019
      %v1349 = vunpack.c.l.b16 %v1029
      %v1350 = vunpack.c.l.b16 %v1043
      %v1351 = vunpack.c.l.b16 %v1053
      %v1352 = vunpack.c.l.b16 %v1067
      %v1353 = vunpack.c.l.b16 %v1077
      %v1354 = vunpack.c.l.b16 %v1091
      %v1355 = vunpack.c.l.b16 %v1101
      %v1356 = vunpack.c.l.b16 %v1115
      %v1357 = vunpack.c.l.b16 %v1125
      %v1358 = vunpack.c.l.b16 %v1139
      %v1359 = vunpack.c.l.b16 %v1149
      %v1360 = vunpack.c.l.b16 %v1163
      %v1361 = vunpack.c.l.b16 %v1173
      %v1362 = vunpack.c.l.b16 %v1187
      %v1363 = vunpack.c.l.b16 %v1197
      %v1364 = vunpack.c.l.b16 %v1211
      %v1365 = vunpack.c.l.b16 %v1221
      %v1366 = vunpack.c.l.b16 %v1235
      %v1367 = vunpack.c.l.b16 %v1245
      %v1368 = vunpack.c.l.b16 %v1259
      %v1369 = vunpack.c.l.b16 %v1269
      %v1370 = vunpack.c.l.b16 %v1283
      %v1371 = vunpack.c.l.b16 %v1293
      %v1372 = vunpack.c.l.b16 %v1307
      %v1373 = vunpack.c.l.b16 %v1317
      %v1374 = vunpack.c.l.b16 %v1331
      %v1375 = vunpack.c.l.b16 %v1341
      %v1376 = vpack.c.b16 %v1345, %v1344
      %v1377 = vpack.c.b16 %v1347, %v1346
      %v1378 = vpack.c.b16 %v1349, %v1348
      %v1379 = vpack.c.b16 %v1351, %v1350
      %v1380 = vpack.c.b16 %v1353, %v1352
      %v1381 = vpack.c.b16 %v1355, %v1354
      %v1382 = vpack.c.b16 %v1357, %v1356
      %v1383 = vpack.c.b16 %v1359, %v1358
      %v1384 = vpack.c.b16 %v1361, %v1360
      %v1385 = vpack.c.b16 %v1363, %v1362
      %v1386 = vpack.c.b16 %v1365, %v1364
      %v1387 = vpack.c.b16 %v1367, %v1366
      %v1388 = vpack.c.b16 %v1369, %v1368
      %v1389 = vpack.c.b16 %v1371, %v1370
      %v1390 = vpack.c.b16 %v1373, %v1372
      %v1391 = vpack.c.b16 %v1375, %v1374
      %v1393 = vsel %vm363, %v1376, 0
      %v1396 = vsel %vm363, %v1377, 0
      %v1399 = vsel %vm363, %v1378, 0
      %v1402 = vsel %vm363, %v1379, 0
      %v1405 = vsel %vm363, %v1380, 0
      %v1408 = vsel %vm363, %v1381, 0
      %v1411 = vsel %vm363, %v1382, 0
      %v1414 = vsel %vm363, %v1383, 0
      %v1417 = vsel %vm363, %v1384, 0
      %v1420 = vsel %vm363, %v1385, 0
      %v1423 = vsel %vm363, %v1386, 0
      %v1426 = vsel %vm363, %v1387, 0
      %v1429 = vsel %vm363, %v1388, 0
      %v1432 = vsel %vm363, %v1389, 0
      %v1435 = vsel %vm363, %v1390, 0
      %v1438 = vsel %vm363, %v1391, 0
      %v1441 = vsel %vm412, %v1343, 0
      %1443 = vmatprep.subr.bf16.mxu0 0
      %1444 = vmatpush1.bf16.msra.mxu0 %v1441
      %1445 = vmatprep.subr.bf16.mxu0 0
      %1446 = vmatpush1.bf16.msra.mxu0 0
      %1447 = vmatprep.subr.bf16.mxu0 0
      %1448 = vmatpush1.bf16.msra.mxu0 0
      %1449 = vmatprep.subr.bf16.mxu0 0
      %1450 = vmatpush1.bf16.msra.mxu0 0
      %1451 = vmatprep.subr.bf16.mxu0 0
      %1452 = vmatpush1.bf16.msra.mxu0 0
      %1453 = vmatprep.subr.bf16.mxu0 0
      %1454 = vmatpush1.bf16.msra.mxu0 0
      %1455 = vmatprep.subr.bf16.mxu0 0
      %1456 = vmatpush1.bf16.msra.mxu0 0
      %1457 = vmatprep.subr.bf16.mxu0 0
      %1458 = vmatpush1.bf16.msra.mxu0 0
      %1459 = vmatprep.subr.bf16.mxu0 0
      %1460 = vmatpush1.bf16.msra.mxu0 0
      %1461 = vmatprep.subr.bf16.mxu0 0
      %1462 = vmatpush1.bf16.msra.mxu0 0
      %1463 = vmatprep.subr.bf16.mxu0 0
      %1464 = vmatpush1.bf16.msra.mxu0 0
      %1465 = vmatprep.subr.bf16.mxu0 0
      %1466 = vmatpush1.bf16.msra.mxu0 0
      %1467 = vmatprep.subr.bf16.mxu0 0
      %1468 = vmatpush1.bf16.msra.mxu0 0
      %1469 = vmatprep.subr.bf16.mxu0 0
      %1470 = vmatpush1.bf16.msra.mxu0 0
      %1471 = vmatprep.subr.bf16.mxu0 0
      %1472 = vmatpush1.bf16.msra.mxu0 0
      %1473 = vmatprep.subr.bf16.mxu0 0
      %1474 = vmatpush1.bf16.msra.mxu0 0
      %1475 = vmatprep.mubr.bf16.mxu0 0
      %1476 = vmatmul.mubr.bf16.gmra.mrb[0].mxu0 %v1393
      %v1477 = vpop.f32.mrb[0].mxu0
      %v1478 = vadd.f32 0.0, %v1477
      %v1479 = vpop.f32.mrb[0].mxu0
      %v1480 = vpop.f32.mrb[0].mxu0
      %v1481 = vadd.f32 0.0, %v1480
      %v1482 = vpop.f32.mrb[0].mxu0
      %1483 = vmatprep.mubr.bf16.mxu0 0
      %1484 = vmatmul.mubr.bf16.gmra.mrb[0].mxu0 %v1396
      %v1485 = vpop.f32.mrb[0].mxu0
      %v1486 = vadd.f32 0.0, %v1485
      %v1487 = vpop.f32.mrb[0].mxu0
      %v1488 = vpop.f32.mrb[0].mxu0
      %v1489 = vadd.f32 0.0, %v1488
      %v1490 = vpop.f32.mrb[0].mxu0
      %1491 = vmatprep.mubr.bf16.mxu0 0
      %1492 = vmatmul.mubr.bf16.gmra.mrb[0].mxu0 %v1399
      %v1493 = vpop.f32.mrb[0].mxu0
      %v1494 = vadd.f32 0.0, %v1493
      %v1495 = vpop.f32.mrb[0].mxu0
      %v1496 = vpop.f32.mrb[0].mxu0
      %v1497 = vadd.f32 0.0, %v1496
      %v1498 = vpop.f32.mrb[0].mxu0
      %1499 = vmatprep.mubr.bf16.mxu0 0
      %1500 = vmatmul.mubr.bf16.gmra.mrb[0].mxu0 %v1402
      %v1501 = vpop.f32.mrb[0].mxu0
      %v1502 = vadd.f32 0.0, %v1501
      %v1503 = vpop.f32.mrb[0].mxu0
      %v1504 = vpop.f32.mrb[0].mxu0
      %v1505 = vadd.f32 0.0, %v1504
      %v1506 = vpop.f32.mrb[0].mxu0
      %1507 = vmatprep.mubr.bf16.mxu0 0
      %1508 = vmatmul.mubr.bf16.gmra.mrb[0].mxu0 %v1405
      %v1509 = vpop.f32.mrb[0].mxu0
      %v1510 = vadd.f32 0.0, %v1509
      %v1511 = vpop.f32.mrb[0].mxu0
      %v1512 = vpop.f32.mrb[0].mxu0
      %v1513 = vadd.f32 0.0, %v1512
      %v1514 = vpop.f32.mrb[0].mxu0
      %1515 = vmatprep.mubr.bf16.mxu0 0
      %1516 = vmatmul.mubr.bf16.gmra.mrb[0].mxu0 %v1408
      %v1517 = vpop.f32.mrb[0].mxu0
      %v1518 = vadd.f32 0.0, %v1517
      %v1519 = vpop.f32.mrb[0].mxu0
      %v1520 = vpop.f32.mrb[0].mxu0
      %v1521 = vadd.f32 0.0, %v1520
      %v1522 = vpop.f32.mrb[0].mxu0
      %1523 = vmatprep.mubr.bf16.mxu0 0
      %1524 = vmatmul.mubr.bf16.gmra.mrb[0].mxu0 %v1411
      %v1525 = vpop.f32.mrb[0].mxu0
      %v1526 = vadd.f32 0.0, %v1525
      %v1527 = vpop.f32.mrb[0].mxu0
      %v1528 = vpop.f32.mrb[0].mxu0
      %v1529 = vadd.f32 0.0, %v1528
      %v1530 = vpop.f32.mrb[0].mxu0
      %1531 = vmatprep.mubr.bf16.mxu0 0
      %1532 = vmatmul.mubr.bf16.gmra.mrb[0].mxu0 %v1414
      %v1533 = vpop.f32.mrb[0].mxu0
      %v1534 = vadd.f32 0.0, %v1533
      %v1535 = vpop.f32.mrb[0].mxu0
      %v1536 = vpop.f32.mrb[0].mxu0
      %v1537 = vadd.f32 0.0, %v1536
      %v1538 = vpop.f32.mrb[0].mxu0
      %1539 = vmatprep.mubr.bf16.mxu0 0
      %1540 = vmatmul.mubr.bf16.gmra.mrb[0].mxu0 %v1417
      %v1541 = vpop.f32.mrb[0].mxu0
      %v1542 = vadd.f32 0.0, %v1541
      %v1543 = vpop.f32.mrb[0].mxu0
      %v1544 = vpop.f32.mrb[0].mxu0
      %v1545 = vadd.f32 0.0, %v1544
      %v1546 = vpop.f32.mrb[0].mxu0
      %1547 = vmatprep.mubr.bf16.mxu0 0
      %1548 = vmatmul.mubr.bf16.gmra.mrb[0].mxu0 %v1420
      %v1549 = vpop.f32.mrb[0].mxu0
      %v1550 = vadd.f32 0.0, %v1549
      %v1551 = vpop.f32.mrb[0].mxu0
      %v1552 = vpop.f32.mrb[0].mxu0
      %v1553 = vadd.f32 0.0, %v1552
      %v1554 = vpop.f32.mrb[0].mxu0
      %1555 = vmatprep.mubr.bf16.mxu0 0
      %1556 = vmatmul.mubr.bf16.gmra.mrb[0].mxu0 %v1423
      %v1557 = vpop.f32.mrb[0].mxu0
      %v1558 = vadd.f32 0.0, %v1557
      %v1559 = vpop.f32.mrb[0].mxu0
      %v1560 = vpop.f32.mrb[0].mxu0
      %v1561 = vadd.f32 0.0, %v1560
      %v1562 = vpop.f32.mrb[0].mxu0
      %1563 = vmatprep.mubr.bf16.mxu0 0
      %1564 = vmatmul.mubr.bf16.gmra.mrb[0].mxu0 %v1426
      %v1565 = vpop.f32.mrb[0].mxu0
      %v1566 = vadd.f32 0.0, %v1565
      %v1567 = vpop.f32.mrb[0].mxu0
      %v1568 = vpop.f32.mrb[0].mxu0
      %v1569 = vadd.f32 0.0, %v1568
      %v1570 = vpop.f32.mrb[0].mxu0
      %1571 = vmatprep.mubr.bf16.mxu0 0
      %1572 = vmatmul.mubr.bf16.gmra.mrb[0].mxu0 %v1429
      %v1573 = vpop.f32.mrb[0].mxu0
      %v1574 = vadd.f32 0.0, %v1573
      %v1575 = vpop.f32.mrb[0].mxu0
      %v1576 = vpop.f32.mrb[0].mxu0
      %v1577 = vadd.f32 0.0, %v1576
      %v1578 = vpop.f32.mrb[0].mxu0
      %1579 = vmatprep.mubr.bf16.mxu0 0
      %1580 = vmatmul.mubr.bf16.gmra.mrb[0].mxu0 %v1432
      %v1581 = vpop.f32.mrb[0].mxu0
      %v1582 = vadd.f32 0.0, %v1581
      %v1583 = vpop.f32.mrb[0].mxu0
      %v1584 = vpop.f32.mrb[0].mxu0
      %v1585 = vadd.f32 0.0, %v1584
      %v1586 = vpop.f32.mrb[0].mxu0
      %1587 = vmatprep.mubr.bf16.mxu0 0
      %1588 = vmatmul.mubr.bf16.gmra.mrb[0].mxu0 %v1435
      %v1589 = vpop.f32.mrb[0].mxu0
      %v1590 = vadd.f32 0.0, %v1589
      %v1591 = vpop.f32.mrb[0].mxu0
      %v1592 = vpop.f32.mrb[0].mxu0
      %v1593 = vadd.f32 0.0, %v1592
      %v1594 = vpop.f32.mrb[0].mxu0
      %1595 = vmatprep.mubr.bf16.mxu0 0
      %1596 = vmatmul.mubr.bf16.gmra.mrb[0].mxu0 %v1438
      %v1597 = vpop.f32.mrb[0].mxu0
      %v1598 = vadd.f32 0.0, %v1597
      %v1599 = vpop.f32.mrb[0].mxu0
      %v1600 = vpop.f32.mrb[0].mxu0
      %v1601 = vadd.f32 0.0, %v1600
      %v1602 = vpop.f32.mrb[0].mxu0
      %1603 = vdwg.mxu0
      %v1604 = vadd.f32 %v923, %v1478
      %v1605 = vadd.f32 %v924, %v1481
      %v1606 = vadd.f32 %v925, %v1486
      %v1607 = vadd.f32 %v926, %v1489
      %v1608 = vadd.f32 %v927, %v1494
      %v1609 = vadd.f32 %v928, %v1497
      %v1610 = vadd.f32 %v929, %v1502
      %v1611 = vadd.f32 %v930, %v1505
      %v1612 = vadd.f32 %v931, %v1510
      %v1613 = vadd.f32 %v932, %v1513
      %v1614 = vadd.f32 %v933, %v1518
      %v1615 = vadd.f32 %v934, %v1521
      %v1616 = vadd.f32 %v935, %v1526
      %v1617 = vadd.f32 %v936, %v1529
      %v1618 = vadd.f32 %v937, %v1534
      %v1619 = vadd.f32 %v938, %v1537
      %v1620 = vadd.f32 %v939, %v1542
      %v1621 = vadd.f32 %v940, %v1545
      %v1622 = vadd.f32 %v941, %v1550
      %v1623 = vadd.f32 %v942, %v1553
      %v1624 = vadd.f32 %v943, %v1558
      %v1625 = vadd.f32 %v944, %v1561
      %v1626 = vadd.f32 %v945, %v1566
      %v1627 = vadd.f32 %v946, %v1569
      %v1628 = vadd.f32 %v947, %v1574
      %v1629 = vadd.f32 %v948, %v1577
      %v1630 = vadd.f32 %v949, %v1582
      %v1631 = vadd.f32 %v950, %v1585
      %v1632 = vadd.f32 %v951, %v1590
      %v1633 = vadd.f32 %v952, %v1593
      %v1634 = vadd.f32 %v953, %v1598
      %v1635 = vadd.f32 %v954, %v1601
      %v1637 = vshrl.u32 %v274, 16
      %v1639 = vrot.slane %v1637, 4
      %v1640 = vshll.u32 %v274, 16
      %v1642 = vrot.slane %v1640, 5
      %v1643 = vor.u32 %v1639, %v1642
      %v1644 = vrot.slane %v1643, 4
      %v1646 = vshll.u32 %v275, 16
      %v1648 = vrot.slane %v1646, 5
      %v1649 = vsel %vm957, %v1644, %v1648
      %v1650 = vshrl.u32 %v275, 16
      %v1652 = vrot.slane %v1650, 4
      %v1653 = vor.u32 %v1652, %v1648
      %v1654 = vrot.slane %v1653, 4
      %v1656 = vshll.u32 %v276, 16
      %v1658 = vrot.slane %v1656, 5
      %v1659 = vsel %vm957, %v1654, %v1658
      %s1660 = scalar_lea.vmem %s1, 8
      %v1661 = vld [vmem:[%s1660] sm:$0x3]
      %v1662 = vunpack.c.l.b16 %v1649
      %v1663 = vunpack.c.l.b16 %v1659
      %v1664 = vpack.c.b16 %v1663, %v1662
      %v1666 = vsel %vm363, %v1664, 0
      %v1669 = vsel %vm412, %v1661, 0
      %1671 = vmatprep.subr.bf16.mxu0 0
      %1672 = vmatpush1.bf16.msra.mxu0 %v1669
      %1673 = vmatprep.subr.bf16.mxu0 0
      %1674 = vmatpush1.bf16.msra.mxu0 0
      %1675 = vmatprep.subr.bf16.mxu0 0
      %1676 = vmatpush1.bf16.msra.mxu0 0
      %1677 = vmatprep.subr.bf16.mxu0 0
      %1678 = vmatpush1.bf16.msra.mxu0 0
      %1679 = vmatprep.subr.bf16.mxu0 0
      %1680 = vmatpush1.bf16.msra.mxu0 0
      %1681 = vmatprep.subr.bf16.mxu0 0
      %1682 = vmatpush1.bf16.msra.mxu0 0
      %1683 = vmatprep.subr.bf16.mxu0 0
      %1684 = vmatpush1.bf16.msra.mxu0 0
      %1685 = vmatprep.subr.bf16.mxu0 0
      %1686 = vmatpush1.bf16.msra.mxu0 0
      %1687 = vmatprep.subr.bf16.mxu0 0
      %1688 = vmatpush1.bf16.msra.mxu0 0
      %1689 = vmatprep.subr.bf16.mxu0 0
      %1690 = vmatpush1.bf16.msra.mxu0 0
      %1691 = vmatprep.subr.bf16.mxu0 0
      %1692 = vmatpush1.bf16.msra.mxu0 0
      %1693 = vmatprep.subr.bf16.mxu0 0
      %1694 = vmatpush1.bf16.msra.mxu0 0
      %1695 = vmatprep.subr.bf16.mxu0 0
      %1696 = vmatpush1.bf16.msra.mxu0 0
      %1697 = vmatprep.subr.bf16.mxu0 0
      %1698 = vmatpush1.bf16.msra.mxu0 0
      %1699 = vmatprep.subr.bf16.mxu0 0
      %1700 = vmatpush1.bf16.msra.mxu0 0
      %1701 = vmatprep.subr.bf16.mxu0 0
      %1702 = vmatpush1.bf16.msra.mxu0 0
      %1703 = vmatprep.mubr.bf16.mxu0 0
      %1704 = vmatmul.mubr.bf16.gmra.mrb[0].mxu0 %v1396
      %v1705 = vpop.f32.mrb[0].mxu0
      %v1706 = vadd.f32 0.0, %v1705
      %v1707 = vpop.f32.mrb[0].mxu0
      %v1708 = vpop.f32.mrb[0].mxu0
      %v1709 = vadd.f32 0.0, %v1708
      %v1710 = vpop.f32.mrb[0].mxu0
      %1711 = vmatprep.mubr.bf16.mxu0 0
      %1712 = vmatmul.mubr.bf16.gmra.mrb[0].mxu0 %v1399
      %v1713 = vpop.f32.mrb[0].mxu0
      %v1714 = vadd.f32 0.0, %v1713
      %v1715 = vpop.f32.mrb[0].mxu0
      %v1716 = vpop.f32.mrb[0].mxu0
      %v1717 = vadd.f32 0.0, %v1716
      %v1718 = vpop.f32.mrb[0].mxu0
      %1719 = vmatprep.mubr.bf16.mxu0 0
      %1720 = vmatmul.mubr.bf16.gmra.mrb[0].mxu0 %v1402
      %v1721 = vpop.f32.mrb[0].mxu0
      %v1722 = vadd.f32 0.0, %v1721
      %v1723 = vpop.f32.mrb[0].mxu0
      %v1724 = vpop.f32.mrb[0].mxu0
      %v1725 = vadd.f32 0.0, %v1724
      %v1726 = vpop.f32.mrb[0].mxu0
      %1727 = vmatprep.mubr.bf16.mxu0 0
      %1728 = vmatmul.mubr.bf16.gmra.mrb[0].mxu0 %v1405
      %v1729 = vpop.f32.mrb[0].mxu0
      %v1730 = vadd.f32 0.0, %v1729
      %v1731 = vpop.f32.mrb[0].mxu0
      %v1732 = vpop.f32.mrb[0].mxu0
      %v1733 = vadd.f32 0.0, %v1732
      %v1734 = vpop.f32.mrb[0].mxu0
      %1735 = vmatprep.mubr.bf16.mxu0 0
      %1736 = vmatmul.mubr.bf16.gmra.mrb[0].mxu0 %v1408
      %v1737 = vpop.f32.mrb[0].mxu0
      %v1738 = vadd.f32 0.0, %v1737
      %v1739 = vpop.f32.mrb[0].mxu0
      %v1740 = vpop.f32.mrb[0].mxu0
      %v1741 = vadd.f32 0.0, %v1740
      %v1742 = vpop.f32.mrb[0].mxu0
      %1743 = vmatprep.mubr.bf16.mxu0 0
      %1744 = vmatmul.mubr.bf16.gmra.mrb[0].mxu0 %v1411
      %v1745 = vpop.f32.mrb[0].mxu0
      %v1746 = vadd.f32 0.0, %v1745
      %v1747 = vpop.f32.mrb[0].mxu0
      %v1748 = vpop.f32.mrb[0].mxu0
      %v1749 = vadd.f32 0.0, %v1748
      %v1750 = vpop.f32.mrb[0].mxu0
      %1751 = vmatprep.mubr.bf16.mxu0 0
      %1752 = vmatmul.mubr.bf16.gmra.mrb[0].mxu0 %v1414
      %v1753 = vpop.f32.mrb[0].mxu0
      %v1754 = vadd.f32 0.0, %v1753
      %v1755 = vpop.f32.mrb[0].mxu0
      %v1756 = vpop.f32.mrb[0].mxu0
      %v1757 = vadd.f32 0.0, %v1756
      %v1758 = vpop.f32.mrb[0].mxu0
      %1759 = vmatprep.mubr.bf16.mxu0 0
      %1760 = vmatmul.mubr.bf16.gmra.mrb[0].mxu0 %v1417
      %v1761 = vpop.f32.mrb[0].mxu0
      %v1762 = vadd.f32 0.0, %v1761
      %v1763 = vpop.f32.mrb[0].mxu0
      %v1764 = vpop.f32.mrb[0].mxu0
      %v1765 = vadd.f32 0.0, %v1764
      %v1766 = vpop.f32.mrb[0].mxu0
      %1767 = vmatprep.mubr.bf16.mxu0 0
      %1768 = vmatmul.mubr.bf16.gmra.mrb[0].mxu0 %v1420
      %v1769 = vpop.f32.mrb[0].mxu0
      %v1770 = vadd.f32 0.0, %v1769
      %v1771 = vpop.f32.mrb[0].mxu0
      %v1772 = vpop.f32.mrb[0].mxu0
      %v1773 = vadd.f32 0.0, %v1772
      %v1774 = vpop.f32.mrb[0].mxu0
      %1775 = vmatprep.mubr.bf16.mxu0 0
      %1776 = vmatmul.mubr.bf16.gmra.mrb[0].mxu0 %v1423
      %v1777 = vpop.f32.mrb[0].mxu0
      %v1778 = vadd.f32 0.0, %v1777
      %v1779 = vpop.f32.mrb[0].mxu0
      %v1780 = vpop.f32.mrb[0].mxu0
      %v1781 = vadd.f32 0.0, %v1780
      %v1782 = vpop.f32.mrb[0].mxu0
      %1783 = vmatprep.mubr.bf16.mxu0 0
      %1784 = vmatmul.mubr.bf16.gmra.mrb[0].mxu0 %v1426
      %v1785 = vpop.f32.mrb[0].mxu0
      %v1786 = vadd.f32 0.0, %v1785
      %v1787 = vpop.f32.mrb[0].mxu0
      %v1788 = vpop.f32.mrb[0].mxu0
      %v1789 = vadd.f32 0.0, %v1788
      %v1790 = vpop.f32.mrb[0].mxu0
      %1791 = vmatprep.mubr.bf16.mxu0 0
      %1792 = vmatmul.mubr.bf16.gmra.mrb[0].mxu0 %v1429
      %v1793 = vpop.f32.mrb[0].mxu0
      %v1794 = vadd.f32 0.0, %v1793
      %v1795 = vpop.f32.mrb[0].mxu0
      %v1796 = vpop.f32.mrb[0].mxu0
      %v1797 = vadd.f32 0.0, %v1796
      %v1798 = vpop.f32.mrb[0].mxu0
      %1799 = vmatprep.mubr.bf16.mxu0 0
      %1800 = vmatmul.mubr.bf16.gmra.mrb[0].mxu0 %v1432
      %v1801 = vpop.f32.mrb[0].mxu0
      %v1802 = vadd.f32 0.0, %v1801
      %v1803 = vpop.f32.mrb[0].mxu0
      %v1804 = vpop.f32.mrb[0].mxu0
      %v1805 = vadd.f32 0.0, %v1804
      %v1806 = vpop.f32.mrb[0].mxu0
      %1807 = vmatprep.mubr.bf16.mxu0 0
      %1808 = vmatmul.mubr.bf16.gmra.mrb[0].mxu0 %v1435
      %v1809 = vpop.f32.mrb[0].mxu0
      %v1810 = vadd.f32 0.0, %v1809
      %v1811 = vpop.f32.mrb[0].mxu0
      %v1812 = vpop.f32.mrb[0].mxu0
      %v1813 = vadd.f32 0.0, %v1812
      %v1814 = vpop.f32.mrb[0].mxu0
      %1815 = vmatprep.mubr.bf16.mxu0 0
      %1816 = vmatmul.mubr.bf16.gmra.mrb[0].mxu0 %v1438
      %v1817 = vpop.f32.mrb[0].mxu0
      %v1818 = vadd.f32 0.0, %v1817
      %v1819 = vpop.f32.mrb[0].mxu0
      %v1820 = vpop.f32.mrb[0].mxu0
      %v1821 = vadd.f32 0.0, %v1820
      %v1822 = vpop.f32.mrb[0].mxu0
      %1823 = vmatprep.mubr.bf16.mxu0 0
      %1824 = vmatmul.mubr.bf16.gmra.mrb[0].mxu0 %v1666
      %v1825 = vpop.f32.mrb[0].mxu0
      %v1826 = vadd.f32 0.0, %v1825
      %v1827 = vpop.f32.mrb[0].mxu0
      %v1828 = vpop.f32.mrb[0].mxu0
      %v1829 = vadd.f32 0.0, %v1828
      %v1830 = vpop.f32.mrb[0].mxu0
      %1831 = vdwg.mxu0
      %v1832 = vadd.f32 %v1604, %v1706
      %v1833 = vadd.f32 %v1605, %v1709
      %v1834 = vadd.f32 %v1606, %v1714
      %v1835 = vadd.f32 %v1607, %v1717
      %v1836 = vadd.f32 %v1608, %v1722
      %v1837 = vadd.f32 %v1609, %v1725
      %v1838 = vadd.f32 %v1610, %v1730
      %v1839 = vadd.f32 %v1611, %v1733
      %v1840 = vadd.f32 %v1612, %v1738
      %v1841 = vadd.f32 %v1613, %v1741
      %v1842 = vadd.f32 %v1614, %v1746
      %v1843 = vadd.f32 %v1615, %v1749
      %v1844 = vadd.f32 %v1616, %v1754
      %v1845 = vadd.f32 %v1617, %v1757
      %v1846 = vadd.f32 %v1618, %v1762
      %v1847 = vadd.f32 %v1619, %v1765
      %v1848 = vadd.f32 %v1620, %v1770
      %v1849 = vadd.f32 %v1621, %v1773
      %v1850 = vadd.f32 %v1622, %v1778
      %v1851 = vadd.f32 %v1623, %v1781
      %v1852 = vadd.f32 %v1624, %v1786
      %v1853 = vadd.f32 %v1625, %v1789
      %v1854 = vadd.f32 %v1626, %v1794
      %v1855 = vadd.f32 %v1627, %v1797
      %v1856 = vadd.f32 %v1628, %v1802
      %v1857 = vadd.f32 %v1629, %v1805
      %v1858 = vadd.f32 %v1630, %v1810
      %v1859 = vadd.f32 %v1631, %v1813
      %v1860 = vadd.f32 %v1632, %v1818
      %v1861 = vadd.f32 %v1633, %v1821
      %v1862 = vadd.f32 %v1634, %v1826
      %v1863 = vadd.f32 %v1635, %v1829
      %v1865 = vshrl.u32 %v277, 16
      %v1867 = vrot.slane %v1865, 4
      %v1868 = vshll.u32 %v277, 16
      %v1870 = vrot.slane %v1868, 5
      %v1871 = vor.u32 %v1867, %v1870
      %v1872 = vrot.slane %v1871, 4
      %v1874 = vshll.u32 %v278, 16
      %v1876 = vrot.slane %v1874, 5
      %v1877 = vsel %vm957, %v1872, %v1876
      %v1878 = vshrl.u32 %v278, 16
      %v1880 = vrot.slane %v1878, 4
      %v1881 = vor.u32 %v1880, %v1876
      %v1882 = vrot.slane %v1881, 4
      %v1884 = vshll.u32 %v279, 16
      %v1886 = vrot.slane %v1884, 5
      %v1887 = vsel %vm957, %v1882, %v1886
      %s1888 = scalar_lea.vmem %s1, 14
      %v1889 = vld [vmem:[%s1888] sm:$0x3]
      %v1890 = vunpack.c.l.b16 %v1877
      %v1891 = vunpack.c.l.b16 %v1887
      %v1892 = vpack.c.b16 %v1891, %v1890
      %v1894 = vsel %vm363, %v1892, 0
      %v1897 = vsel %vm412, %v1889, 0
      %1899 = vmatprep.subr.bf16.mxu0 0
      %1900 = vmatpush1.bf16.msra.mxu0 %v1897
      %1901 = vmatprep.subr.bf16.mxu0 0
      %1902 = vmatpush1.bf16.msra.mxu0 0
      %1903 = vmatprep.subr.bf16.mxu0 0
      %1904 = vmatpush1.bf16.msra.mxu0 0
      %1905 = vmatprep.subr.bf16.mxu0 0
      %1906 = vmatpush1.bf16.msra.mxu0 0
      %1907 = vmatprep.subr.bf16.mxu0 0
      %1908 = vmatpush1.bf16.msra.mxu0 0
      %1909 = vmatprep.subr.bf16.mxu0 0
      %1910 = vmatpush1.bf16.msra.mxu0 0
      %1911 = vmatprep.subr.bf16.mxu0 0
      %1912 = vmatpush1.bf16.msra.mxu0 0
      %1913 = vmatprep.subr.bf16.mxu0 0
      %1914 = vmatpush1.bf16.msra.mxu0 0
      %1915 = vmatprep.subr.bf16.mxu0 0
      %1916 = vmatpush1.bf16.msra.mxu0 0
      %1917 = vmatprep.subr.bf16.mxu0 0
      %1918 = vmatpush1.bf16.msra.mxu0 0
      %1919 = vmatprep.subr.bf16.mxu0 0
      %1920 = vmatpush1.bf16.msra.mxu0 0
      %1921 = vmatprep.subr.bf16.mxu0 0
      %1922 = vmatpush1.bf16.msra.mxu0 0
      %1923 = vmatprep.subr.bf16.mxu0 0
      %1924 = vmatpush1.bf16.msra.mxu0 0
      %1925 = vmatprep.subr.bf16.mxu0 0
      %1926 = vmatpush1.bf16.msra.mxu0 0
      %1927 = vmatprep.subr.bf16.mxu0 0
      %1928 = vmatpush1.bf16.msra.mxu0 0
      %1929 = vmatprep.subr.bf16.mxu0 0
      %1930 = vmatpush1.bf16.msra.mxu0 0
      %1931 = vmatprep.mubr.bf16.mxu0 0
      %1932 = vmatmul.mubr.bf16.gmra.mrb[0].mxu0 %v1399
      %v1933 = vpop.f32.mrb[0].mxu0
      %v1934 = vadd.f32 0.0, %v1933
      %v1935 = vpop.f32.mrb[0].mxu0
      %v1936 = vpop.f32.mrb[0].mxu0
      %v1937 = vadd.f32 0.0, %v1936
      %v1938 = vpop.f32.mrb[0].mxu0
      %1939 = vmatprep.mubr.bf16.mxu0 0
      %1940 = vmatmul.mubr.bf16.gmra.mrb[0].mxu0 %v1402
      %v1941 = vpop.f32.mrb[0].mxu0
      %v1942 = vadd.f32 0.0, %v1941
      %v1943 = vpop.f32.mrb[0].mxu0
      %v1944 = vpop.f32.mrb[0].mxu0
      %v1945 = vadd.f32 0.0, %v1944
      %v1946 = vpop.f32.mrb[0].mxu0
      %1947 = vmatprep.mubr.bf16.mxu0 0
      %1948 = vmatmul.mubr.bf16.gmra.mrb[0].mxu0 %v1405
      %v1949 = vpop.f32.mrb[0].mxu0
      %v1950 = vadd.f32 0.0, %v1949
      %v1951 = vpop.f32.mrb[0].mxu0
      %v1952 = vpop.f32.mrb[0].mxu0
      %v1953 = vadd.f32 0.0, %v1952
      %v1954 = vpop.f32.mrb[0].mxu0
      %1955 = vmatprep.mubr.bf16.mxu0 0
      %1956 = vmatmul.mubr.bf16.gmra.mrb[0].mxu0 %v1408
      %v1957 = vpop.f32.mrb[0].mxu0
      %v1958 = vadd.f32 0.0, %v1957
      %v1959 = vpop.f32.mrb[0].mxu0
      %v1960 = vpop.f32.mrb[0].mxu0
      %v1961 = vadd.f32 0.0, %v1960
      %v1962 = vpop.f32.mrb[0].mxu0
      %1963 = vmatprep.mubr.bf16.mxu0 0
      %1964 = vmatmul.mubr.bf16.gmra.mrb[0].mxu0 %v1411
      %v1965 = vpop.f32.mrb[0].mxu0
      %v1966 = vadd.f32 0.0, %v1965
      %v1967 = vpop.f32.mrb[0].mxu0
      %v1968 = vpop.f32.mrb[0].mxu0
      %v1969 = vadd.f32 0.0, %v1968
      %v1970 = vpop.f32.mrb[0].mxu0
      %1971 = vmatprep.mubr.bf16.mxu0 0
      %1972 = vmatmul.mubr.bf16.gmra.mrb[0].mxu0 %v1414
      %v1973 = vpop.f32.mrb[0].mxu0
      %v1974 = vadd.f32 0.0, %v1973
      %v1975 = vpop.f32.mrb[0].mxu0
      %v1976 = vpop.f32.mrb[0].mxu0
      %v1977 = vadd.f32 0.0, %v1976
      %v1978 = vpop.f32.mrb[0].mxu0
      %1979 = vmatprep.mubr.bf16.mxu0 0
      %1980 = vmatmul.mubr.bf16.gmra.mrb[0].mxu0 %v1417
      %v1981 = vpop.f32.mrb[0].mxu0
      %v1982 = vadd.f32 0.0, %v1981
      %v1983 = vpop.f32.mrb[0].mxu0
      %v1984 = vpop.f32.mrb[0].mxu0
      %v1985 = vadd.f32 0.0, %v1984
      %v1986 = vpop.f32.mrb[0].mxu0
      %1987 = vmatprep.mubr.bf16.mxu0 0
      %1988 = vmatmul.mubr.bf16.gmra.mrb[0].mxu0 %v1420
      %v1989 = vpop.f32.mrb[0].mxu0
      %v1990 = vadd.f32 0.0, %v1989
      %v1991 = vpop.f32.mrb[0].mxu0
      %v1992 = vpop.f32.mrb[0].mxu0
      %v1993 = vadd.f32 0.0, %v1992
      %v1994 = vpop.f32.mrb[0].mxu0
      %1995 = vmatprep.mubr.bf16.mxu0 0
      %1996 = vmatmul.mubr.bf16.gmra.mrb[0].mxu0 %v1423
      %v1997 = vpop.f32.mrb[0].mxu0
      %v1998 = vadd.f32 0.0, %v1997
      %v1999 = vpop.f32.mrb[0].mxu0
      %v2000 = vpop.f32.mrb[0].mxu0
      %v2001 = vadd.f32 0.0, %v2000
      %v2002 = vpop.f32.mrb[0].mxu0
      %2003 = vmatprep.mubr.bf16.mxu0 0
      %2004 = vmatmul.mubr.bf16.gmra.mrb[0].mxu0 %v1426
      %v2005 = vpop.f32.mrb[0].mxu0
      %v2006 = vadd.f32 0.0, %v2005
      %v2007 = vpop.f32.mrb[0].mxu0
      %v2008 = vpop.f32.mrb[0].mxu0
      %v2009 = vadd.f32 0.0, %v2008
      %v2010 = vpop.f32.mrb[0].mxu0
      %2011 = vmatprep.mubr.bf16.mxu0 0
      %2012 = vmatmul.mubr.bf16.gmra.mrb[0].mxu0 %v1429
      %v2013 = vpop.f32.mrb[0].mxu0
      %v2014 = vadd.f32 0.0, %v2013
      %v2015 = vpop.f32.mrb[0].mxu0
      %v2016 = vpop.f32.mrb[0].mxu0
      %v2017 = vadd.f32 0.0, %v2016
      %v2018 = vpop.f32.mrb[0].mxu0
      %2019 = vmatprep.mubr.bf16.mxu0 0
      %2020 = vmatmul.mubr.bf16.gmra.mrb[0].mxu0 %v1432
      %v2021 = vpop.f32.mrb[0].mxu0
      %v2022 = vadd.f32 0.0, %v2021
      %v2023 = vpop.f32.mrb[0].mxu0
      %v2024 = vpop.f32.mrb[0].mxu0
      %v2025 = vadd.f32 0.0, %v2024
      %v2026 = vpop.f32.mrb[0].mxu0
      %2027 = vmatprep.mubr.bf16.mxu0 0
      %2028 = vmatmul.mubr.bf16.gmra.mrb[0].mxu0 %v1435
      %v2029 = vpop.f32.mrb[0].mxu0
      %v2030 = vadd.f32 0.0, %v2029
      %v2031 = vpop.f32.mrb[0].mxu0
      %v2032 = vpop.f32.mrb[0].mxu0
      %v2033 = vadd.f32 0.0, %v2032
      %v2034 = vpop.f32.mrb[0].mxu0
      %2035 = vmatprep.mubr.bf16.mxu0 0
      %2036 = vmatmul.mubr.bf16.gmra.mrb[0].mxu0 %v1438
      %v2037 = vpop.f32.mrb[0].mxu0
      %v2038 = vadd.f32 0.0, %v2037
      %v2039 = vpop.f32.mrb[0].mxu0
      %v2040 = vpop.f32.mrb[0].mxu0
      %v2041 = vadd.f32 0.0, %v2040
      %v2042 = vpop.f32.mrb[0].mxu0
      %2043 = vmatprep.mubr.bf16.mxu0 0
      %2044 = vmatmul.mubr.bf16.gmra.mrb[0].mxu0 %v1666
      %v2045 = vpop.f32.mrb[0].mxu0
      %v2046 = vadd.f32 0.0, %v2045
      %v2047 = vpop.f32.mrb[0].mxu0
      %v2048 = vpop.f32.mrb[0].mxu0
      %v2049 = vadd.f32 0.0, %v2048
      %v2050 = vpop.f32.mrb[0].mxu0
      %2051 = vmatprep.mubr.bf16.mxu0 0
      %2052 = vmatmul.mubr.bf16.gmra.mrb[0].mxu0 %v1894
      %v2053 = vpop.f32.mrb[0].mxu0
      %v2054 = vadd.f32 0.0, %v2053
      %v2055 = vpop.f32.mrb[0].mxu0
      %v2056 = vpop.f32.mrb[0].mxu0
      %v2057 = vadd.f32 0.0, %v2056
      %v2058 = vpop.f32.mrb[0].mxu0
      %2059 = vdwg.mxu0
      %v2060 = vadd.f32 %v1832, %v1934
      %v2061 = vadd.f32 %v1833, %v1937
      %v2062 = vadd.f32 %v1834, %v1942
      %v2063 = vadd.f32 %v1835, %v1945
      %v2064 = vadd.f32 %v1836, %v1950
      %v2065 = vadd.f32 %v1837, %v1953
      %v2066 = vadd.f32 %v1838, %v1958
      %v2067 = vadd.f32 %v1839, %v1961
      %v2068 = vadd.f32 %v1840, %v1966
      %v2069 = vadd.f32 %v1841, %v1969
      %v2070 = vadd.f32 %v1842, %v1974
      %v2071 = vadd.f32 %v1843, %v1977
      %v2072 = vadd.f32 %v1844, %v1982
      %v2073 = vadd.f32 %v1845, %v1985
      %v2074 = vadd.f32 %v1846, %v1990
      %v2075 = vadd.f32 %v1847, %v1993
      %v2076 = vadd.f32 %v1848, %v1998
      %v2077 = vadd.f32 %v1849, %v2001
      %v2078 = vadd.f32 %v1850, %v2006
      %v2079 = vadd.f32 %v1851, %v2009
      %v2080 = vadd.f32 %v1852, %v2014
      %v2081 = vadd.f32 %v1853, %v2017
      %v2082 = vadd.f32 %v1854, %v2022
      %v2083 = vadd.f32 %v1855, %v2025
      %v2084 = vadd.f32 %v1856, %v2030
      %v2085 = vadd.f32 %v1857, %v2033
      %v2086 = vadd.f32 %v1858, %v2038
      %v2087 = vadd.f32 %v1859, %v2041
      %v2088 = vadd.f32 %v1860, %v2046
      %v2089 = vadd.f32 %v1861, %v2049
      %v2090 = vadd.f32 %v1862, %v2054
      %v2091 = vadd.f32 %v1863, %v2057
      %vm2108 = vcmask 1042432
      %vm2109 = vcmask 1046532
      %vm2110 = vmor %vm2108, %vm2109
      %v2111 = vrot.slane %v226, 5
      %v2112 = vrot.slane %v2111, 4
      %v2113 = vrot.slane %v227, 5
      %v2114 = vsel %vm2110, %v2112, %v2113
      %v2115 = vrot.slane %v2113, 4
      %v2116 = vrot.slane %v228, 5
      %v2117 = vsel %vm2110, %v2115, %v2116
      %v2118 = vrot.slane %v229, 5
      %v2119 = vrot.slane %v2118, 4
      %v2120 = vrot.slane %v230, 5
      %v2121 = vsel %vm2110, %v2119, %v2120
      %v2122 = vrot.slane %v2120, 4
      %v2123 = vrot.slane %v231, 5
      %v2124 = vsel %vm2110, %v2122, %v2123
      %v2125 = vrot.slane %v232, 5
      %v2126 = vrot.slane %v2125, 4
      %v2127 = vrot.slane %v233, 5
      %v2128 = vsel %vm2110, %v2126, %v2127
      %v2129 = vrot.slane %v2127, 4
      %v2130 = vrot.slane %v234, 5
      %v2131 = vsel %vm2110, %v2129, %v2130
      %v2132 = vrot.slane %v235, 5
      %v2133 = vrot.slane %v2132, 4
      %v2134 = vrot.slane %v236, 5
      %v2135 = vsel %vm2110, %v2133, %v2134
      %v2136 = vrot.slane %v2134, 4
      %v2137 = vrot.slane %v237, 5
      %v2138 = vsel %vm2110, %v2136, %v2137
      %v2139 = vrot.slane %v238, 5
      %v2140 = vrot.slane %v2139, 4
      %v2141 = vrot.slane %v239, 5
      %v2142 = vsel %vm2110, %v2140, %v2141
      %v2143 = vrot.slane %v2141, 4
      %v2144 = vrot.slane %v240, 5
      %v2145 = vsel %vm2110, %v2143, %v2144
      %v2146 = vrot.slane %v241, 5
      %v2147 = vrot.slane %v2146, 4
      %v2148 = vrot.slane %v242, 5
      %v2149 = vsel %vm2110, %v2147, %v2148
      %v2150 = vrot.slane %v2148, 4
      %v2151 = vrot.slane %v243, 5
      %v2152 = vsel %vm2110, %v2150, %v2151
      %v2153 = vrot.slane %v244, 5
      %v2154 = vrot.slane %v2153, 4
      %v2155 = vrot.slane %v245, 5
      %v2156 = vsel %vm2110, %v2154, %v2155
      %v2157 = vrot.slane %v2155, 4
      %v2158 = vrot.slane %v246, 5
      %v2159 = vsel %vm2110, %v2157, %v2158
      %v2160 = vrot.slane %v247, 5
      %v2161 = vrot.slane %v2160, 4
      %v2162 = vrot.slane %v248, 5
      %v2163 = vsel %vm2110, %v2161, %v2162
      %v2164 = vrot.slane %v2162, 4
      %v2165 = vrot.slane %v249, 5
      %v2166 = vsel %vm2110, %v2164, %v2165
      %v2167 = vrot.slane %v250, 5
      %v2168 = vrot.slane %v2167, 4
      %v2169 = vrot.slane %v251, 5
      %v2170 = vsel %vm2110, %v2168, %v2169
      %v2171 = vrot.slane %v2169, 4
      %v2172 = vrot.slane %v252, 5
      %v2173 = vsel %vm2110, %v2171, %v2172
      %v2174 = vrot.slane %v253, 5
      %v2175 = vrot.slane %v2174, 4
      %v2176 = vrot.slane %v254, 5
      %v2177 = vsel %vm2110, %v2175, %v2176
      %v2178 = vrot.slane %v2176, 4
      %v2179 = vrot.slane %v255, 5
      %v2180 = vsel %vm2110, %v2178, %v2179
      %v2181 = vrot.slane %v256, 5
      %v2182 = vrot.slane %v2181, 4
      %v2183 = vrot.slane %v257, 5
      %v2184 = vsel %vm2110, %v2182, %v2183
      %v2185 = vrot.slane %v2183, 4
      %v2186 = vrot.slane %v258, 5
      %v2187 = vsel %vm2110, %v2185, %v2186
      %v2188 = vrot.slane %v259, 5
      %v2189 = vrot.slane %v2188, 4
      %v2190 = vrot.slane %v260, 5
      %v2191 = vsel %vm2110, %v2189, %v2190
      %v2192 = vrot.slane %v2190, 4
      %v2193 = vrot.slane %v261, 5
      %v2194 = vsel %vm2110, %v2192, %v2193
      %v2195 = vrot.slane %v262, 5
      %v2196 = vrot.slane %v2195, 4
      %v2197 = vrot.slane %v263, 5
      %v2198 = vsel %vm2110, %v2196, %v2197
      %v2199 = vrot.slane %v2197, 4
      %v2200 = vrot.slane %v264, 5
      %v2201 = vsel %vm2110, %v2199, %v2200
      %v2202 = vrot.slane %v265, 5
      %v2203 = vrot.slane %v2202, 4
      %v2204 = vrot.slane %v266, 5
      %v2205 = vsel %vm2110, %v2203, %v2204
      %v2206 = vrot.slane %v2204, 4
      %v2207 = vrot.slane %v267, 5
      %v2208 = vsel %vm2110, %v2206, %v2207
      %v2209 = vrot.slane %v268, 5
      %v2210 = vrot.slane %v2209, 4
      %v2211 = vrot.slane %v269, 5
      %v2212 = vsel %vm2110, %v2210, %v2211
      %v2213 = vrot.slane %v2211, 4
      %v2214 = vrot.slane %v270, 5
      %v2215 = vsel %vm2110, %v2213, %v2214
      %v2216 = vrot.slane %v271, 5
      %v2217 = vrot.slane %v2216, 4
      %v2218 = vrot.slane %v272, 5
      %v2219 = vsel %vm2110, %v2217, %v2218
      %v2220 = vrot.slane %v2218, 4
      %v2221 = vrot.slane %v273, 5
      %v2222 = vsel %vm2110, %v2220, %v2221
      %s2223 = scalar_lea.vmem %s1, 4
      %v2224 = vld [vmem:[%s2223] sm:$0x3]
      %v2225 = vunpack.c.l.b16 %v2114
      %v2226 = vunpack.c.l.b16 %v2117
      %v2227 = vunpack.c.l.b16 %v2121
      %v2228 = vunpack.c.l.b16 %v2124
      %v2229 = vunpack.c.l.b16 %v2128
      %v2230 = vunpack.c.l.b16 %v2131
      %v2231 = vunpack.c.l.b16 %v2135
      %v2232 = vunpack.c.l.b16 %v2138
      %v2233 = vunpack.c.l.b16 %v2142
      %v2234 = vunpack.c.l.b16 %v2145
      %v2235 = vunpack.c.l.b16 %v2149
      %v2236 = vunpack.c.l.b16 %v2152
      %v2237 = vunpack.c.l.b16 %v2156
      %v2238 = vunpack.c.l.b16 %v2159
      %v2239 = vunpack.c.l.b16 %v2163
      %v2240 = vunpack.c.l.b16 %v2166
      %v2241 = vunpack.c.l.b16 %v2170
      %v2242 = vunpack.c.l.b16 %v2173
      %v2243 = vunpack.c.l.b16 %v2177
      %v2244 = vunpack.c.l.b16 %v2180
      %v2245 = vunpack.c.l.b16 %v2184
      %v2246 = vunpack.c.l.b16 %v2187
      %v2247 = vunpack.c.l.b16 %v2191
      %v2248 = vunpack.c.l.b16 %v2194
      %v2249 = vunpack.c.l.b16 %v2198
      %v2250 = vunpack.c.l.b16 %v2201
      %v2251 = vunpack.c.l.b16 %v2205
      %v2252 = vunpack.c.l.b16 %v2208
      %v2253 = vunpack.c.l.b16 %v2212
      %v2254 = vunpack.c.l.b16 %v2215
      %v2255 = vunpack.c.l.b16 %v2219
      %v2256 = vunpack.c.l.b16 %v2222
      %v2257 = vpack.c.b16 %v2226, %v2225
      %v2258 = vpack.c.b16 %v2228, %v2227
      %v2259 = vpack.c.b16 %v2230, %v2229
      %v2260 = vpack.c.b16 %v2232, %v2231
      %v2261 = vpack.c.b16 %v2234, %v2233
      %v2262 = vpack.c.b16 %v2236, %v2235
      %v2263 = vpack.c.b16 %v2238, %v2237
      %v2264 = vpack.c.b16 %v2240, %v2239
      %v2265 = vpack.c.b16 %v2242, %v2241
      %v2266 = vpack.c.b16 %v2244, %v2243
      %v2267 = vpack.c.b16 %v2246, %v2245
      %v2268 = vpack.c.b16 %v2248, %v2247
      %v2269 = vpack.c.b16 %v2250, %v2249
      %v2270 = vpack.c.b16 %v2252, %v2251
      %v2271 = vpack.c.b16 %v2254, %v2253
      %v2272 = vpack.c.b16 %v2256, %v2255
      %v2274 = vsel %vm363, %v2257, 0
      %v2277 = vsel %vm363, %v2258, 0
      %v2280 = vsel %vm363, %v2259, 0
      %v2283 = vsel %vm363, %v2260, 0
      %v2286 = vsel %vm363, %v2261, 0
      %v2289 = vsel %vm363, %v2262, 0
      %v2292 = vsel %vm363, %v2263, 0
      %v2295 = vsel %vm363, %v2264, 0
      %v2298 = vsel %vm363, %v2265, 0
      %v2301 = vsel %vm363, %v2266, 0
      %v2304 = vsel %vm363, %v2267, 0
      %v2307 = vsel %vm363, %v2268, 0
      %v2310 = vsel %vm363, %v2269, 0
      %v2313 = vsel %vm363, %v2270, 0
      %v2316 = vsel %vm363, %v2271, 0
      %v2319 = vsel %vm363, %v2272, 0
      %v2322 = vsel %vm412, %v2224, 0
      %2324 = vmatprep.subr.bf16.mxu0 0
      %2325 = vmatpush1.bf16.msra.mxu0 %v2322
      %2326 = vmatprep.subr.bf16.mxu0 0
      %2327 = vmatpush1.bf16.msra.mxu0 0
      %2328 = vmatprep.subr.bf16.mxu0 0
      %2329 = vmatpush1.bf16.msra.mxu0 0
      %2330 = vmatprep.subr.bf16.mxu0 0
      %2331 = vmatpush1.bf16.msra.mxu0 0
      %2332 = vmatprep.subr.bf16.mxu0 0
      %2333 = vmatpush1.bf16.msra.mxu0 0
      %2334 = vmatprep.subr.bf16.mxu0 0
      %2335 = vmatpush1.bf16.msra.mxu0 0
      %2336 = vmatprep.subr.bf16.mxu0 0
      %2337 = vmatpush1.bf16.msra.mxu0 0
      %2338 = vmatprep.subr.bf16.mxu0 0
      %2339 = vmatpush1.bf16.msra.mxu0 0
      %2340 = vmatprep.subr.bf16.mxu0 0
      %2341 = vmatpush1.bf16.msra.mxu0 0
      %2342 = vmatprep.subr.bf16.mxu0 0
      %2343 = vmatpush1.bf16.msra.mxu0 0
      %2344 = vmatprep.subr.bf16.mxu0 0
      %2345 = vmatpush1.bf16.msra.mxu0 0
      %2346 = vmatprep.subr.bf16.mxu0 0
      %2347 = vmatpush1.bf16.msra.mxu0 0
      %2348 = vmatprep.subr.bf16.mxu0 0
      %2349 = vmatpush1.bf16.msra.mxu0 0
      %2350 = vmatprep.subr.bf16.mxu0 0
      %2351 = vmatpush1.bf16.msra.mxu0 0
      %2352 = vmatprep.subr.bf16.mxu0 0
      %2353 = vmatpush1.bf16.msra.mxu0 0
      %2354 = vmatprep.subr.bf16.mxu0 0
      %2355 = vmatpush1.bf16.msra.mxu0 0
      %2356 = vmatprep.mubr.bf16.mxu0 0
      %2357 = vmatmul.mubr.bf16.gmra.mrb[0].mxu0 %v2274
      %v2358 = vpop.f32.mrb[0].mxu0
      %v2359 = vadd.f32 0.0, %v2358
      %v2360 = vpop.f32.mrb[0].mxu0
      %v2361 = vpop.f32.mrb[0].mxu0
      %v2362 = vadd.f32 0.0, %v2361
      %v2363 = vpop.f32.mrb[0].mxu0
      %2364 = vmatprep.mubr.bf16.mxu0 0
      %2365 = vmatmul.mubr.bf16.gmra.mrb[0].mxu0 %v2277
      %v2366 = vpop.f32.mrb[0].mxu0
      %v2367 = vadd.f32 0.0, %v2366
      %v2368 = vpop.f32.mrb[0].mxu0
      %v2369 = vpop.f32.mrb[0].mxu0
      %v2370 = vadd.f32 0.0, %v2369
      %v2371 = vpop.f32.mrb[0].mxu0
      %2372 = vmatprep.mubr.bf16.mxu0 0
      %2373 = vmatmul.mubr.bf16.gmra.mrb[0].mxu0 %v2280
      %v2374 = vpop.f32.mrb[0].mxu0
      %v2375 = vadd.f32 0.0, %v2374
      %v2376 = vpop.f32.mrb[0].mxu0
      %v2377 = vpop.f32.mrb[0].mxu0
      %v2378 = vadd.f32 0.0, %v2377
      %v2379 = vpop.f32.mrb[0].mxu0
      %2380 = vmatprep.mubr.bf16.mxu0 0
      %2381 = vmatmul.mubr.bf16.gmra.mrb[0].mxu0 %v2283
      %v2382 = vpop.f32.mrb[0].mxu0
      %v2383 = vadd.f32 0.0, %v2382
      %v2384 = vpop.f32.mrb[0].mxu0
      %v2385 = vpop.f32.mrb[0].mxu0
      %v2386 = vadd.f32 0.0, %v2385
      %v2387 = vpop.f32.mrb[0].mxu0
      %2388 = vmatprep.mubr.bf16.mxu0 0
      %2389 = vmatmul.mubr.bf16.gmra.mrb[0].mxu0 %v2286
      %v2390 = vpop.f32.mrb[0].mxu0
      %v2391 = vadd.f32 0.0, %v2390
      %v2392 = vpop.f32.mrb[0].mxu0
      %v2393 = vpop.f32.mrb[0].mxu0
      %v2394 = vadd.f32 0.0, %v2393
      %v2395 = vpop.f32.mrb[0].mxu0
      %2396 = vmatprep.mubr.bf16.mxu0 0
      %2397 = vmatmul.mubr.bf16.gmra.mrb[0].mxu0 %v2289
      %v2398 = vpop.f32.mrb[0].mxu0
      %v2399 = vadd.f32 0.0, %v2398
      %v2400 = vpop.f32.mrb[0].mxu0
      %v2401 = vpop.f32.mrb[0].mxu0
      %v2402 = vadd.f32 0.0, %v2401
      %v2403 = vpop.f32.mrb[0].mxu0
      %2404 = vmatprep.mubr.bf16.mxu0 0
      %2405 = vmatmul.mubr.bf16.gmra.mrb[0].mxu0 %v2292
      %v2406 = vpop.f32.mrb[0].mxu0
      %v2407 = vadd.f32 0.0, %v2406
      %v2408 = vpop.f32.mrb[0].mxu0
      %v2409 = vpop.f32.mrb[0].mxu0
      %v2410 = vadd.f32 0.0, %v2409
      %v2411 = vpop.f32.mrb[0].mxu0
      %2412 = vmatprep.mubr.bf16.mxu0 0
      %2413 = vmatmul.mubr.bf16.gmra.mrb[0].mxu0 %v2295
      %v2414 = vpop.f32.mrb[0].mxu0
      %v2415 = vadd.f32 0.0, %v2414
      %v2416 = vpop.f32.mrb[0].mxu0
      %v2417 = vpop.f32.mrb[0].mxu0
      %v2418 = vadd.f32 0.0, %v2417
      %v2419 = vpop.f32.mrb[0].mxu0
      %2420 = vmatprep.mubr.bf16.mxu0 0
      %2421 = vmatmul.mubr.bf16.gmra.mrb[0].mxu0 %v2298
      %v2422 = vpop.f32.mrb[0].mxu0
      %v2423 = vadd.f32 0.0, %v2422
      %v2424 = vpop.f32.mrb[0].mxu0
      %v2425 = vpop.f32.mrb[0].mxu0
      %v2426 = vadd.f32 0.0, %v2425
      %v2427 = vpop.f32.mrb[0].mxu0
      %2428 = vmatprep.mubr.bf16.mxu0 0
      %2429 = vmatmul.mubr.bf16.gmra.mrb[0].mxu0 %v2301
      %v2430 = vpop.f32.mrb[0].mxu0
      %v2431 = vadd.f32 0.0, %v2430
      %v2432 = vpop.f32.mrb[0].mxu0
      %v2433 = vpop.f32.mrb[0].mxu0
      %v2434 = vadd.f32 0.0, %v2433
      %v2435 = vpop.f32.mrb[0].mxu0
      %2436 = vmatprep.mubr.bf16.mxu0 0
      %2437 = vmatmul.mubr.bf16.gmra.mrb[0].mxu0 %v2304
      %v2438 = vpop.f32.mrb[0].mxu0
      %v2439 = vadd.f32 0.0, %v2438
      %v2440 = vpop.f32.mrb[0].mxu0
      %v2441 = vpop.f32.mrb[0].mxu0
      %v2442 = vadd.f32 0.0, %v2441
      %v2443 = vpop.f32.mrb[0].mxu0
      %2444 = vmatprep.mubr.bf16.mxu0 0
      %2445 = vmatmul.mubr.bf16.gmra.mrb[0].mxu0 %v2307
      %v2446 = vpop.f32.mrb[0].mxu0
      %v2447 = vadd.f32 0.0, %v2446
      %v2448 = vpop.f32.mrb[0].mxu0
      %v2449 = vpop.f32.mrb[0].mxu0
      %v2450 = vadd.f32 0.0, %v2449
      %v2451 = vpop.f32.mrb[0].mxu0
      %2452 = vmatprep.mubr.bf16.mxu0 0
      %2453 = vmatmul.mubr.bf16.gmra.mrb[0].mxu0 %v2310
      %v2454 = vpop.f32.mrb[0].mxu0
      %v2455 = vadd.f32 0.0, %v2454
      %v2456 = vpop.f32.mrb[0].mxu0
      %v2457 = vpop.f32.mrb[0].mxu0
      %v2458 = vadd.f32 0.0, %v2457
      %v2459 = vpop.f32.mrb[0].mxu0
      %2460 = vmatprep.mubr.bf16.mxu0 0
      %2461 = vmatmul.mubr.bf16.gmra.mrb[0].mxu0 %v2313
      %v2462 = vpop.f32.mrb[0].mxu0
      %v2463 = vadd.f32 0.0, %v2462
      %v2464 = vpop.f32.mrb[0].mxu0
      %v2465 = vpop.f32.mrb[0].mxu0
      %v2466 = vadd.f32 0.0, %v2465
      %v2467 = vpop.f32.mrb[0].mxu0
      %2468 = vmatprep.mubr.bf16.mxu0 0
      %2469 = vmatmul.mubr.bf16.gmra.mrb[0].mxu0 %v2316
      %v2470 = vpop.f32.mrb[0].mxu0
      %v2471 = vadd.f32 0.0, %v2470
      %v2472 = vpop.f32.mrb[0].mxu0
      %v2473 = vpop.f32.mrb[0].mxu0
      %v2474 = vadd.f32 0.0, %v2473
      %v2475 = vpop.f32.mrb[0].mxu0
      %2476 = vmatprep.mubr.bf16.mxu0 0
      %2477 = vmatmul.mubr.bf16.gmra.mrb[0].mxu0 %v2319
      %v2478 = vpop.f32.mrb[0].mxu0
      %v2479 = vadd.f32 0.0, %v2478
      %v2480 = vpop.f32.mrb[0].mxu0
      %v2481 = vpop.f32.mrb[0].mxu0
      %v2482 = vadd.f32 0.0, %v2481
      %v2483 = vpop.f32.mrb[0].mxu0
      %2484 = vdwg.mxu0
      %v2485 = vadd.f32 %v2060, %v2359
      %v2486 = vadd.f32 %v2061, %v2362
      %v2487 = vadd.f32 %v2062, %v2367
      %v2488 = vadd.f32 %v2063, %v2370
      %v2489 = vadd.f32 %v2064, %v2375
      %v2490 = vadd.f32 %v2065, %v2378
      %v2491 = vadd.f32 %v2066, %v2383
      %v2492 = vadd.f32 %v2067, %v2386
      %v2493 = vadd.f32 %v2068, %v2391
      %v2494 = vadd.f32 %v2069, %v2394
      %v2495 = vadd.f32 %v2070, %v2399
      %v2496 = vadd.f32 %v2071, %v2402
      %v2497 = vadd.f32 %v2072, %v2407
      %v2498 = vadd.f32 %v2073, %v2410
      %v2499 = vadd.f32 %v2074, %v2415
      %v2500 = vadd.f32 %v2075, %v2418
      %v2501 = vadd.f32 %v2076, %v2423
      %v2502 = vadd.f32 %v2077, %v2426
      %v2503 = vadd.f32 %v2078, %v2431
      %v2504 = vadd.f32 %v2079, %v2434
      %v2505 = vadd.f32 %v2080, %v2439
      %v2506 = vadd.f32 %v2081, %v2442
      %v2507 = vadd.f32 %v2082, %v2447
      %v2508 = vadd.f32 %v2083, %v2450
      %v2509 = vadd.f32 %v2084, %v2455
      %v2510 = vadd.f32 %v2085, %v2458
      %v2511 = vadd.f32 %v2086, %v2463
      %v2512 = vadd.f32 %v2087, %v2466
      %v2513 = vadd.f32 %v2088, %v2471
      %v2514 = vadd.f32 %v2089, %v2474
      %v2515 = vadd.f32 %v2090, %v2479
      %v2516 = vadd.f32 %v2091, %v2482
      %v2518 = vrot.slane %v274, 5
      %v2519 = vrot.slane %v2518, 4
      %v2520 = vrot.slane %v275, 5
      %v2521 = vsel %vm2110, %v2519, %v2520
      %v2522 = vrot.slane %v2520, 4
      %v2523 = vrot.slane %v276, 5
      %v2524 = vsel %vm2110, %v2522, %v2523
      %s2525 = scalar_lea.vmem %s1, 10
      %v2526 = vld [vmem:[%s2525] sm:$0x3]
      %v2527 = vunpack.c.l.b16 %v2521
      %v2528 = vunpack.c.l.b16 %v2524
      %v2529 = vpack.c.b16 %v2528, %v2527
      %v2531 = vsel %vm363, %v2529, 0
      %v2534 = vsel %vm412, %v2526, 0
      %2536 = vmatprep.subr.bf16.mxu0 0
      %2537 = vmatpush1.bf16.msra.mxu0 %v2534
      %2538 = vmatprep.subr.bf16.mxu0 0
      %2539 = vmatpush1.bf16.msra.mxu0 0
      %2540 = vmatprep.subr.bf16.mxu0 0
      %2541 = vmatpush1.bf16.msra.mxu0 0
      %2542 = vmatprep.subr.bf16.mxu0 0
      %2543 = vmatpush1.bf16.msra.mxu0 0
      %2544 = vmatprep.subr.bf16.mxu0 0
      %2545 = vmatpush1.bf16.msra.mxu0 0
      %2546 = vmatprep.subr.bf16.mxu0 0
      %2547 = vmatpush1.bf16.msra.mxu0 0
      %2548 = vmatprep.subr.bf16.mxu0 0
      %2549 = vmatpush1.bf16.msra.mxu0 0
      %2550 = vmatprep.subr.bf16.mxu0 0
      %2551 = vmatpush1.bf16.msra.mxu0 0
      %2552 = vmatprep.subr.bf16.mxu0 0
      %2553 = vmatpush1.bf16.msra.mxu0 0
      %2554 = vmatprep.subr.bf16.mxu0 0
      %2555 = vmatpush1.bf16.msra.mxu0 0
      %2556 = vmatprep.subr.bf16.mxu0 0
      %2557 = vmatpush1.bf16.msra.mxu0 0
      %2558 = vmatprep.subr.bf16.mxu0 0
      %2559 = vmatpush1.bf16.msra.mxu0 0
      %2560 = vmatprep.subr.bf16.mxu0 0
      %2561 = vmatpush1.bf16.msra.mxu0 0
      %2562 = vmatprep.subr.bf16.mxu0 0
      %2563 = vmatpush1.bf16.msra.mxu0 0
      %2564 = vmatprep.subr.bf16.mxu0 0
      %2565 = vmatpush1.bf16.msra.mxu0 0
      %2566 = vmatprep.subr.bf16.mxu0 0
      %2567 = vmatpush1.bf16.msra.mxu0 0
      %2568 = vmatprep.mubr.bf16.mxu0 0
      %2569 = vmatmul.mubr.bf16.gmra.mrb[0].mxu0 %v2277
      %v2570 = vpop.f32.mrb[0].mxu0
      %v2571 = vadd.f32 0.0, %v2570
      %v2572 = vpop.f32.mrb[0].mxu0
      %v2573 = vpop.f32.mrb[0].mxu0
      %v2574 = vadd.f32 0.0, %v2573
      %v2575 = vpop.f32.mrb[0].mxu0
      %2576 = vmatprep.mubr.bf16.mxu0 0
      %2577 = vmatmul.mubr.bf16.gmra.mrb[0].mxu0 %v2280
      %v2578 = vpop.f32.mrb[0].mxu0
      %v2579 = vadd.f32 0.0, %v2578
      %v2580 = vpop.f32.mrb[0].mxu0
      %v2581 = vpop.f32.mrb[0].mxu0
      %v2582 = vadd.f32 0.0, %v2581
      %v2583 = vpop.f32.mrb[0].mxu0
      %2584 = vmatprep.mubr.bf16.mxu0 0
      %2585 = vmatmul.mubr.bf16.gmra.mrb[0].mxu0 %v2283
      %v2586 = vpop.f32.mrb[0].mxu0
      %v2587 = vadd.f32 0.0, %v2586
      %v2588 = vpop.f32.mrb[0].mxu0
      %v2589 = vpop.f32.mrb[0].mxu0
      %v2590 = vadd.f32 0.0, %v2589
      %v2591 = vpop.f32.mrb[0].mxu0
      %2592 = vmatprep.mubr.bf16.mxu0 0
      %2593 = vmatmul.mubr.bf16.gmra.mrb[0].mxu0 %v2286
      %v2594 = vpop.f32.mrb[0].mxu0
      %v2595 = vadd.f32 0.0, %v2594
      %v2596 = vpop.f32.mrb[0].mxu0
      %v2597 = vpop.f32.mrb[0].mxu0
      %v2598 = vadd.f32 0.0, %v2597
      %v2599 = vpop.f32.mrb[0].mxu0
      %2600 = vmatprep.mubr.bf16.mxu0 0
      %2601 = vmatmul.mubr.bf16.gmra.mrb[0].mxu0 %v2289
      %v2602 = vpop.f32.mrb[0].mxu0
      %v2603 = vadd.f32 0.0, %v2602
      %v2604 = vpop.f32.mrb[0].mxu0
      %v2605 = vpop.f32.mrb[0].mxu0
      %v2606 = vadd.f32 0.0, %v2605
      %v2607 = vpop.f32.mrb[0].mxu0
      %2608 = vmatprep.mubr.bf16.mxu0 0
      %2609 = vmatmul.mubr.bf16.gmra.mrb[0].mxu0 %v2292
      %v2610 = vpop.f32.mrb[0].mxu0
      %v2611 = vadd.f32 0.0, %v2610
      %v2612 = vpop.f32.mrb[0].mxu0
      %v2613 = vpop.f32.mrb[0].mxu0
      %v2614 = vadd.f32 0.0, %v2613
      %v2615 = vpop.f32.mrb[0].mxu0
      %2616 = vmatprep.mubr.bf16.mxu0 0
      %2617 = vmatmul.mubr.bf16.gmra.mrb[0].mxu0 %v2295
      %v2618 = vpop.f32.mrb[0].mxu0
      %v2619 = vadd.f32 0.0, %v2618
      %v2620 = vpop.f32.mrb[0].mxu0
      %v2621 = vpop.f32.mrb[0].mxu0
      %v2622 = vadd.f32 0.0, %v2621
      %v2623 = vpop.f32.mrb[0].mxu0
      %2624 = vmatprep.mubr.bf16.mxu0 0
      %2625 = vmatmul.mubr.bf16.gmra.mrb[0].mxu0 %v2298
      %v2626 = vpop.f32.mrb[0].mxu0
      %v2627 = vadd.f32 0.0, %v2626
      %v2628 = vpop.f32.mrb[0].mxu0
      %v2629 = vpop.f32.mrb[0].mxu0
      %v2630 = vadd.f32 0.0, %v2629
      %v2631 = vpop.f32.mrb[0].mxu0
      %2632 = vmatprep.mubr.bf16.mxu0 0
      %2633 = vmatmul.mubr.bf16.gmra.mrb[0].mxu0 %v2301
      %v2634 = vpop.f32.mrb[0].mxu0
      %v2635 = vadd.f32 0.0, %v2634
      %v2636 = vpop.f32.mrb[0].mxu0
      %v2637 = vpop.f32.mrb[0].mxu0
      %v2638 = vadd.f32 0.0, %v2637
      %v2639 = vpop.f32.mrb[0].mxu0
      %2640 = vmatprep.mubr.bf16.mxu0 0
      %2641 = vmatmul.mubr.bf16.gmra.mrb[0].mxu0 %v2304
      %v2642 = vpop.f32.mrb[0].mxu0
      %v2643 = vadd.f32 0.0, %v2642
      %v2644 = vpop.f32.mrb[0].mxu0
      %v2645 = vpop.f32.mrb[0].mxu0
      %v2646 = vadd.f32 0.0, %v2645
      %v2647 = vpop.f32.mrb[0].mxu0
      %2648 = vmatprep.mubr.bf16.mxu0 0
      %2649 = vmatmul.mubr.bf16.gmra.mrb[0].mxu0 %v2307
      %v2650 = vpop.f32.mrb[0].mxu0
      %v2651 = vadd.f32 0.0, %v2650
      %v2652 = vpop.f32.mrb[0].mxu0
      %v2653 = vpop.f32.mrb[0].mxu0
      %v2654 = vadd.f32 0.0, %v2653
      %v2655 = vpop.f32.mrb[0].mxu0
      %2656 = vmatprep.mubr.bf16.mxu0 0
      %2657 = vmatmul.mubr.bf16.gmra.mrb[0].mxu0 %v2310
      %v2658 = vpop.f32.mrb[0].mxu0
      %v2659 = vadd.f32 0.0, %v2658
      %v2660 = vpop.f32.mrb[0].mxu0
      %v2661 = vpop.f32.mrb[0].mxu0
      %v2662 = vadd.f32 0.0, %v2661
      %v2663 = vpop.f32.mrb[0].mxu0
      %2664 = vmatprep.mubr.bf16.mxu0 0
      %2665 = vmatmul.mubr.bf16.gmra.mrb[0].mxu0 %v2313
      %v2666 = vpop.f32.mrb[0].mxu0
      %v2667 = vadd.f32 0.0, %v2666
      %v2668 = vpop.f32.mrb[0].mxu0
      %v2669 = vpop.f32.mrb[0].mxu0
      %v2670 = vadd.f32 0.0, %v2669
      %v2671 = vpop.f32.mrb[0].mxu0
      %2672 = vmatprep.mubr.bf16.mxu0 0
      %2673 = vmatmul.mubr.bf16.gmra.mrb[0].mxu0 %v2316
      %v2674 = vpop.f32.mrb[0].mxu0
      %v2675 = vadd.f32 0.0, %v2674
      %v2676 = vpop.f32.mrb[0].mxu0
      %v2677 = vpop.f32.mrb[0].mxu0
      %v2678 = vadd.f32 0.0, %v2677
      %v2679 = vpop.f32.mrb[0].mxu0
      %2680 = vmatprep.mubr.bf16.mxu0 0
      %2681 = vmatmul.mubr.bf16.gmra.mrb[0].mxu0 %v2319
      %v2682 = vpop.f32.mrb[0].mxu0
      %v2683 = vadd.f32 0.0, %v2682
      %v2684 = vpop.f32.mrb[0].mxu0
      %v2685 = vpop.f32.mrb[0].mxu0
      %v2686 = vadd.f32 0.0, %v2685
      %v2687 = vpop.f32.mrb[0].mxu0
      %2688 = vmatprep.mubr.bf16.mxu0 0
      %2689 = vmatmul.mubr.bf16.gmra.mrb[0].mxu0 %v2531
      %v2690 = vpop.f32.mrb[0].mxu0
      %v2691 = vadd.f32 0.0, %v2690
      %v2692 = vpop.f32.mrb[0].mxu0
      %v2693 = vpop.f32.mrb[0].mxu0
      %v2694 = vadd.f32 0.0, %v2693
      %v2695 = vpop.f32.mrb[0].mxu0
      %2696 = vdwg.mxu0
      %v2697 = vadd.f32 %v2485, %v2571
      %v2698 = vadd.f32 %v2486, %v2574
      %v2699 = vadd.f32 %v2487, %v2579
      %v2700 = vadd.f32 %v2488, %v2582
      %v2701 = vadd.f32 %v2489, %v2587
      %v2702 = vadd.f32 %v2490, %v2590
      %v2703 = vadd.f32 %v2491, %v2595
      %v2704 = vadd.f32 %v2492, %v2598
      %v2705 = vadd.f32 %v2493, %v2603
      %v2706 = vadd.f32 %v2494, %v2606
      %v2707 = vadd.f32 %v2495, %v2611
      %v2708 = vadd.f32 %v2496, %v2614
      %v2709 = vadd.f32 %v2497, %v2619
      %v2710 = vadd.f32 %v2498, %v2622
      %v2711 = vadd.f32 %v2499, %v2627
      %v2712 = vadd.f32 %v2500, %v2630
      %v2713 = vadd.f32 %v2501, %v2635
      %v2714 = vadd.f32 %v2502, %v2638
      %v2715 = vadd.f32 %v2503, %v2643
      %v2716 = vadd.f32 %v2504, %v2646
      %v2717 = vadd.f32 %v2505, %v2651
      %v2718 = vadd.f32 %v2506, %v2654
      %v2719 = vadd.f32 %v2507, %v2659
      %v2720 = vadd.f32 %v2508, %v2662
      %v2721 = vadd.f32 %v2509, %v2667
      %v2722 = vadd.f32 %v2510, %v2670
      %v2723 = vadd.f32 %v2511, %v2675
      %v2724 = vadd.f32 %v2512, %v2678
      %v2725 = vadd.f32 %v2513, %v2683
      %v2726 = vadd.f32 %v2514, %v2686
      %v2727 = vadd.f32 %v2515, %v2691
      %v2728 = vadd.f32 %v2516, %v2694
      %v2730 = vrot.slane %v277, 5
      %v2731 = vrot.slane %v2730, 4
      %v2732 = vrot.slane %v278, 5
      %v2733 = vsel %vm2110, %v2731, %v2732
      %v2734 = vrot.slane %v2732, 4
      %v2735 = vrot.slane %v279, 5
      %v2736 = vsel %vm2110, %v2734, %v2735
      %s2737 = scalar_lea.vmem %s1, 16
      %v2738 = vld [vmem:[%s2737] sm:$0x3]
      %v2739 = vunpack.c.l.b16 %v2733
      %v2740 = vunpack.c.l.b16 %v2736
      %v2741 = vpack.c.b16 %v2740, %v2739
      %v2743 = vsel %vm363, %v2741, 0
      %v2746 = vsel %vm412, %v2738, 0
      %2748 = vmatprep.subr.bf16.mxu0 0
      %2749 = vmatpush1.bf16.msra.mxu0 %v2746
      %2750 = vmatprep.subr.bf16.mxu0 0
      %2751 = vmatpush1.bf16.msra.mxu0 0
      %2752 = vmatprep.subr.bf16.mxu0 0
      %2753 = vmatpush1.bf16.msra.mxu0 0
      %2754 = vmatprep.subr.bf16.mxu0 0
      %2755 = vmatpush1.bf16.msra.mxu0 0
      %2756 = vmatprep.subr.bf16.mxu0 0
      %2757 = vmatpush1.bf16.msra.mxu0 0
      %2758 = vmatprep.subr.bf16.mxu0 0
      %2759 = vmatpush1.bf16.msra.mxu0 0
      %2760 = vmatprep.subr.bf16.mxu0 0
      %2761 = vmatpush1.bf16.msra.mxu0 0
      %2762 = vmatprep.subr.bf16.mxu0 0
      %2763 = vmatpush1.bf16.msra.mxu0 0
      %2764 = vmatprep.subr.bf16.mxu0 0
      %2765 = vmatpush1.bf16.msra.mxu0 0
      %2766 = vmatprep.subr.bf16.mxu0 0
      %2767 = vmatpush1.bf16.msra.mxu0 0
      %2768 = vmatprep.subr.bf16.mxu0 0
      %2769 = vmatpush1.bf16.msra.mxu0 0
      %2770 = vmatprep.subr.bf16.mxu0 0
      %2771 = vmatpush1.bf16.msra.mxu0 0
      %2772 = vmatprep.subr.bf16.mxu0 0
      %2773 = vmatpush1.bf16.msra.mxu0 0
      %2774 = vmatprep.subr.bf16.mxu0 0
      %2775 = vmatpush1.bf16.msra.mxu0 0
      %2776 = vmatprep.subr.bf16.mxu0 0
      %2777 = vmatpush1.bf16.msra.mxu0 0
      %2778 = vmatprep.subr.bf16.mxu0 0
      %2779 = vmatpush1.bf16.msra.mxu0 0
      %2780 = vmatprep.mubr.bf16.mxu0 0
      %2781 = vmatmul.mubr.bf16.gmra.mrb[0].mxu0 %v2280
      %v2782 = vpop.f32.mrb[0].mxu0
      %v2783 = vadd.f32 0.0, %v2782
      %v2784 = vpop.f32.mrb[0].mxu0
      %v2785 = vpop.f32.mrb[0].mxu0
      %v2786 = vadd.f32 0.0, %v2785
      %v2787 = vpop.f32.mrb[0].mxu0
      %2788 = vmatprep.mubr.bf16.mxu0 0
      %2789 = vmatmul.mubr.bf16.gmra.mrb[0].mxu0 %v2283
      %v2790 = vpop.f32.mrb[0].mxu0
      %v2791 = vadd.f32 0.0, %v2790
      %v2792 = vpop.f32.mrb[0].mxu0
      %v2793 = vpop.f32.mrb[0].mxu0
      %v2794 = vadd.f32 0.0, %v2793
      %v2795 = vpop.f32.mrb[0].mxu0
      %2796 = vmatprep.mubr.bf16.mxu0 0
      %2797 = vmatmul.mubr.bf16.gmra.mrb[0].mxu0 %v2286
      %v2798 = vpop.f32.mrb[0].mxu0
      %v2799 = vadd.f32 0.0, %v2798
      %v2800 = vpop.f32.mrb[0].mxu0
      %v2801 = vpop.f32.mrb[0].mxu0
      %v2802 = vadd.f32 0.0, %v2801
      %v2803 = vpop.f32.mrb[0].mxu0
      %2804 = vmatprep.mubr.bf16.mxu0 0
      %2805 = vmatmul.mubr.bf16.gmra.mrb[0].mxu0 %v2289
      %v2806 = vpop.f32.mrb[0].mxu0
      %v2807 = vadd.f32 0.0, %v2806
      %v2808 = vpop.f32.mrb[0].mxu0
      %v2809 = vpop.f32.mrb[0].mxu0
      %v2810 = vadd.f32 0.0, %v2809
      %v2811 = vpop.f32.mrb[0].mxu0
      %2812 = vmatprep.mubr.bf16.mxu0 0
      %2813 = vmatmul.mubr.bf16.gmra.mrb[0].mxu0 %v2292
      %v2814 = vpop.f32.mrb[0].mxu0
      %v2815 = vadd.f32 0.0, %v2814
      %v2816 = vpop.f32.mrb[0].mxu0
      %v2817 = vpop.f32.mrb[0].mxu0
      %v2818 = vadd.f32 0.0, %v2817
      %v2819 = vpop.f32.mrb[0].mxu0
      %2820 = vmatprep.mubr.bf16.mxu0 0
      %2821 = vmatmul.mubr.bf16.gmra.mrb[0].mxu0 %v2295
      %v2822 = vpop.f32.mrb[0].mxu0
      %v2823 = vadd.f32 0.0, %v2822
      %v2824 = vpop.f32.mrb[0].mxu0
      %v2825 = vpop.f32.mrb[0].mxu0
      %v2826 = vadd.f32 0.0, %v2825
      %v2827 = vpop.f32.mrb[0].mxu0
      %2828 = vmatprep.mubr.bf16.mxu0 0
      %2829 = vmatmul.mubr.bf16.gmra.mrb[0].mxu0 %v2298
      %v2830 = vpop.f32.mrb[0].mxu0
      %v2831 = vadd.f32 0.0, %v2830
      %v2832 = vpop.f32.mrb[0].mxu0
      %v2833 = vpop.f32.mrb[0].mxu0
      %v2834 = vadd.f32 0.0, %v2833
      %v2835 = vpop.f32.mrb[0].mxu0
      %2836 = vmatprep.mubr.bf16.mxu0 0
      %2837 = vmatmul.mubr.bf16.gmra.mrb[0].mxu0 %v2301
      %v2838 = vpop.f32.mrb[0].mxu0
      %v2839 = vadd.f32 0.0, %v2838
      %v2840 = vpop.f32.mrb[0].mxu0
      %v2841 = vpop.f32.mrb[0].mxu0
      %v2842 = vadd.f32 0.0, %v2841
      %v2843 = vpop.f32.mrb[0].mxu0
      %2844 = vmatprep.mubr.bf16.mxu0 0
      %2845 = vmatmul.mubr.bf16.gmra.mrb[0].mxu0 %v2304
      %v2846 = vpop.f32.mrb[0].mxu0
      %v2847 = vadd.f32 0.0, %v2846
      %v2848 = vpop.f32.mrb[0].mxu0
      %v2849 = vpop.f32.mrb[0].mxu0
      %v2850 = vadd.f32 0.0, %v2849
      %v2851 = vpop.f32.mrb[0].mxu0
      %2852 = vmatprep.mubr.bf16.mxu0 0
      %2853 = vmatmul.mubr.bf16.gmra.mrb[0].mxu0 %v2307
      %v2854 = vpop.f32.mrb[0].mxu0
      %v2855 = vadd.f32 0.0, %v2854
      %v2856 = vpop.f32.mrb[0].mxu0
      %v2857 = vpop.f32.mrb[0].mxu0
      %v2858 = vadd.f32 0.0, %v2857
      %v2859 = vpop.f32.mrb[0].mxu0
      %2860 = vmatprep.mubr.bf16.mxu0 0
      %2861 = vmatmul.mubr.bf16.gmra.mrb[0].mxu0 %v2310
      %v2862 = vpop.f32.mrb[0].mxu0
      %v2863 = vadd.f32 0.0, %v2862
      %v2864 = vpop.f32.mrb[0].mxu0
      %v2865 = vpop.f32.mrb[0].mxu0
      %v2866 = vadd.f32 0.0, %v2865
      %v2867 = vpop.f32.mrb[0].mxu0
      %2868 = vmatprep.mubr.bf16.mxu0 0
      %2869 = vmatmul.mubr.bf16.gmra.mrb[0].mxu0 %v2313
      %v2870 = vpop.f32.mrb[0].mxu0
      %v2871 = vadd.f32 0.0, %v2870
      %v2872 = vpop.f32.mrb[0].mxu0
      %v2873 = vpop.f32.mrb[0].mxu0
      %v2874 = vadd.f32 0.0, %v2873
      %v2875 = vpop.f32.mrb[0].mxu0
      %2876 = vmatprep.mubr.bf16.mxu0 0
      %2877 = vmatmul.mubr.bf16.gmra.mrb[0].mxu0 %v2316
      %v2878 = vpop.f32.mrb[0].mxu0
      %v2879 = vadd.f32 0.0, %v2878
      %v2880 = vpop.f32.mrb[0].mxu0
      %v2881 = vpop.f32.mrb[0].mxu0
      %v2882 = vadd.f32 0.0, %v2881
      %v2883 = vpop.f32.mrb[0].mxu0
      %2884 = vmatprep.mubr.bf16.mxu0 0
      %2885 = vmatmul.mubr.bf16.gmra.mrb[0].mxu0 %v2319
      %v2886 = vpop.f32.mrb[0].mxu0
      %v2887 = vadd.f32 0.0, %v2886
      %v2888 = vpop.f32.mrb[0].mxu0
      %v2889 = vpop.f32.mrb[0].mxu0
      %v2890 = vadd.f32 0.0, %v2889
      %v2891 = vpop.f32.mrb[0].mxu0
      %2892 = vmatprep.mubr.bf16.mxu0 0
      %2893 = vmatmul.mubr.bf16.gmra.mrb[0].mxu0 %v2531
      %v2894 = vpop.f32.mrb[0].mxu0
      %v2895 = vadd.f32 0.0, %v2894
      %v2896 = vpop.f32.mrb[0].mxu0
      %v2897 = vpop.f32.mrb[0].mxu0
      %v2898 = vadd.f32 0.0, %v2897
      %v2899 = vpop.f32.mrb[0].mxu0
      %2900 = vmatprep.mubr.bf16.mxu0 0
      %2901 = vmatmul.mubr.bf16.gmra.mrb[0].mxu0 %v2743
      %v2902 = vpop.f32.mrb[0].mxu0
      %v2903 = vadd.f32 0.0, %v2902
      %v2904 = vpop.f32.mrb[0].mxu0
      %v2905 = vpop.f32.mrb[0].mxu0
      %v2906 = vadd.f32 0.0, %v2905
      %v2907 = vpop.f32.mrb[0].mxu0
      %2908 = vdwg.mxu0
      %v2909 = vadd.f32 %v2697, %v2783
      %v2910 = vadd.f32 %v2698, %v2786
      %v2911 = vadd.f32 %v2699, %v2791
      %v2912 = vadd.f32 %v2700, %v2794
      %v2913 = vadd.f32 %v2701, %v2799
      %v2914 = vadd.f32 %v2702, %v2802
      %v2915 = vadd.f32 %v2703, %v2807
      %v2916 = vadd.f32 %v2704, %v2810
      %v2917 = vadd.f32 %v2705, %v2815
      %v2918 = vadd.f32 %v2706, %v2818
      %v2919 = vadd.f32 %v2707, %v2823
      %v2920 = vadd.f32 %v2708, %v2826
      %v2921 = vadd.f32 %v2709, %v2831
      %v2922 = vadd.f32 %v2710, %v2834
      %v2923 = vadd.f32 %v2711, %v2839
      %v2924 = vadd.f32 %v2712, %v2842
      %v2925 = vadd.f32 %v2713, %v2847
      %v2926 = vadd.f32 %v2714, %v2850
      %v2927 = vadd.f32 %v2715, %v2855
      %v2928 = vadd.f32 %v2716, %v2858
      %v2929 = vadd.f32 %v2717, %v2863
      %v2930 = vadd.f32 %v2718, %v2866
      %v2931 = vadd.f32 %v2719, %v2871
      %v2932 = vadd.f32 %v2720, %v2874
      %v2933 = vadd.f32 %v2721, %v2879
      %v2934 = vadd.f32 %v2722, %v2882
      %v2935 = vadd.f32 %v2723, %v2887
      %v2936 = vadd.f32 %v2724, %v2890
      %v2937 = vadd.f32 %v2725, %v2895
      %v2938 = vadd.f32 %v2726, %v2898
      %v2939 = vadd.f32 %v2727, %v2903
      %v2940 = vadd.f32 %v2728, %v2906
      %v2941 = vld [vmem:[%s2] sm:$0x1]
      %v2943 = vlaneseq
      %v2944 = vshrl.u32 %v2943, 7
      %v2945 = vsub.s32 0, %v2944
      %v2946 = vrot.slane %v2941, %v2945
      %v2948 = vadd.f32 %v2909, %v2946
      %v2949 = vadd.f32 %v2910, %v2946
      %v2950 = vadd.f32 %v2911, %v2946
      %v2951 = vadd.f32 %v2912, %v2946
      %v2952 = vadd.f32 %v2913, %v2946
      %v2953 = vadd.f32 %v2914, %v2946
      %v2954 = vadd.f32 %v2915, %v2946
      %v2955 = vadd.f32 %v2916, %v2946
      %v2956 = vadd.f32 %v2917, %v2946
      %v2957 = vadd.f32 %v2918, %v2946
      %v2958 = vadd.f32 %v2919, %v2946
      %v2959 = vadd.f32 %v2920, %v2946
      %v2960 = vadd.f32 %v2921, %v2946
      %v2961 = vadd.f32 %v2922, %v2946
      %v2962 = vadd.f32 %v2923, %v2946
      %v2963 = vadd.f32 %v2924, %v2946
      %v2964 = vadd.f32 %v2925, %v2946
      %v2965 = vadd.f32 %v2926, %v2946
      %v2966 = vadd.f32 %v2927, %v2946
      %v2967 = vadd.f32 %v2928, %v2946
      %v2968 = vadd.f32 %v2929, %v2946
      %v2969 = vadd.f32 %v2930, %v2946
      %v2970 = vadd.f32 %v2931, %v2946
      %v2971 = vadd.f32 %v2932, %v2946
      %v2972 = vadd.f32 %v2933, %v2946
      %v2973 = vadd.f32 %v2934, %v2946
      %v2974 = vadd.f32 %v2935, %v2946
      %v2975 = vadd.f32 %v2936, %v2946
      %v2976 = vadd.f32 %v2937, %v2946
      %v2977 = vadd.f32 %v2938, %v2946
      %v2978 = vadd.f32 %v2939, %v2946
      %v2979 = vadd.f32 %v2940, %v2946
      %v2980 = vmax.f32 %v2948, 0.0
      %v2981 = vmax.f32 %v2949, 0.0
      %v2982 = vmax.f32 %v2950, 0.0
      %v2983 = vmax.f32 %v2951, 0.0
      %v2984 = vmax.f32 %v2952, 0.0
      %v2985 = vmax.f32 %v2953, 0.0
      %v2986 = vmax.f32 %v2954, 0.0
      %v2987 = vmax.f32 %v2955, 0.0
      %v2988 = vmax.f32 %v2956, 0.0
      %v2989 = vmax.f32 %v2957, 0.0
      %v2990 = vmax.f32 %v2958, 0.0
      %v2991 = vmax.f32 %v2959, 0.0
      %v2992 = vmax.f32 %v2960, 0.0
      %v2993 = vmax.f32 %v2961, 0.0
      %v2994 = vmax.f32 %v2962, 0.0
      %v2995 = vmax.f32 %v2963, 0.0
      %v2996 = vmax.f32 %v2964, 0.0
      %v2997 = vmax.f32 %v2965, 0.0
      %v2998 = vmax.f32 %v2966, 0.0
      %v2999 = vmax.f32 %v2967, 0.0
      %v3000 = vmax.f32 %v2968, 0.0
      %v3001 = vmax.f32 %v2969, 0.0
      %v3002 = vmax.f32 %v2970, 0.0
      %v3003 = vmax.f32 %v2971, 0.0
      %v3004 = vmax.f32 %v2972, 0.0
      %v3005 = vmax.f32 %v2973, 0.0
      %v3006 = vmax.f32 %v2974, 0.0
      %v3007 = vmax.f32 %v2975, 0.0
      %v3008 = vmax.f32 %v2976, 0.0
      %v3009 = vmax.f32 %v2977, 0.0
      %v3010 = vmax.f32 %v2978, 0.0
      %v3011 = vmax.f32 %v2979, 0.0
      %v3012 = vpack.c.bf16 %v2981, %v2980
      %v3013 = vpack.c.bf16 %v2983, %v2982
      %v3014 = vpack.c.bf16 %v2985, %v2984
      %v3015 = vpack.c.bf16 %v2987, %v2986
      %v3016 = vpack.c.bf16 %v2989, %v2988
      %v3017 = vpack.c.bf16 %v2991, %v2990
      %v3018 = vpack.c.bf16 %v2993, %v2992
      %v3019 = vpack.c.bf16 %v2995, %v2994
      %v3020 = vpack.c.bf16 %v2997, %v2996
      %v3021 = vpack.c.bf16 %v2999, %v2998
      %v3022 = vpack.c.bf16 %v3001, %v3000
      %v3023 = vpack.c.bf16 %v3003, %v3002
      %v3024 = vpack.c.bf16 %v3005, %v3004
      %v3025 = vpack.c.bf16 %v3007, %v3006
      %v3026 = vpack.c.bf16 %v3009, %v3008
      %v3027 = vpack.c.bf16 %v3011, %v3010
      %v3028 = vld [vmem:[%s3] sm:$0x3]
      %v3029 = vld [vmem:[%s4] sm:$0x1]
      %v3031 = vlaneseq
      %v3032 = vshrl.u32 %v3031, 7
      %v3033 = vsub.s32 0, %v3032
      %v3034 = vrot.slane %v3029, %v3033
      %v3037 = vsel %vm363, %v3012, 0
      %v3040 = vsel %vm363, %v3013, 0
      %v3043 = vsel %vm363, %v3014, 0
      %v3046 = vsel %vm363, %v3015, 0
      %v3049 = vsel %vm363, %v3016, 0
      %v3052 = vsel %vm363, %v3017, 0
      %v3055 = vsel %vm363, %v3018, 0
      %v3058 = vsel %vm363, %v3019, 0
      %v3061 = vsel %vm363, %v3020, 0
      %v3064 = vsel %vm363, %v3021, 0
      %v3067 = vsel %vm363, %v3022, 0
      %v3070 = vsel %vm363, %v3023, 0
      %v3073 = vsel %vm363, %v3024, 0
      %v3076 = vsel %vm363, %v3025, 0
      %v3079 = vsel %vm363, %v3026, 0
      %v3082 = vsel %vm363, %v3027, 0
      %v3085 = vsel %vm412, %v3028, 0
      %3087 = vmatprep.subr.bf16.mxu0 0
      %3088 = vmatpush1.bf16.msra.mxu0 %v3085
      %3089 = vmatprep.subr.bf16.mxu0 0
      %3090 = vmatpush1.bf16.msra.mxu0 0
      %3091 = vmatprep.subr.bf16.mxu0 0
      %3092 = vmatpush1.bf16.msra.mxu0 0
      %3093 = vmatprep.subr.bf16.mxu0 0
      %3094 = vmatpush1.bf16.msra.mxu0 0
      %3095 = vmatprep.subr.bf16.mxu0 0
      %3096 = vmatpush1.bf16.msra.mxu0 0
      %3097 = vmatprep.subr.bf16.mxu0 0
      %3098 = vmatpush1.bf16.msra.mxu0 0
      %3099 = vmatprep.subr.bf16.mxu0 0
      %3100 = vmatpush1.bf16.msra.mxu0 0
      %3101 = vmatprep.subr.bf16.mxu0 0
      %3102 = vmatpush1.bf16.msra.mxu0 0
      %3103 = vmatprep.subr.bf16.mxu0 0
      %3104 = vmatpush1.bf16.msra.mxu0 0
      %3105 = vmatprep.subr.bf16.mxu0 0
      %3106 = vmatpush1.bf16.msra.mxu0 0
      %3107 = vmatprep.subr.bf16.mxu0 0
      %3108 = vmatpush1.bf16.msra.mxu0 0
      %3109 = vmatprep.subr.bf16.mxu0 0
      %3110 = vmatpush1.bf16.msra.mxu0 0
      %3111 = vmatprep.subr.bf16.mxu0 0
      %3112 = vmatpush1.bf16.msra.mxu0 0
      %3113 = vmatprep.subr.bf16.mxu0 0
      %3114 = vmatpush1.bf16.msra.mxu0 0
      %3115 = vmatprep.subr.bf16.mxu0 0
      %3116 = vmatpush1.bf16.msra.mxu0 0
      %3117 = vmatprep.subr.bf16.mxu0 0
      %3118 = vmatpush1.bf16.msra.mxu0 0
      %3119 = vmatprep.mubr.bf16.mxu0 0
      %3120 = vmatmul.mubr.bf16.gmra.mrb[0].mxu0 %v3037
      %v3121 = vpop.f32.mrb[0].mxu0
      %v3122 = vadd.f32 %v3034, %v3121
      %v3123 = vpop.f32.mrb[0].mxu0
      %v3124 = vpop.f32.mrb[0].mxu0
      %v3125 = vadd.f32 %v3034, %v3124
      %v3126 = vpop.f32.mrb[0].mxu0
      %3127 = vmatprep.mubr.bf16.mxu0 0
      %3128 = vmatmul.mubr.bf16.gmra.mrb[0].mxu0 %v3040
      %v3129 = vpop.f32.mrb[0].mxu0
      %v3130 = vadd.f32 %v3034, %v3129
      %v3131 = vpop.f32.mrb[0].mxu0
      %v3132 = vpop.f32.mrb[0].mxu0
      %v3133 = vadd.f32 %v3034, %v3132
      %v3134 = vpop.f32.mrb[0].mxu0
      %3135 = vmatprep.mubr.bf16.mxu0 0
      %3136 = vmatmul.mubr.bf16.gmra.mrb[0].mxu0 %v3043
      %v3137 = vpop.f32.mrb[0].mxu0
      %v3138 = vadd.f32 %v3034, %v3137
      %v3139 = vpop.f32.mrb[0].mxu0
      %v3140 = vpop.f32.mrb[0].mxu0
      %v3141 = vadd.f32 %v3034, %v3140
      %v3142 = vpop.f32.mrb[0].mxu0
      %3143 = vmatprep.mubr.bf16.mxu0 0
      %3144 = vmatmul.mubr.bf16.gmra.mrb[0].mxu0 %v3046
      %v3145 = vpop.f32.mrb[0].mxu0
      %v3146 = vadd.f32 %v3034, %v3145
      %v3147 = vpop.f32.mrb[0].mxu0
      %v3148 = vpop.f32.mrb[0].mxu0
      %v3149 = vadd.f32 %v3034, %v3148
      %v3150 = vpop.f32.mrb[0].mxu0
      %3151 = vmatprep.mubr.bf16.mxu0 0
      %3152 = vmatmul.mubr.bf16.gmra.mrb[0].mxu0 %v3049
      %v3153 = vpop.f32.mrb[0].mxu0
      %v3154 = vadd.f32 %v3034, %v3153
      %v3155 = vpop.f32.mrb[0].mxu0
      %v3156 = vpop.f32.mrb[0].mxu0
      %v3157 = vadd.f32 %v3034, %v3156
      %v3158 = vpop.f32.mrb[0].mxu0
      %3159 = vmatprep.mubr.bf16.mxu0 0
      %3160 = vmatmul.mubr.bf16.gmra.mrb[0].mxu0 %v3052
      %v3161 = vpop.f32.mrb[0].mxu0
      %v3162 = vadd.f32 %v3034, %v3161
      %v3163 = vpop.f32.mrb[0].mxu0
      %v3164 = vpop.f32.mrb[0].mxu0
      %v3165 = vadd.f32 %v3034, %v3164
      %v3166 = vpop.f32.mrb[0].mxu0
      %3167 = vmatprep.mubr.bf16.mxu0 0
      %3168 = vmatmul.mubr.bf16.gmra.mrb[0].mxu0 %v3055
      %v3169 = vpop.f32.mrb[0].mxu0
      %v3170 = vadd.f32 %v3034, %v3169
      %v3171 = vpop.f32.mrb[0].mxu0
      %v3172 = vpop.f32.mrb[0].mxu0
      %v3173 = vadd.f32 %v3034, %v3172
      %v3174 = vpop.f32.mrb[0].mxu0
      %3175 = vmatprep.mubr.bf16.mxu0 0
      %3176 = vmatmul.mubr.bf16.gmra.mrb[0].mxu0 %v3058
      %v3177 = vpop.f32.mrb[0].mxu0
      %v3178 = vadd.f32 %v3034, %v3177
      %v3179 = vpop.f32.mrb[0].mxu0
      %v3180 = vpop.f32.mrb[0].mxu0
      %v3181 = vadd.f32 %v3034, %v3180
      %v3182 = vpop.f32.mrb[0].mxu0
      %3183 = vmatprep.mubr.bf16.mxu0 0
      %3184 = vmatmul.mubr.bf16.gmra.mrb[0].mxu0 %v3061
      %v3185 = vpop.f32.mrb[0].mxu0
      %v3186 = vadd.f32 %v3034, %v3185
      %v3187 = vpop.f32.mrb[0].mxu0
      %v3188 = vpop.f32.mrb[0].mxu0
      %v3189 = vadd.f32 %v3034, %v3188
      %v3190 = vpop.f32.mrb[0].mxu0
      %3191 = vmatprep.mubr.bf16.mxu0 0
      %3192 = vmatmul.mubr.bf16.gmra.mrb[0].mxu0 %v3064
      %v3193 = vpop.f32.mrb[0].mxu0
      %v3194 = vadd.f32 %v3034, %v3193
      %v3195 = vpop.f32.mrb[0].mxu0
      %v3196 = vpop.f32.mrb[0].mxu0
      %v3197 = vadd.f32 %v3034, %v3196
      %v3198 = vpop.f32.mrb[0].mxu0
      %3199 = vmatprep.mubr.bf16.mxu0 0
      %3200 = vmatmul.mubr.bf16.gmra.mrb[0].mxu0 %v3067
      %v3201 = vpop.f32.mrb[0].mxu0
      %v3202 = vadd.f32 %v3034, %v3201
      %v3203 = vpop.f32.mrb[0].mxu0
      %v3204 = vpop.f32.mrb[0].mxu0
      %v3205 = vadd.f32 %v3034, %v3204
      %v3206 = vpop.f32.mrb[0].mxu0
      %3207 = vmatprep.mubr.bf16.mxu0 0
      %3208 = vmatmul.mubr.bf16.gmra.mrb[0].mxu0 %v3070
      %v3209 = vpop.f32.mrb[0].mxu0
      %v3210 = vadd.f32 %v3034, %v3209
      %v3211 = vpop.f32.mrb[0].mxu0
      %v3212 = vpop.f32.mrb[0].mxu0
      %v3213 = vadd.f32 %v3034, %v3212
      %v3214 = vpop.f32.mrb[0].mxu0
      %3215 = vmatprep.mubr.bf16.mxu0 0
      %3216 = vmatmul.mubr.bf16.gmra.mrb[0].mxu0 %v3073
      %v3217 = vpop.f32.mrb[0].mxu0
      %v3218 = vadd.f32 %v3034, %v3217
      %v3219 = vpop.f32.mrb[0].mxu0
      %v3220 = vpop.f32.mrb[0].mxu0
      %v3221 = vadd.f32 %v3034, %v3220
      %v3222 = vpop.f32.mrb[0].mxu0
      %3223 = vmatprep.mubr.bf16.mxu0 0
      %3224 = vmatmul.mubr.bf16.gmra.mrb[0].mxu0 %v3076
      %v3225 = vpop.f32.mrb[0].mxu0
      %v3226 = vadd.f32 %v3034, %v3225
      %v3227 = vpop.f32.mrb[0].mxu0
      %v3228 = vpop.f32.mrb[0].mxu0
      %v3229 = vadd.f32 %v3034, %v3228
      %v3230 = vpop.f32.mrb[0].mxu0
      %3231 = vmatprep.mubr.bf16.mxu0 0
      %3232 = vmatmul.mubr.bf16.gmra.mrb[0].mxu0 %v3079
      %v3233 = vpop.f32.mrb[0].mxu0
      %v3234 = vadd.f32 %v3034, %v3233
      %v3235 = vpop.f32.mrb[0].mxu0
      %v3236 = vpop.f32.mrb[0].mxu0
      %v3237 = vadd.f32 %v3034, %v3236
      %v3238 = vpop.f32.mrb[0].mxu0
      %3239 = vmatprep.mubr.bf16.mxu0 0
      %3240 = vmatmul.mubr.bf16.gmra.mrb[0].mxu0 %v3082
      %v3241 = vpop.f32.mrb[0].mxu0
      %v3242 = vadd.f32 %v3034, %v3241
      %v3243 = vpop.f32.mrb[0].mxu0
      %v3244 = vpop.f32.mrb[0].mxu0
      %v3245 = vadd.f32 %v3034, %v3244
      %v3246 = vpop.f32.mrb[0].mxu0
      %3247 = vdwg.mxu0
      %3248 = vst [vmem:[%s224] sm:$0xff] %v3122
      %3249 = vst [vmem:[%s224 + $0x8] sm:$0xff] %v3125
      %3250 = vst [vmem:[%s224 + $0x10] sm:$0xff] %v3130
      %3251 = vst [vmem:[%s224 + $0x18] sm:$0xff] %v3133
      %3252 = vst [vmem:[%s224 + $0x20] sm:$0xff] %v3138
      %3253 = vst [vmem:[%s224 + $0x28] sm:$0xff] %v3141
      %3254 = vst [vmem:[%s224 + $0x30] sm:$0xff] %v3146
      %3255 = vst [vmem:[%s224 + $0x38] sm:$0xff] %v3149
      %3256 = vst [vmem:[%s224 + $0x40] sm:$0xff] %v3154
      %3257 = vst [vmem:[%s224 + $0x48] sm:$0xff] %v3157
      %3258 = vst [vmem:[%s224 + $0x50] sm:$0xff] %v3162
      %3259 = vst [vmem:[%s224 + $0x58] sm:$0xff] %v3165
      %3260 = vst [vmem:[%s224 + $0x60] sm:$0xff] %v3170
      %3261 = vst [vmem:[%s224 + $0x68] sm:$0xff] %v3173
      %3262 = vst [vmem:[%s224 + $0x70] sm:$0xff] %v3178
      %3263 = vst [vmem:[%s224 + $0x78] sm:$0xff] %v3181
      %3264 = vst [vmem:[%s224 + $0x80] sm:$0xff] %v3186
      %3265 = vst [vmem:[%s224 + $0x88] sm:$0xff] %v3189
      %3266 = vst [vmem:[%s224 + $0x90] sm:$0xff] %v3194
      %3267 = vst [vmem:[%s224 + $0x98] sm:$0xff] %v3197
      %3268 = vst [vmem:[%s224 + $0xa0] sm:$0xff] %v3202
      %3269 = vst [vmem:[%s224 + $0xa8] sm:$0xff] %v3205
      %3270 = vst [vmem:[%s224 + $0xb0] sm:$0xff] %v3210
      %3271 = vst [vmem:[%s224 + $0xb8] sm:$0xff] %v3213
      %3272 = vst [vmem:[%s224 + $0xc0] sm:$0xff] %v3218
      %3273 = vst [vmem:[%s224 + $0xc8] sm:$0xff] %v3221
      %3274 = vst [vmem:[%s224 + $0xd0] sm:$0xff] %v3226
      %3275 = vst [vmem:[%s224 + $0xd8] sm:$0xff] %v3229
      %3276 = vst [vmem:[%s224 + $0xe0] sm:$0xff] %v3234
      %3277 = vst [vmem:[%s224 + $0xe8] sm:$0xff] %v3237
      %3278 = vst [vmem:[%s224 + $0xf0] sm:$0xff] %v3242
      %3279 = vst [vmem:[%s224 + $0xf8] sm:$0xff] %v3245
      %p3280 = scmp.lt.s32.totalorder %s16, 1
      %s3281 = scalar_select %p3280, %s16, 1
      %s3282 = smul.addr %s3281, 32
      %s3283 = smul.addr %s3282, 8
      %s3284 = scalar_lea.vmem %s5, %s3283
      // Predicated region
      $region41: #{rpn_head_forward.1} parent=39 // pred_check
        %p3285 = pneg %p144
      $region42: #{rpn_head_forward.1} parent=39 // pred_check_branch
        %3287 = sbr.rel (%p3285) target = $region44
      $region43: #{rpn_head_forward.1} parent=39 // pred_region
        _
      $region44: #{rpn_head_forward.1} parent=39 // pred_fallthru
        _
    $region40: #{rpn_head_forward.1} parent=5 // pred_fallthru
      _
    %p3288 = scmp.le.s32.totalorder 2, %s11
    // Predicated region
    $region45: #{rpn_head_forward.1} parent=5 // pred_check
      %p3289 = pneg %p3288
    $region46: #{rpn_head_forward.1} parent=5 // pred_check_branch
      %3291 = sbr.rel (%p3289) target = $region48
    $region47: #{rpn_head_forward.1} parent=5 // pred_region
      %s3292 = ssub.s32 %s11, 2
      // Predicated region
      $region49: #{rpn_head_forward.1} parent=47 // pred_check
        %p3293 = pneg %p150
      $region50: #{rpn_head_forward.1} parent=47 // pred_check_branch
        %3295 = sbr.rel (%p3293) target = $region52
      $region51: #{rpn_head_forward.1} parent=47 // pred_region
        %p3296 = scmp.lt.s32.totalorder %s17, 1
        %s3297 = scalar_select %p3296, %s17, 1
        %s3298 = smul.addr %s3297, 32
        %s3299 = smul.addr %s3298, 8
        %s3300 = scalar_lea.vmem %s5, %s3299
      $region52: #{rpn_head_forward.1} parent=47 // pred_fallthru
        _
    $region48: #{rpn_head_forward.1} parent=5 // pred_fallthru
      _
  $region6: #{rpn_head_forward.1} parent=0 // loop_footer
    %s15 = sadd.s32 1, %s11
  $region7: #{rpn_head_forward.1} parent=0 // loop_footer_branch
    %10 = sbr.rel target = $region3
  $region8: #{rpn_head_forward.1} parent=0 // loop_exit
    _

</llo_original>
